<compile_context>
chip_gen: v7x
topology: tpu7x:2x2x1
jax: 0.10.0
libtpu: 0.0.40
codegen_flags: <defaults>
</compile_context>

<pallas_src>
import functools
import math

import jax
import jax.numpy as jnp
from jax.experimental import pallas as pl
from jax.experimental.pallas import tpu as pltpu


def _round_up(a, b):
    return ((a + b - 1) // b) * b


# ----------------------------------------------------------------------------- PPF (glue)
def calc_ppf(points, point_normals, patches, patch_normals):
    """points/point_normals: [N,3]; patches/patch_normals: [N,S,3] -> ppf [N,S,4]."""
    pts = points[:, None, :]
    nrm = jnp.broadcast_to(point_normals[:, None, :], patches.shape)
    vec_d = patches - pts
    d = jnp.sqrt(jnp.sum(vec_d ** 2, axis=-1, keepdims=True))

    def _angle(a, b):
        y = jnp.sum(a * b, axis=-1, keepdims=True)
        x = jnp.linalg.norm(jnp.cross(a, b), axis=-1, keepdims=True)
        return jnp.arctan2(x, y) / jnp.pi

    a1 = _angle(nrm, vec_d)
    a2 = _angle(patch_normals, vec_d)
    a3 = _angle(nrm, patch_normals)
    return jnp.concatenate([d, a1, a2, a3], axis=-1)


# ----------------------------------------------------------------------------- Pallas kernel
def _local_ppf_transformer_kernel(S,
                                  x_ref, xg_ref, ppf_ref,
                                  wq_ref, bq_ref, wp1_ref, bp1_ref,
                                  wkvx_ref, wkvp_ref, bkv_ref,
                                  he_ref, wo_ref, bo_ref,
                                  out_ref):
    f32 = jnp.float32
    bf16 = jnp.bfloat16
    TM, _ = x_ref.shape
    TMS = xg_ref.shape[0]            # = TM * S
    H = wq_ref.shape[1]

    x = x_ref[...]                   # [TM, C]      bf16  (query points)
    xg = xg_ref[...]                 # [TM*S, C]    bf16  (grouped neighbors, pre-flattened)
    ppf = ppf_ref[...]               # [TM*S, 4]    bf16

    # q projection (MXU, f32 accumulate)
    q = jnp.dot(x, wq_ref[...], preferred_element_type=f32) + bq_ref[...]          # [TM, H]

    # PPF positional embedding, first layer + ReLU (tiny K=4 matmul)
    h1 = jnp.maximum(
        jnp.dot(ppf, wp1_ref[...], preferred_element_type=f32) + bp1_ref[...], 0.0)  # [TM*S, H]

    # Fused (k | v) projection + 2nd PPF-embedding layer, biases pre-summed:
    #   kv = xg @ [wk | wv] + relu_h1 @ [wp2 | wp2] + [bk+bp2 | bv+bp2]
    kv = (jnp.dot(xg, wkvx_ref[...], preferred_element_type=f32)
          + jnp.dot(h1.astype(bf16), wkvp_ref[...], preferred_element_type=f32)
          + bkv_ref[...])                                                            # [TM*S, 2H]

    k = kv[:, :H].reshape(TM, S, H)                                                  # k + pe
    v = kv[:, H:].reshape(TM, S, H)                                                  # v + pe

    # Per-head logits, replicated across each head's channels (1/sqrt(dh) folded into he):
    # logit[n,s,c] = scale * sum_{c' in head(c)} q[n,c'] * k[n,s,c']
    qk = (q.reshape(TM, 1, H) * k).reshape(TMS, H)                                   # f32
    logit = jnp.dot(qk, he_ref[...], preferred_element_type=f32).reshape(TM, S, H)

    # Softmax over the neighborhood axis at full H-lane width (values repeat within a head,
    # so the per-channel max/denominator equal the per-head statistics automatically).
    m = jnp.max(logit, axis=1, keepdims=True)                                        # [TM, 1, H]
    e = jnp.exp(logit - m)                                                           # [TM, S, H]
    denom = jnp.sum(e, axis=1, keepdims=True)                                        # [TM, 1, H]
    inv = pl.reciprocal(denom, approx=True)

    agg = jnp.sum(e * v, axis=1) * inv.reshape(TM, H)                                # [TM, H]

    # Output projection into a 128-lane-padded slab (unmasked stores).
    out_ref[...] = (jnp.dot(agg.astype(bf16), wo_ref[...], preferred_element_type=f32)
                    + bo_ref[...])


def local_ppf_transformer_pallas(x_q, x_grouped, ppf, params, num_heads, tile_m=256):
    N, C = x_q.shape
    _, S, _ = x_grouped.shape
    H = params['wq'].shape[1]
    out_dim = params['wo'].shape[1]
    assert H % num_heads == 0, "hidden_dim must be divisible by num_heads"
    dh = H // num_heads

    f32, bf16 = jnp.float32, jnp.bfloat16

    # ---- host/XLA-side weight preprocessing: stack, cast, pad (tiny, done once)
    wq = params['wq'].astype(bf16)
    bq = params['bq'].astype(f32)
    wp1 = params['wp1'].astype(bf16)
    bp1 = params['bp1'].astype(f32)
    w_kv_x = jnp.concatenate([params['wk'], params['wv']], axis=1).astype(bf16)      # [C, 2H]
    w_kv_p = jnp.concatenate([params['wp2'], params['wp2']], axis=1).astype(bf16)    # [H, 2H]
    b_kv = jnp.concatenate([params['bk'] + params['bp2'],
                            params['bv'] + params['bp2']], axis=1).astype(f32)       # [1, 2H]

    out_pad = _round_up(out_dim, 128)
    wo = jnp.zeros((H, out_pad), f32).at[:, :out_dim].set(params['wo']).astype(bf16)
    bo = jnp.zeros((1, out_pad), f32).at[:, :out_dim].set(params['bo'].astype(f32))

    # Head-replicate matrix (scale folded in): he[c', c] = 1/sqrt(dh) if head(c')==head(c).
    ch = jnp.arange(H)
    he = ((ch[:, None] // dh) == (ch[None, :] // dh)).astype(f32) / math.sqrt(dh)    # [H, H]

    # ---- tile & pad the point axis (padded rows are all-zero -> finite math, sliced off)
    tile_m = _round_up(min(tile_m, N), 8)
    n_pad = _round_up(N, tile_m)

    x_q_b = x_q.astype(bf16)
    xg_flat = x_grouped.reshape(N * S, C).astype(bf16)
    ppf_flat = ppf.reshape(N * S, 4).astype(bf16)
    if n_pad != N:
        x_q_b = jnp.pad(x_q_b, ((0, n_pad - N), (0, 0)))
        xg_flat = jnp.pad(xg_flat, ((0, (n_pad - N) * S), (0, 0)))
        ppf_flat = jnp.pad(ppf_flat, ((0, (n_pad - N) * S), (0, 0)))

    kernel = functools.partial(_local_ppf_transformer_kernel, S)

    def wspec(arr):
        nd = arr.ndim
        return pl.BlockSpec(arr.shape, lambda i, _nd=nd: (0,) * _nd)

    weights = (wq, bq, wp1, bp1, w_kv_x, w_kv_p, b_kv, he, wo, bo)

    out = pl.pallas_call(
        kernel,
        out_shape=jax.ShapeDtypeStruct((n_pad, out_pad), f32),
        grid=(n_pad // tile_m,),
        in_specs=[
            pl.BlockSpec((tile_m, C), lambda i: (i, 0)),
            pl.BlockSpec((tile_m * S, C), lambda i: (i, 0)),
            pl.BlockSpec((tile_m * S, 4), lambda i: (i, 0)),
        ] + [wspec(w) for w in weights],
        out_specs=pl.BlockSpec((tile_m, out_pad), lambda i: (i, 0)),
        compiler_params=pltpu.CompilerParams(
            dimension_semantics=("parallel",),
            vmem_limit_bytes=48 * 1024 * 1024),
    )(x_q_b, xg_flat, ppf_flat, *weights)

    return out[:N, :out_dim]


# ----------------------------------------------------------------------------- TransitionDown forward
def transition_down_forward(pxon, params, *, nsample=16, num_heads=4, stride=1,
                            ppf_mode='baseline'):
    p, x, o, n = pxon[0], pxon[1], pxon[2], pxon[3]
    assert stride == 1 and ppf_mode == 'baseline'
    N = p.shape[0]

    n_o, n_p, n_n = o, p, n
    idx = jnp.arange(N, dtype=jnp.int32)

    # pointops.queryandgroup: kNN of each (downsampled) point within its batch (single batch here)
    d2 = jnp.sum((n_p[:, None, :] - p[None, :, :]) ** 2, axis=-1)
    _, group_idx = jax.lax.top_k(-d2, nsample)                        # [N, nsample]

    c_p, c_n = p[group_idx], n[group_idx]
    ppf = calc_ppf(n_p, n_n, c_p, c_n)                                # [N, nsample, 4]
    # ppf_mode == 'baseline' -> no modification

    x_q = x[idx]                                                      # [N, C]
    x_grouped = x[group_idx]                                          # [N, nsample, C]
    x_out = local_ppf_transformer_pallas(x_q, x_grouped, ppf, params, num_heads)
    return [n_p, x_out, n_o, n_n, None, None, idx]


# ----------------------------------------------------------------------------- pure-JAX reference
def transformer_ref(x, idx, group_idx, ppf, params, num_heads):
    """Standard (unfused) multi-head formulation; same bf16 input/weight rounding, f32 accum."""
    f32, bf16 = jnp.float32, jnp.bfloat16

    def mm(a, w):
        return jnp.dot(a.astype(bf16), w.astype(bf16), preferred_element_type=f32)

    xb = x.astype(bf16)
    q = mm(xb, params['wq']) + params['bq']
    k = mm(xb, params['wk']) + params['bk']
    v = mm(xb, params['wv']) + params['bv']
    q = q[idx]
    k, v = k[group_idx], v[group_idx]
    h1 = jnp.maximum(mm(ppf, params['wp1']) + params['bp1'], 0.0)
    pe = mm(h1, params['wp2']) + params['bp2']
    k, v = k + pe, v + pe
    Nq, S, H = k.shape
    dh = H // num_heads
    qh = q.reshape(Nq, num_heads, dh)
    kh = k.reshape(Nq, S, num_heads, dh)
    vh = v.reshape(Nq, S, num_heads, dh)
    logits = jnp.einsum('nhd,nshd->nsh', qh, kh) / math.sqrt(dh)
    a = jax.nn.softmax(logits, axis=1)
    out = jnp.einsum('nsh,nshd->nhd', a, vh).reshape(Nq, H)
    return mm(out, params['wo']) + params['bo']


# ----------------------------------------------------------------------------- main
def init_params(key, in_planes, hidden_dim, out_planes):
    ks = jax.random.split(key, 12)
    def w(k, shape): return (jax.random.normal(k, shape, jnp.float32) * 0.1)
    def b(k, dim):   return (jax.random.normal(k, (1, dim), jnp.float32) * 0.01)
    return {
        'wq': w(ks[0], (in_planes, hidden_dim)),  'bq': b(ks[1], hidden_dim),
        'wk': w(ks[2], (in_planes, hidden_dim)),  'bk': b(ks[3], hidden_dim),
        'wv': w(ks[4], (in_planes, hidden_dim)),  'bv': b(ks[5], hidden_dim),
        'wp1': w(ks[6], (4, hidden_dim)),         'bp1': b(ks[7], hidden_dim),
        'wp2': w(ks[8], (hidden_dim, hidden_dim)),'bp2': b(ks[9], hidden_dim),
        'wo': w(ks[10], (hidden_dim, out_planes)),'bo': b(ks[11], out_planes),
    }


if __name__ == "__main__":
    N, in_planes, out_planes = 32, 32, 64
    nsample, num_heads, factor = 16, 4, 1
    hidden_dim = min(out_planes, 256 * factor)   # as in TransitionDown.__init__

    key = jax.random.PRNGKey(0)
    kp, kn, kx, kw = jax.random.split(key, 4)
    p = jax.random.normal(kp, (N, 3), jnp.float32)
    nrm = jax.random.normal(kn, (N, 3), jnp.float32)
    nrm = nrm / jnp.linalg.norm(nrm, axis=-1, keepdims=True)
    x = jax.random.normal(kx, (N, in_planes), jnp.float32) * 0.5
    o = jnp.array([N], jnp.int32)                 # single point cloud (batch offsets)

    params = init_params(kw, in_planes, hidden_dim, out_planes)

    pxon = [p, x, o, nrm, None, None, None]
    n_p, x_out, n_o, n_n, _, _, idx = transition_down_forward(
        pxon, params, nsample=nsample, num_heads=num_heads, stride=1, ppf_mode='baseline')
    jax.block_until_ready(x_out)

    # correctness check against a pure-JAX reference of the same forward (bf16 inputs, f32 accum)
    d2 = jnp.sum((p[:, None, :] - p[None, :, :]) ** 2, axis=-1)
    _, group_idx = jax.lax.top_k(-d2, nsample)
    ppf = calc_ppf(p, nrm, p[group_idx], nrm[group_idx])
    ref = transformer_ref(x, idx, group_idx, ppf, params, num_heads)
    assert x_out.shape == (N, out_planes)
    assert jnp.allclose(x_out, ref, atol=1e-2, rtol=1e-2), "kernel/ref mismatch"

    print("KERNEL_OK")
</pallas_src>

<mosaic_0001>
module attributes {stable_mosaic.version = 11 : i64} {
  func.func @_local_ppf_transformer_kernel(%arg0: i32, %arg1: memref<32x32xbf16, #tpu.memory_space<vmem>>, %arg2: memref<512x32xbf16, #tpu.memory_space<vmem>>, %arg3: memref<512x4xbf16, #tpu.memory_space<vmem>>, %arg4: memref<32x64xbf16, #tpu.memory_space<vmem>>, %arg5: memref<1x64xf32, #tpu.memory_space<vmem>>, %arg6: memref<4x64xbf16, #tpu.memory_space<vmem>>, %arg7: memref<1x64xf32, #tpu.memory_space<vmem>>, %arg8: memref<32x128xbf16, #tpu.memory_space<vmem>>, %arg9: memref<64x128xbf16, #tpu.memory_space<vmem>>, %arg10: memref<1x128xf32, #tpu.memory_space<vmem>>, %arg11: memref<64x64xf32, #tpu.memory_space<vmem>>, %arg12: memref<64x128xbf16, #tpu.memory_space<vmem>>, %arg13: memref<1x128xf32, #tpu.memory_space<vmem>>, %arg14: memref<32x128xf32, #tpu.memory_space<vmem>>) attributes {dimension_semantics = [#tpu.dimension_semantics<parallel>], iteration_bounds = array<i64: 1>, scalar_prefetch = 0 : i64, scratch_operands = 0 : i64, tpu.core_type = #tpu.core_type<tc>, window_params = [{transform_indices = @transform_0, window_bounds = array<i64: 32, 32>}, {transform_indices = @transform_1, window_bounds = array<i64: 512, 32>}, {transform_indices = @transform_2, window_bounds = array<i64: 512, 4>}, {pipeline_mode = #tpu.pipeline_mode<synchronous>, transform_indices = @transform_3, window_bounds = array<i64: 32, 64>}, {pipeline_mode = #tpu.pipeline_mode<synchronous>, transform_indices = @transform_4, window_bounds = array<i64: 1, 64>}, {pipeline_mode = #tpu.pipeline_mode<synchronous>, transform_indices = @transform_5, window_bounds = array<i64: 4, 64>}, {pipeline_mode = #tpu.pipeline_mode<synchronous>, transform_indices = @transform_6, window_bounds = array<i64: 1, 64>}, {pipeline_mode = #tpu.pipeline_mode<synchronous>, transform_indices = @transform_7, window_bounds = array<i64: 32, 128>}, {pipeline_mode = #tpu.pipeline_mode<synchronous>, transform_indices = @transform_8, window_bounds = array<i64: 64, 128>}, {pipeline_mode = #tpu.pipeline_mode<synchronous>, transform_indices = @transform_9, window_bounds = array<i64: 1, 128>}, {pipeline_mode = #tpu.pipeline_mode<synchronous>, transform_indices = @transform_10, window_bounds = array<i64: 64, 64>}, {pipeline_mode = #tpu.pipeline_mode<synchronous>, transform_indices = @transform_11, window_bounds = array<i64: 64, 128>}, {pipeline_mode = #tpu.pipeline_mode<synchronous>, transform_indices = @transform_12, window_bounds = array<i64: 1, 128>}, {transform_indices = @transform_13, window_bounds = array<i64: 32, 128>}]} {
    %c0 = arith.constant 0 : index
    %c0_0 = arith.constant 0 : index
    %0 = vector.load %arg1[%c0, %c0_0] : memref<32x32xbf16, #tpu.memory_space<vmem>>, vector<32x32xbf16>
    %c0_1 = arith.constant 0 : index
    %c0_2 = arith.constant 0 : index
    %1 = vector.load %arg2[%c0_1, %c0_2] : memref<512x32xbf16, #tpu.memory_space<vmem>>, vector<512x32xbf16>
    %c0_3 = arith.constant 0 : index
    %c0_4 = arith.constant 0 : index
    %2 = vector.load %arg3[%c0_3, %c0_4] : memref<512x4xbf16, #tpu.memory_space<vmem>>, vector<512x4xbf16>
    %c0_5 = arith.constant 0 : index
    %c0_6 = arith.constant 0 : index
    %3 = vector.load %arg4[%c0_5, %c0_6] : memref<32x64xbf16, #tpu.memory_space<vmem>>, vector<32x64xbf16>
    %cst = arith.constant dense<0.000000e+00> : vector<32x64xf32>
    %4 = tpu.matmul %0, %3, %cst {dimension_numbers = #tpu.dot_dimension_numbers<[1], [0], [0], [1], [0, 0, 1, 1], [], []>} : vector<32x32xbf16>, vector<32x64xbf16>, vector<32x64xf32> -> vector<32x64xf32>
    %c0_7 = arith.constant 0 : index
    %c0_8 = arith.constant 0 : index
    %5 = vector.load %arg5[%c0_7, %c0_8] : memref<1x64xf32, #tpu.memory_space<vmem>>, vector<1x64xf32>
    %6 = vector.broadcast %5 : vector<1x64xf32> to vector<32x64xf32>
    %7 = arith.addf %4, %6 : vector<32x64xf32>
    %c0_9 = arith.constant 0 : index
    %c0_10 = arith.constant 0 : index
    %8 = vector.load %arg6[%c0_9, %c0_10] : memref<4x64xbf16, #tpu.memory_space<vmem>>, vector<4x64xbf16>
    %cst_11 = arith.constant dense<0.000000e+00> : vector<512x64xf32>
    %9 = tpu.matmul %2, %8, %cst_11 {dimension_numbers = #tpu.dot_dimension_numbers<[1], [0], [0], [1], [0, 0, 1, 1], [], []>} : vector<512x4xbf16>, vector<4x64xbf16>, vector<512x64xf32> -> vector<512x64xf32>
    %c0_12 = arith.constant 0 : index
    %c0_13 = arith.constant 0 : index
    %10 = vector.load %arg7[%c0_12, %c0_13] : memref<1x64xf32, #tpu.memory_space<vmem>>, vector<1x64xf32>
    %11 = vector.broadcast %10 : vector<1x64xf32> to vector<512x64xf32>
    %12 = arith.addf %9, %11 : vector<512x64xf32>
    %cst_14 = arith.constant 0.000000e+00 : f32
    %13 = vector.broadcast %cst_14 : f32 to vector<512x64xf32>
    %14 = arith.maximumf %12, %13 : vector<512x64xf32>
    %c0_15 = arith.constant 0 : index
    %c0_16 = arith.constant 0 : index
    %15 = vector.load %arg8[%c0_15, %c0_16] : memref<32x128xbf16, #tpu.memory_space<vmem>>, vector<32x128xbf16>
    %cst_17 = arith.constant dense<0.000000e+00> : vector<512x128xf32>
    %16 = tpu.matmul %1, %15, %cst_17 {dimension_numbers = #tpu.dot_dimension_numbers<[1], [0], [0], [1], [0, 0, 1, 1], [], []>} : vector<512x32xbf16>, vector<32x128xbf16>, vector<512x128xf32> -> vector<512x128xf32>
    %17 = arith.truncf %14 : vector<512x64xf32> to vector<512x64xbf16>
    %c0_18 = arith.constant 0 : index
    %c0_19 = arith.constant 0 : index
    %18 = vector.load %arg9[%c0_18, %c0_19] : memref<64x128xbf16, #tpu.memory_space<vmem>>, vector<64x128xbf16>
    %cst_20 = arith.constant dense<0.000000e+00> : vector<512x128xf32>
    %19 = tpu.matmul %17, %18, %cst_20 {dimension_numbers = #tpu.dot_dimension_numbers<[1], [0], [0], [1], [0, 0, 1, 1], [], []>} : vector<512x64xbf16>, vector<64x128xbf16>, vector<512x128xf32> -> vector<512x128xf32>
    %20 = arith.addf %16, %19 : vector<512x128xf32>
    %c0_21 = arith.constant 0 : index
    %c0_22 = arith.constant 0 : index
    %21 = vector.load %arg10[%c0_21, %c0_22] : memref<1x128xf32, #tpu.memory_space<vmem>>, vector<1x128xf32>
    %22 = vector.broadcast %21 : vector<1x128xf32> to vector<512x128xf32>
    %23 = arith.addf %20, %22 : vector<512x128xf32>
    %24 = vector.extract_strided_slice %23 {offsets = [0, 0], sizes = [512, 64], strides = [1, 1]} : vector<512x128xf32> to vector<512x64xf32>
    %25 = vector.shape_cast %24 : vector<512x64xf32> to vector<32x16x64xf32>
    %26 = vector.extract_strided_slice %23 {offsets = [0, 64], sizes = [512, 64], strides = [1, 1]} : vector<512x128xf32> to vector<512x64xf32>
    %27 = vector.shape_cast %26 : vector<512x64xf32> to vector<32x16x64xf32>
    %28 = vector.shape_cast %7 : vector<32x64xf32> to vector<32x1x64xf32>
    %29 = vector.broadcast %28 : vector<32x1x64xf32> to vector<32x16x64xf32>
    %30 = arith.mulf %29, %25 : vector<32x16x64xf32>
    %31 = vector.shape_cast %30 : vector<32x16x64xf32> to vector<512x64xf32>
    %c0_23 = arith.constant 0 : index
    %c0_24 = arith.constant 0 : index
    %32 = vector.load %arg11[%c0_23, %c0_24] : memref<64x64xf32, #tpu.memory_space<vmem>>, vector<64x64xf32>
    %cst_25 = arith.constant dense<0.000000e+00> : vector<512x64xf32>
    %33 = tpu.matmul %31, %32, %cst_25 {dimension_numbers = #tpu.dot_dimension_numbers<[1], [0], [0], [1], [0, 0, 1, 1], [], []>} : vector<512x64xf32>, vector<64x64xf32>, vector<512x64xf32> -> vector<512x64xf32>
    %34 = vector.shape_cast %33 : vector<512x64xf32> to vector<32x16x64xf32>
    %cst_26 = arith.constant dense<0xFF800000> : vector<32x64xf32>
    %35 = vector.multi_reduction <maximumf>, %34, %cst_26 [1] : vector<32x16x64xf32> to vector<32x64xf32>
    %36 = vector.shape_cast %35 : vector<32x64xf32> to vector<32x1x64xf32>
    %37 = vector.broadcast %36 : vector<32x1x64xf32> to vector<32x16x64xf32>
    %38 = arith.subf %34, %37 : vector<32x16x64xf32>
    %39 = math.exp %38 : vector<32x16x64xf32>
    %cst_27 = arith.constant dense<0.000000e+00> : vector<32x64xf32>
    %40 = vector.multi_reduction <add>, %39, %cst_27 [1] : vector<32x16x64xf32> to vector<32x64xf32>
    %41 = vector.shape_cast %40 : vector<32x64xf32> to vector<32x1x64xf32>
    %42 = tpu.reciprocal %41 {approx = true} : vector<32x1x64xf32> -> vector<32x1x64xf32>
    %43 = arith.mulf %39, %27 : vector<32x16x64xf32>
    %cst_28 = arith.constant dense<0.000000e+00> : vector<32x64xf32>
    %44 = vector.multi_reduction <add>, %43, %cst_28 [1] : vector<32x16x64xf32> to vector<32x64xf32>
    %45 = vector.shape_cast %42 : vector<32x1x64xf32> to vector<32x64xf32>
    %46 = arith.mulf %44, %45 : vector<32x64xf32>
    %47 = arith.truncf %46 : vector<32x64xf32> to vector<32x64xbf16>
    %c0_29 = arith.constant 0 : index
    %c0_30 = arith.constant 0 : index
    %48 = vector.load %arg12[%c0_29, %c0_30] : memref<64x128xbf16, #tpu.memory_space<vmem>>, vector<64x128xbf16>
    %cst_31 = arith.constant dense<0.000000e+00> : vector<32x128xf32>
    %49 = tpu.matmul %47, %48, %cst_31 {dimension_numbers = #tpu.dot_dimension_numbers<[1], [0], [0], [1], [0, 0, 1, 1], [], []>} : vector<32x64xbf16>, vector<64x128xbf16>, vector<32x128xf32> -> vector<32x128xf32>
    %c0_32 = arith.constant 0 : index
    %c0_33 = arith.constant 0 : index
    %50 = vector.load %arg13[%c0_32, %c0_33] : memref<1x128xf32, #tpu.memory_space<vmem>>, vector<1x128xf32>
    %51 = vector.broadcast %50 : vector<1x128xf32> to vector<32x128xf32>
    %52 = arith.addf %49, %51 : vector<32x128xf32>
    %c0_34 = arith.constant 0 : index
    %c0_35 = arith.constant 0 : index
    %53 = vector.load %arg14[%c0_34, %c0_35] : memref<32x128xf32, #tpu.memory_space<vmem>>, vector<32x128xf32>
    tpu.vector_store %arg14[%c0_34, %c0_35], %52 {strides = array<i32>} : memref<32x128xf32, #tpu.memory_space<vmem>>, vector<32x128xf32>,
    return
  }
  func.func @transform_0(%arg0: i32) -> (i32, i32) {
    %c0_i32 = arith.constant 0 : i32
    %c0_i32_0 = arith.constant 0 : i32
    return %arg0, %c0_i32 : i32, i32
  }
  func.func @transform_1(%arg0: i32) -> (i32, i32) {
    %c0_i32 = arith.constant 0 : i32
    %c0_i32_0 = arith.constant 0 : i32
    return %arg0, %c0_i32 : i32, i32
  }
  func.func @transform_2(%arg0: i32) -> (i32, i32) {
    %c0_i32 = arith.constant 0 : i32
    %c0_i32_0 = arith.constant 0 : i32
    return %arg0, %c0_i32 : i32, i32
  }
  func.func @transform_3(%arg0: i32) -> (i32, i32) {
    %c0_i32 = arith.constant 0 : i32
    %c0_i32_0 = arith.constant 0 : i32
    %c0_i32_1 = arith.constant 0 : i32
    return %c0_i32, %c0_i32_0 : i32, i32
  }
  func.func @transform_4(%arg0: i32) -> (i32, i32) {
    %c0_i32 = arith.constant 0 : i32
    %c0_i32_0 = arith.constant 0 : i32
    %c0_i32_1 = arith.constant 0 : i32
    return %c0_i32, %c0_i32_0 : i32, i32
  }
  func.func @transform_5(%arg0: i32) -> (i32, i32) {
    %c0_i32 = arith.constant 0 : i32
    %c0_i32_0 = arith.constant 0 : i32
    %c0_i32_1 = arith.constant 0 : i32
    return %c0_i32, %c0_i32_0 : i32, i32
  }
  func.func @transform_6(%arg0: i32) -> (i32, i32) {
    %c0_i32 = arith.constant 0 : i32
    %c0_i32_0 = arith.constant 0 : i32
    %c0_i32_1 = arith.constant 0 : i32
    return %c0_i32, %c0_i32_0 : i32, i32
  }
  func.func @transform_7(%arg0: i32) -> (i32, i32) {
    %c0_i32 = arith.constant 0 : i32
    %c0_i32_0 = arith.constant 0 : i32
    %c0_i32_1 = arith.constant 0 : i32
    return %c0_i32, %c0_i32_0 : i32, i32
  }
  func.func @transform_8(%arg0: i32) -> (i32, i32) {
    %c0_i32 = arith.constant 0 : i32
    %c0_i32_0 = arith.constant 0 : i32
    %c0_i32_1 = arith.constant 0 : i32
    return %c0_i32, %c0_i32_0 : i32, i32
  }
  func.func @transform_9(%arg0: i32) -> (i32, i32) {
    %c0_i32 = arith.constant 0 : i32
    %c0_i32_0 = arith.constant 0 : i32
    %c0_i32_1 = arith.constant 0 : i32
    return %c0_i32, %c0_i32_0 : i32, i32
  }
  func.func @transform_10(%arg0: i32) -> (i32, i32) {
    %c0_i32 = arith.constant 0 : i32
    %c0_i32_0 = arith.constant 0 : i32
    %c0_i32_1 = arith.constant 0 : i32
    return %c0_i32, %c0_i32_0 : i32, i32
  }
  func.func @transform_11(%arg0: i32) -> (i32, i32) {
    %c0_i32 = arith.constant 0 : i32
    %c0_i32_0 = arith.constant 0 : i32
    %c0_i32_1 = arith.constant 0 : i32
    return %c0_i32, %c0_i32_0 : i32, i32
  }
  func.func @transform_12(%arg0: i32) -> (i32, i32) {
    %c0_i32 = arith.constant 0 : i32
    %c0_i32_0 = arith.constant 0 : i32
    %c0_i32_1 = arith.constant 0 : i32
    return %c0_i32, %c0_i32_0 : i32, i32
  }
  func.func @transform_13(%arg0: i32) -> (i32, i32) {
    %c0_i32 = arith.constant 0 : i32
    %c0_i32_0 = arith.constant 0 : i32
    return %arg0, %c0_i32 : i32, i32
  }
}

</mosaic_0001>

<llo_original>
// kernel: tpu_custom_call.1
$region0: #{tpu_custom_call.1}
  #allocation0 [shape = 'u32[]', space=smem, size = 0x4, offset = 0x4, fixed_abs, tag = 'smem constant byte address 0x4 - core index']
  #allocation1 [shape = 'u32[144,128]{1,0:T(1,128)}', space=vmem, size = 0x12000, scoped, tag = 'internal scratch']
  %s0 = inlined_call_operand.vmem [shape: bf16[32,32], index: 0, kind: input, shape index: {}]
  %s1 = inlined_call_operand.vmem [shape: bf16[512,32], index: 1, kind: input, shape index: {}]
  %s2 = inlined_call_operand.vmem [shape: bf16[512,4], index: 2, kind: input, shape index: {}]
  %s3 = inlined_call_operand.vmem [shape: bf16[32,64], index: 3, kind: input, shape index: {}]
  %s4 = inlined_call_operand.vmem [shape: f32[1,64], index: 4, kind: input, shape index: {}]
  %s5 = inlined_call_operand.vmem [shape: bf16[4,64], index: 5, kind: input, shape index: {}]
  %s6 = inlined_call_operand.vmem [shape: f32[1,64], index: 6, kind: input, shape index: {}]
  %s7 = inlined_call_operand.vmem [shape: bf16[32,128], index: 7, kind: input, shape index: {}]
  %s8 = inlined_call_operand.vmem [shape: bf16[64,128], index: 8, kind: input, shape index: {}]
  %s9 = inlined_call_operand.vmem [shape: f32[1,128], index: 9, kind: input, shape index: {}]
  %s10 = inlined_call_operand.vmem [shape: f32[64,64], index: 10, kind: input, shape index: {}]
  %s11 = inlined_call_operand.vmem [shape: bf16[64,128], index: 11, kind: input, shape index: {}]
  %s12 = inlined_call_operand.vmem [shape: f32[1,128], index: 12, kind: input, shape index: {}]
  %s13 = inlined_call_operand.hbm [shape: f32[32,128], index: 13, kind: output, shape index: {}]
  %s14 = sld [smem:[#allocation0]]
  $region62: #{tpu_custom_call.1} parent=0
    _
  %s16 = ssub.s32 1, %s14
  %s17 = scalar_select 0, %s16, %s14
  $region1: #{tpu_custom_call.1} parent=0
    #allocation2 [shape = 'u8[16384]{0}', space=vmem, size = 0x4000, scoped, tag = 'output window, operand 0, single buffered']
    #allocation3 [shape = 's32[1]{0}', space=sflag, size = 0x4, scoped, tag = 'scoped memory for tpu_custom_call.1']
    %18 = vsyncpa [#allocation3], 0
    // Predicated region
    $region2: #{tpu_custom_call.1} parent=1 // pred_check
      _
    $region3: #{tpu_custom_call.1} parent=1 // pred_check_branch
      %20 = sbr.rel (0) target = $region5
    $region4: #{tpu_custom_call.1} parent=1 // pred_region
      _
    $region5: #{tpu_custom_call.1} parent=1 // pred_fallthru
      _
    // Predicated region
    $region6: #{tpu_custom_call.1} parent=1 // pred_check
      _
    $region7: #{tpu_custom_call.1} parent=1 // pred_check_branch
      %22 = sbr.rel (0) target = $region9
    $region8: #{tpu_custom_call.1} parent=1 // pred_region
      _
    $region9: #{tpu_custom_call.1} parent=1 // pred_fallthru
      _
    // Predicated region
    $region10: #{tpu_custom_call.1} parent=1 // pred_check
      _
    $region11: #{tpu_custom_call.1} parent=1 // pred_check_branch
      %24 = sbr.rel (0) target = $region13
    $region12: #{tpu_custom_call.1} parent=1 // pred_region
      _
    $region13: #{tpu_custom_call.1} parent=1 // pred_fallthru
      _
    // Predicated region
    $region14: #{tpu_custom_call.1} parent=1 // pred_check
      _
    $region15: #{tpu_custom_call.1} parent=1 // pred_check_branch
      %26 = sbr.rel (0) target = $region17
    $region16: #{tpu_custom_call.1} parent=1 // pred_region
      _
    $region17: #{tpu_custom_call.1} parent=1 // pred_fallthru
      _
    // Predicated region
    $region18: #{tpu_custom_call.1} parent=1 // pred_check
      _
    $region19: #{tpu_custom_call.1} parent=1 // pred_check_branch
      %28 = sbr.rel (0) target = $region21
    $region20: #{tpu_custom_call.1} parent=1 // pred_region
      _
    $region21: #{tpu_custom_call.1} parent=1 // pred_fallthru
      _
    // Predicated region
    $region22: #{tpu_custom_call.1} parent=1 // pred_check
      _
    $region23: #{tpu_custom_call.1} parent=1 // pred_check_branch
      %30 = sbr.rel (0) target = $region25
    $region24: #{tpu_custom_call.1} parent=1 // pred_region
      _
    $region25: #{tpu_custom_call.1} parent=1 // pred_fallthru
      _
    // Predicated region
    $region26: #{tpu_custom_call.1} parent=1 // pred_check
      _
    $region27: #{tpu_custom_call.1} parent=1 // pred_check_branch
      %32 = sbr.rel (0) target = $region29
    $region28: #{tpu_custom_call.1} parent=1 // pred_region
      _
    $region29: #{tpu_custom_call.1} parent=1 // pred_fallthru
      _
    // Predicated region
    $region30: #{tpu_custom_call.1} parent=1 // pred_check
      _
    $region31: #{tpu_custom_call.1} parent=1 // pred_check_branch
      %34 = sbr.rel (0) target = $region33
    $region32: #{tpu_custom_call.1} parent=1 // pred_region
      _
    $region33: #{tpu_custom_call.1} parent=1 // pred_fallthru
      _
    // Predicated region
    $region34: #{tpu_custom_call.1} parent=1 // pred_check
      _
    $region35: #{tpu_custom_call.1} parent=1 // pred_check_branch
      %36 = sbr.rel (0) target = $region37
    $region36: #{tpu_custom_call.1} parent=1 // pred_region
      _
    $region37: #{tpu_custom_call.1} parent=1 // pred_fallthru
      _
    // Predicated region
    $region38: #{tpu_custom_call.1} parent=1 // pred_check
      _
    $region39: #{tpu_custom_call.1} parent=1 // pred_check_branch
      %38 = sbr.rel (0) target = $region41
    $region40: #{tpu_custom_call.1} parent=1 // pred_region
      _
    $region41: #{tpu_custom_call.1} parent=1 // pred_fallthru
      _
    // Predicated region
    $region42: #{tpu_custom_call.1} parent=1 // pred_check
      _
    $region43: #{tpu_custom_call.1} parent=1 // pred_check_branch
      %40 = sbr.rel (0) target = $region45
    $region44: #{tpu_custom_call.1} parent=1 // pred_region
      _
    $region45: #{tpu_custom_call.1} parent=1 // pred_fallthru
      _
    // Predicated region
    $region46: #{tpu_custom_call.1} parent=1 // pred_check
      _
    $region47: #{tpu_custom_call.1} parent=1 // pred_check_branch
      %42 = sbr.rel (0) target = $region49
    $region48: #{tpu_custom_call.1} parent=1 // pred_region
      _
    $region49: #{tpu_custom_call.1} parent=1 // pred_fallthru
      _
    // Predicated region
    $region50: #{tpu_custom_call.1} parent=1 // pred_check
      _
    $region51: #{tpu_custom_call.1} parent=1 // pred_check_branch
      %44 = sbr.rel (0) target = $region53
    $region52: #{tpu_custom_call.1} parent=1 // pred_region
      _
    $region53: #{tpu_custom_call.1} parent=1 // pred_fallthru
      _
    %v46 = vld [vmem:[%s0] sm:$0xf]
    %v47 = vld [vmem:[%s0 + $0x4] sm:$0xf]
    %v48 = vld [vmem:[%s0 + $0x8] sm:$0xf]
    %v49 = vld [vmem:[%s0 + $0xc] sm:$0xf]
    %v50 = vld [vmem:[%s1] sm:$0xf]
    %v51 = vld [vmem:[%s1 + $0x4] sm:$0xf]
    %v52 = vld [vmem:[%s1 + $0x8] sm:$0xf]
    %v53 = vld [vmem:[%s1 + $0xc] sm:$0xf]
    %v54 = vld [vmem:[%s1 + $0x10] sm:$0xf]
    %v55 = vld [vmem:[%s1 + $0x14] sm:$0xf]
    %v56 = vld [vmem:[%s1 + $0x18] sm:$0xf]
    %v57 = vld [vmem:[%s1 + $0x1c] sm:$0xf]
    %v58 = vld [vmem:[%s1 + $0x20] sm:$0xf]
    %v59 = vld [vmem:[%s1 + $0x24] sm:$0xf]
    %v60 = vld [vmem:[%s1 + $0x28] sm:$0xf]
    %v61 = vld [vmem:[%s1 + $0x2c] sm:$0xf]
    %v62 = vld [vmem:[%s1 + $0x30] sm:$0xf]
    %v63 = vld [vmem:[%s1 + $0x34] sm:$0xf]
    %v64 = vld [vmem:[%s1 + $0x38] sm:$0xf]
    %v65 = vld [vmem:[%s1 + $0x3c] sm:$0xf]
    %v66 = vld [vmem:[%s1 + $0x40] sm:$0xf]
    %v67 = vld [vmem:[%s1 + $0x44] sm:$0xf]
    %v68 = vld [vmem:[%s1 + $0x48] sm:$0xf]
    %v69 = vld [vmem:[%s1 + $0x4c] sm:$0xf]
    %v70 = vld [vmem:[%s1 + $0x50] sm:$0xf]
    %v71 = vld [vmem:[%s1 + $0x54] sm:$0xf]
    %v72 = vld [vmem:[%s1 + $0x58] sm:$0xf]
    %v73 = vld [vmem:[%s1 + $0x5c] sm:$0xf]
    %v74 = vld [vmem:[%s1 + $0x60] sm:$0xf]
    %v75 = vld [vmem:[%s1 + $0x64] sm:$0xf]
    %v76 = vld [vmem:[%s1 + $0x68] sm:$0xf]
    %v77 = vld [vmem:[%s1 + $0x6c] sm:$0xf]
    %v78 = vld [vmem:[%s1 + $0x70] sm:$0xf]
    %v79 = vld [vmem:[%s1 + $0x74] sm:$0xf]
    %v80 = vld [vmem:[%s1 + $0x78] sm:$0xf]
    %v81 = vld [vmem:[%s1 + $0x7c] sm:$0xf]
    %v82 = vld [vmem:[%s1 + $0x80] sm:$0xf]
    %v83 = vld [vmem:[%s1 + $0x84] sm:$0xf]
    %v84 = vld [vmem:[%s1 + $0x88] sm:$0xf]
    %v85 = vld [vmem:[%s1 + $0x8c] sm:$0xf]
    %v86 = vld [vmem:[%s1 + $0x90] sm:$0xf]
    %v87 = vld [vmem:[%s1 + $0x94] sm:$0xf]
    %v88 = vld [vmem:[%s1 + $0x98] sm:$0xf]
    %v89 = vld [vmem:[%s1 + $0x9c] sm:$0xf]
    %v90 = vld [vmem:[%s1 + $0xa0] sm:$0xf]
    %v91 = vld [vmem:[%s1 + $0xa4] sm:$0xf]
    %v92 = vld [vmem:[%s1 + $0xa8] sm:$0xf]
    %v93 = vld [vmem:[%s1 + $0xac] sm:$0xf]
    %v94 = vld [vmem:[%s1 + $0xb0] sm:$0xf]
    %v95 = vld [vmem:[%s1 + $0xb4] sm:$0xf]
    %v96 = vld [vmem:[%s1 + $0xb8] sm:$0xf]
    %v97 = vld [vmem:[%s1 + $0xbc] sm:$0xf]
    %v98 = vld [vmem:[%s1 + $0xc0] sm:$0xf]
    %v99 = vld [vmem:[%s1 + $0xc4] sm:$0xf]
    %v100 = vld [vmem:[%s1 + $0xc8] sm:$0xf]
    %v101 = vld [vmem:[%s1 + $0xcc] sm:$0xf]
    %v102 = vld [vmem:[%s1 + $0xd0] sm:$0xf]
    %v103 = vld [vmem:[%s1 + $0xd4] sm:$0xf]
    %v104 = vld [vmem:[%s1 + $0xd8] sm:$0xf]
    %v105 = vld [vmem:[%s1 + $0xdc] sm:$0xf]
    %v106 = vld [vmem:[%s1 + $0xe0] sm:$0xf]
    %v107 = vld [vmem:[%s1 + $0xe4] sm:$0xf]
    %v108 = vld [vmem:[%s1 + $0xe8] sm:$0xf]
    %v109 = vld [vmem:[%s1 + $0xec] sm:$0xf]
    %v110 = vld [vmem:[%s1 + $0xf0] sm:$0xf]
    %v111 = vld [vmem:[%s1 + $0xf4] sm:$0xf]
    %v112 = vld [vmem:[%s1 + $0xf8] sm:$0xf]
    %v113 = vld [vmem:[%s1 + $0xfc] sm:$0xf]
    %v114 = vld [vmem:[%s2] sm:$0xf]
    %v115 = vld [vmem:[%s2 + $0x4] sm:$0xf]
    %v116 = vld [vmem:[%s2 + $0x8] sm:$0xf]
    %v117 = vld [vmem:[%s2 + $0xc] sm:$0xf]
    %v118 = vld [vmem:[%s2 + $0x10] sm:$0xf]
    %v119 = vld [vmem:[%s2 + $0x14] sm:$0xf]
    %v120 = vld [vmem:[%s2 + $0x18] sm:$0xf]
    %v121 = vld [vmem:[%s2 + $0x1c] sm:$0xf]
    %v122 = vld [vmem:[%s2 + $0x20] sm:$0xf]
    %v123 = vld [vmem:[%s2 + $0x24] sm:$0xf]
    %v124 = vld [vmem:[%s2 + $0x28] sm:$0xf]
    %v125 = vld [vmem:[%s2 + $0x2c] sm:$0xf]
    %v126 = vld [vmem:[%s2 + $0x30] sm:$0xf]
    %v127 = vld [vmem:[%s2 + $0x34] sm:$0xf]
    %v128 = vld [vmem:[%s2 + $0x38] sm:$0xf]
    %v129 = vld [vmem:[%s2 + $0x3c] sm:$0xf]
    %v130 = vld [vmem:[%s2 + $0x40] sm:$0xf]
    %v131 = vld [vmem:[%s2 + $0x44] sm:$0xf]
    %v132 = vld [vmem:[%s2 + $0x48] sm:$0xf]
    %v133 = vld [vmem:[%s2 + $0x4c] sm:$0xf]
    %v134 = vld [vmem:[%s2 + $0x50] sm:$0xf]
    %v135 = vld [vmem:[%s2 + $0x54] sm:$0xf]
    %v136 = vld [vmem:[%s2 + $0x58] sm:$0xf]
    %v137 = vld [vmem:[%s2 + $0x5c] sm:$0xf]
    %v138 = vld [vmem:[%s2 + $0x60] sm:$0xf]
    %v139 = vld [vmem:[%s2 + $0x64] sm:$0xf]
    %v140 = vld [vmem:[%s2 + $0x68] sm:$0xf]
    %v141 = vld [vmem:[%s2 + $0x6c] sm:$0xf]
    %v142 = vld [vmem:[%s2 + $0x70] sm:$0xf]
    %v143 = vld [vmem:[%s2 + $0x74] sm:$0xf]
    %v144 = vld [vmem:[%s2 + $0x78] sm:$0xf]
    %v145 = vld [vmem:[%s2 + $0x7c] sm:$0xf]
    %v146 = vld [vmem:[%s2 + $0x80] sm:$0xf]
    %v147 = vld [vmem:[%s2 + $0x84] sm:$0xf]
    %v148 = vld [vmem:[%s2 + $0x88] sm:$0xf]
    %v149 = vld [vmem:[%s2 + $0x8c] sm:$0xf]
    %v150 = vld [vmem:[%s2 + $0x90] sm:$0xf]
    %v151 = vld [vmem:[%s2 + $0x94] sm:$0xf]
    %v152 = vld [vmem:[%s2 + $0x98] sm:$0xf]
    %v153 = vld [vmem:[%s2 + $0x9c] sm:$0xf]
    %v154 = vld [vmem:[%s2 + $0xa0] sm:$0xf]
    %v155 = vld [vmem:[%s2 + $0xa4] sm:$0xf]
    %v156 = vld [vmem:[%s2 + $0xa8] sm:$0xf]
    %v157 = vld [vmem:[%s2 + $0xac] sm:$0xf]
    %v158 = vld [vmem:[%s2 + $0xb0] sm:$0xf]
    %v159 = vld [vmem:[%s2 + $0xb4] sm:$0xf]
    %v160 = vld [vmem:[%s2 + $0xb8] sm:$0xf]
    %v161 = vld [vmem:[%s2 + $0xbc] sm:$0xf]
    %v162 = vld [vmem:[%s2 + $0xc0] sm:$0xf]
    %v163 = vld [vmem:[%s2 + $0xc4] sm:$0xf]
    %v164 = vld [vmem:[%s2 + $0xc8] sm:$0xf]
    %v165 = vld [vmem:[%s2 + $0xcc] sm:$0xf]
    %v166 = vld [vmem:[%s2 + $0xd0] sm:$0xf]
    %v167 = vld [vmem:[%s2 + $0xd4] sm:$0xf]
    %v168 = vld [vmem:[%s2 + $0xd8] sm:$0xf]
    %v169 = vld [vmem:[%s2 + $0xdc] sm:$0xf]
    %v170 = vld [vmem:[%s2 + $0xe0] sm:$0xf]
    %v171 = vld [vmem:[%s2 + $0xe4] sm:$0xf]
    %v172 = vld [vmem:[%s2 + $0xe8] sm:$0xf]
    %v173 = vld [vmem:[%s2 + $0xec] sm:$0xf]
    %v174 = vld [vmem:[%s2 + $0xf0] sm:$0xf]
    %v175 = vld [vmem:[%s2 + $0xf4] sm:$0xf]
    %v176 = vld [vmem:[%s2 + $0xf8] sm:$0xf]
    %v177 = vld [vmem:[%s2 + $0xfc] sm:$0xf]
    %v178 = vld [vmem:[%s3] sm:$0xf]
    %v179 = vld [vmem:[%s3 + $0x4] sm:$0xf]
    %v180 = vld [vmem:[%s3 + $0x8] sm:$0xf]
    %v181 = vld [vmem:[%s3 + $0xc] sm:$0xf]
    %v182 = vld [vmem:[%s4] sm:$0x1]
    %v184 = vlaneseq
    %v185 = vshrl.u32 %v184, 7
    %v186 = vsub.s32 0, %v185
    %v187 = vrot.slane %v182, %v186
    %v193 = vunpack.c.l.b16 %v46
    %v194 = vunpack.c.l.b16 %v47
    %v195 = vunpack.c.l.b16 %v48
    %v196 = vunpack.c.l.b16 %v49
    %v197 = vpack.c.b16 %v194, %v193
    %v198 = vpack.c.b16 %v196, %v195
    %v203 = vunpack.c.l.b16 %v178
    %v204 = vunpack.c.l.b16 %v179
    %v205 = vunpack.c.l.b16 %v180
    %v206 = vunpack.c.l.b16 %v181
    %v207 = vpack.c.b16 %v204, %v203
    %v208 = vpack.c.b16 %v206, %v205
    %vm211 = vcmask 261120
    %v213 = vsel %vm211, %v197, 0
    %v216 = vsel %vm211, %v198, 0
    %218 = vmatprep.subr.bf16.mxu0 0
    %219 = vmatpush1.bf16.msra.mxu0 %v207
    %220 = vmatprep.subr.bf16.mxu0 0
    %221 = vmatpush1.bf16.msra.mxu0 %v208
    %222 = vmatprep.subr.bf16.mxu0 0
    %223 = vmatpush1.bf16.msra.mxu0 0
    %224 = vmatprep.subr.bf16.mxu0 0
    %225 = vmatpush1.bf16.msra.mxu0 0
    %226 = vmatprep.subr.bf16.mxu0 0
    %227 = vmatpush1.bf16.msra.mxu0 0
    %228 = vmatprep.subr.bf16.mxu0 0
    %229 = vmatpush1.bf16.msra.mxu0 0
    %230 = vmatprep.subr.bf16.mxu0 0
    %231 = vmatpush1.bf16.msra.mxu0 0
    %232 = vmatprep.subr.bf16.mxu0 0
    %233 = vmatpush1.bf16.msra.mxu0 0
    %234 = vmatprep.subr.bf16.mxu0 0
    %235 = vmatpush1.bf16.msra.mxu0 0
    %236 = vmatprep.subr.bf16.mxu0 0
    %237 = vmatpush1.bf16.msra.mxu0 0
    %238 = vmatprep.subr.bf16.mxu0 0
    %239 = vmatpush1.bf16.msra.mxu0 0
    %240 = vmatprep.subr.bf16.mxu0 0
    %241 = vmatpush1.bf16.msra.mxu0 0
    %242 = vmatprep.subr.bf16.mxu0 0
    %243 = vmatpush1.bf16.msra.mxu0 0
    %244 = vmatprep.subr.bf16.mxu0 0
    %245 = vmatpush1.bf16.msra.mxu0 0
    %246 = vmatprep.subr.bf16.mxu0 0
    %247 = vmatpush1.bf16.msra.mxu0 0
    %248 = vmatprep.subr.bf16.mxu0 0
    %249 = vmatpush1.bf16.msra.mxu0 0
    %250 = vmatprep.mubr.bf16.mxu0 0
    %251 = vmatmul.mubr.bf16.gmra.mrb[0].mxu0 %v213
    %v252 = vpop.f32.mrb[0].mxu0
    %v253 = vadd.f32 %v187, %v252
    %v254 = vpop.f32.mrb[0].mxu0
    %v255 = vpop.f32.mrb[0].mxu0
    %v256 = vadd.f32 %v187, %v255
    %v257 = vpop.f32.mrb[0].mxu0
    %258 = vmatprep.mubr.bf16.mxu0 0
    %259 = vmatmul.mubr.bf16.gmra.mrb[0].mxu0 %v216
    %v260 = vpop.f32.mrb[0].mxu0
    %v261 = vadd.f32 %v187, %v260
    %v262 = vpop.f32.mrb[0].mxu0
    %v263 = vpop.f32.mrb[0].mxu0
    %v264 = vadd.f32 %v187, %v263
    %v265 = vpop.f32.mrb[0].mxu0
    %266 = vdwg.mxu0
    %v267 = vld [vmem:[%s5] sm:$0x3]
    %v268 = vld [vmem:[%s6] sm:$0x1]
    %v270 = vlaneseq
    %v271 = vshrl.u32 %v270, 7
    %v272 = vsub.s32 0, %v271
    %v273 = vrot.slane %v268, %v272
    %v339 = vunpack.c.l.b16 %v114
    %v340 = vunpack.c.l.b16 %v115
    %v341 = vunpack.c.l.b16 %v116
    %v342 = vunpack.c.l.b16 %v117
    %v343 = vunpack.c.l.b16 %v118
    %v344 = vunpack.c.l.b16 %v119
    %v345 = vunpack.c.l.b16 %v120
    %v346 = vunpack.c.l.b16 %v121
    %v347 = vunpack.c.l.b16 %v122
    %v348 = vunpack.c.l.b16 %v123
    %v349 = vunpack.c.l.b16 %v124
    %v350 = vunpack.c.l.b16 %v125
    %v351 = vunpack.c.l.b16 %v126
    %v352 = vunpack.c.l.b16 %v127
    %v353 = vunpack.c.l.b16 %v128
    %v354 = vunpack.c.l.b16 %v129
    %v355 = vunpack.c.l.b16 %v130
    %v356 = vunpack.c.l.b16 %v131
    %v357 = vunpack.c.l.b16 %v132
    %v358 = vunpack.c.l.b16 %v133
    %v359 = vunpack.c.l.b16 %v134
    %v360 = vunpack.c.l.b16 %v135
    %v361 = vunpack.c.l.b16 %v136
    %v362 = vunpack.c.l.b16 %v137
    %v363 = vunpack.c.l.b16 %v138
    %v364 = vunpack.c.l.b16 %v139
    %v365 = vunpack.c.l.b16 %v140
    %v366 = vunpack.c.l.b16 %v141
    %v367 = vunpack.c.l.b16 %v142
    %v368 = vunpack.c.l.b16 %v143
    %v369 = vunpack.c.l.b16 %v144
    %v370 = vunpack.c.l.b16 %v145
    %v371 = vunpack.c.l.b16 %v146
    %v372 = vunpack.c.l.b16 %v147
    %v373 = vunpack.c.l.b16 %v148
    %v374 = vunpack.c.l.b16 %v149
    %v375 = vunpack.c.l.b16 %v150
    %v376 = vunpack.c.l.b16 %v151
    %v377 = vunpack.c.l.b16 %v152
    %v378 = vunpack.c.l.b16 %v153
    %v379 = vunpack.c.l.b16 %v154
    %v380 = vunpack.c.l.b16 %v155
    %v381 = vunpack.c.l.b16 %v156
    %v382 = vunpack.c.l.b16 %v157
    %v383 = vunpack.c.l.b16 %v158
    %v384 = vunpack.c.l.b16 %v159
    %v385 = vunpack.c.l.b16 %v160
    %v386 = vunpack.c.l.b16 %v161
    %v387 = vunpack.c.l.b16 %v162
    %v388 = vunpack.c.l.b16 %v163
    %v389 = vunpack.c.l.b16 %v164
    %v390 = vunpack.c.l.b16 %v165
    %v391 = vunpack.c.l.b16 %v166
    %v392 = vunpack.c.l.b16 %v167
    %v393 = vunpack.c.l.b16 %v168
    %v394 = vunpack.c.l.b16 %v169
    %v395 = vunpack.c.l.b16 %v170
    %v396 = vunpack.c.l.b16 %v171
    %v397 = vunpack.c.l.b16 %v172
    %v398 = vunpack.c.l.b16 %v173
    %v399 = vunpack.c.l.b16 %v174
    %v400 = vunpack.c.l.b16 %v175
    %v401 = vunpack.c.l.b16 %v176
    %v402 = vunpack.c.l.b16 %v177
    %v403 = vpack.c.b16 %v340, %v339
    %v404 = vpack.c.b16 %v342, %v341
    %v405 = vpack.c.b16 %v344, %v343
    %v406 = vpack.c.b16 %v346, %v345
    %v407 = vpack.c.b16 %v348, %v347
    %v408 = vpack.c.b16 %v350, %v349
    %v409 = vpack.c.b16 %v352, %v351
    %v410 = vpack.c.b16 %v354, %v353
    %v411 = vpack.c.b16 %v356, %v355
    %v412 = vpack.c.b16 %v358, %v357
    %v413 = vpack.c.b16 %v360, %v359
    %v414 = vpack.c.b16 %v362, %v361
    %v415 = vpack.c.b16 %v364, %v363
    %v416 = vpack.c.b16 %v366, %v365
    %v417 = vpack.c.b16 %v368, %v367
    %v418 = vpack.c.b16 %v370, %v369
    %v419 = vpack.c.b16 %v372, %v371
    %v420 = vpack.c.b16 %v374, %v373
    %v421 = vpack.c.b16 %v376, %v375
    %v422 = vpack.c.b16 %v378, %v377
    %v423 = vpack.c.b16 %v380, %v379
    %v424 = vpack.c.b16 %v382, %v381
    %v425 = vpack.c.b16 %v384, %v383
    %v426 = vpack.c.b16 %v386, %v385
    %v427 = vpack.c.b16 %v388, %v387
    %v428 = vpack.c.b16 %v390, %v389
    %v429 = vpack.c.b16 %v392, %v391
    %v430 = vpack.c.b16 %v394, %v393
    %v431 = vpack.c.b16 %v396, %v395
    %v432 = vpack.c.b16 %v398, %v397
    %v433 = vpack.c.b16 %v400, %v399
    %v434 = vpack.c.b16 %v402, %v401
    %vm435 = vcmask 31744
    %v437 = vsel %vm435, %v403, 0
    %v440 = vsel %vm435, %v404, 0
    %v443 = vsel %vm435, %v405, 0
    %v446 = vsel %vm435, %v406, 0
    %v449 = vsel %vm435, %v407, 0
    %v452 = vsel %vm435, %v408, 0
    %v455 = vsel %vm435, %v409, 0
    %v458 = vsel %vm435, %v410, 0
    %v461 = vsel %vm435, %v411, 0
    %v464 = vsel %vm435, %v412, 0
    %v467 = vsel %vm435, %v413, 0
    %v470 = vsel %vm435, %v414, 0
    %v473 = vsel %vm435, %v415, 0
    %v476 = vsel %vm435, %v416, 0
    %v479 = vsel %vm435, %v417, 0
    %v482 = vsel %vm435, %v418, 0
    %v485 = vsel %vm435, %v419, 0
    %v488 = vsel %vm435, %v420, 0
    %v491 = vsel %vm435, %v421, 0
    %v494 = vsel %vm435, %v422, 0
    %v497 = vsel %vm435, %v423, 0
    %v500 = vsel %vm435, %v424, 0
    %v503 = vsel %vm435, %v425, 0
    %v506 = vsel %vm435, %v426, 0
    %v509 = vsel %vm435, %v427, 0
    %v512 = vsel %vm435, %v428, 0
    %v515 = vsel %vm435, %v429, 0
    %v518 = vsel %vm435, %v430, 0
    %v521 = vsel %vm435, %v431, 0
    %v524 = vsel %vm435, %v432, 0
    %v527 = vsel %vm435, %v433, 0
    %v530 = vsel %vm435, %v434, 0
    %vm532 = vcmask 1041408
    %v534 = vsel %vm532, %v267, 0
    %536 = vmatprep.subr.bf16.mxu0 0
    %537 = vmatpush1.bf16.msra.mxu0 %v534
    %538 = vmatprep.subr.bf16.mxu0 0
    %539 = vmatpush1.bf16.msra.mxu0 0
    %540 = vmatprep.subr.bf16.mxu0 0
    %541 = vmatpush1.bf16.msra.mxu0 0
    %542 = vmatprep.subr.bf16.mxu0 0
    %543 = vmatpush1.bf16.msra.mxu0 0
    %544 = vmatprep.subr.bf16.mxu0 0
    %545 = vmatpush1.bf16.msra.mxu0 0
    %546 = vmatprep.subr.bf16.mxu0 0
    %547 = vmatpush1.bf16.msra.mxu0 0
    %548 = vmatprep.subr.bf16.mxu0 0
    %549 = vmatpush1.bf16.msra.mxu0 0
    %550 = vmatprep.subr.bf16.mxu0 0
    %551 = vmatpush1.bf16.msra.mxu0 0
    %552 = vmatprep.subr.bf16.mxu0 0
    %553 = vmatpush1.bf16.msra.mxu0 0
    %554 = vmatprep.subr.bf16.mxu0 0
    %555 = vmatpush1.bf16.msra.mxu0 0
    %556 = vmatprep.subr.bf16.mxu0 0
    %557 = vmatpush1.bf16.msra.mxu0 0
    %558 = vmatprep.subr.bf16.mxu0 0
    %559 = vmatpush1.bf16.msra.mxu0 0
    %560 = vmatprep.subr.bf16.mxu0 0
    %561 = vmatpush1.bf16.msra.mxu0 0
    %562 = vmatprep.subr.bf16.mxu0 0
    %563 = vmatpush1.bf16.msra.mxu0 0
    %564 = vmatprep.subr.bf16.mxu0 0
    %565 = vmatpush1.bf16.msra.mxu0 0
    %566 = vmatprep.subr.bf16.mxu0 0
    %567 = vmatpush1.bf16.msra.mxu0 0
    %568 = vmatprep.mubr.bf16.mxu0 0
    %569 = vmatmul.mubr.bf16.gmra.mrb[0].mxu0 %v437
    %v570 = vpop.f32.mrb[0].mxu0
    %v571 = vadd.f32 %v273, %v570
    %v572 = vpop.f32.mrb[0].mxu0
    %v573 = vpop.f32.mrb[0].mxu0
    %v574 = vadd.f32 %v273, %v573
    %v575 = vpop.f32.mrb[0].mxu0
    %576 = vmatprep.mubr.bf16.mxu0 0
    %577 = vmatmul.mubr.bf16.gmra.mrb[0].mxu0 %v440
    %v578 = vpop.f32.mrb[0].mxu0
    %v579 = vadd.f32 %v273, %v578
    %v580 = vpop.f32.mrb[0].mxu0
    %v581 = vpop.f32.mrb[0].mxu0
    %v582 = vadd.f32 %v273, %v581
    %v583 = vpop.f32.mrb[0].mxu0
    %584 = vmatprep.mubr.bf16.mxu0 0
    %585 = vmatmul.mubr.bf16.gmra.mrb[0].mxu0 %v443
    %v586 = vpop.f32.mrb[0].mxu0
    %v587 = vadd.f32 %v273, %v586
    %v588 = vpop.f32.mrb[0].mxu0
    %v589 = vpop.f32.mrb[0].mxu0
    %v590 = vadd.f32 %v273, %v589
    %v591 = vpop.f32.mrb[0].mxu0
    %592 = vmatprep.mubr.bf16.mxu0 0
    %593 = vmatmul.mubr.bf16.gmra.mrb[0].mxu0 %v446
    %v594 = vpop.f32.mrb[0].mxu0
    %v595 = vadd.f32 %v273, %v594
    %v596 = vpop.f32.mrb[0].mxu0
    %v597 = vpop.f32.mrb[0].mxu0
    %v598 = vadd.f32 %v273, %v597
    %v599 = vpop.f32.mrb[0].mxu0
    %600 = vmatprep.mubr.bf16.mxu0 0
    %601 = vmatmul.mubr.bf16.gmra.mrb[0].mxu0 %v449
    %v602 = vpop.f32.mrb[0].mxu0
    %v603 = vadd.f32 %v273, %v602
    %v604 = vpop.f32.mrb[0].mxu0
    %v605 = vpop.f32.mrb[0].mxu0
    %v606 = vadd.f32 %v273, %v605
    %v607 = vpop.f32.mrb[0].mxu0
    %608 = vmatprep.mubr.bf16.mxu0 0
    %609 = vmatmul.mubr.bf16.gmra.mrb[0].mxu0 %v452
    %v610 = vpop.f32.mrb[0].mxu0
    %v611 = vadd.f32 %v273, %v610
    %v612 = vpop.f32.mrb[0].mxu0
    %v613 = vpop.f32.mrb[0].mxu0
    %v614 = vadd.f32 %v273, %v613
    %v615 = vpop.f32.mrb[0].mxu0
    %616 = vmatprep.mubr.bf16.mxu0 0
    %617 = vmatmul.mubr.bf16.gmra.mrb[0].mxu0 %v455
    %v618 = vpop.f32.mrb[0].mxu0
    %v619 = vadd.f32 %v273, %v618
    %v620 = vpop.f32.mrb[0].mxu0
    %v621 = vpop.f32.mrb[0].mxu0
    %v622 = vadd.f32 %v273, %v621
    %v623 = vpop.f32.mrb[0].mxu0
    %624 = vmatprep.mubr.bf16.mxu0 0
    %625 = vmatmul.mubr.bf16.gmra.mrb[0].mxu0 %v458
    %v626 = vpop.f32.mrb[0].mxu0
    %v627 = vadd.f32 %v273, %v626
    %v628 = vpop.f32.mrb[0].mxu0
    %v629 = vpop.f32.mrb[0].mxu0
    %v630 = vadd.f32 %v273, %v629
    %v631 = vpop.f32.mrb[0].mxu0
    %632 = vmatprep.mubr.bf16.mxu0 0
    %633 = vmatmul.mubr.bf16.gmra.mrb[0].mxu0 %v461
    %v634 = vpop.f32.mrb[0].mxu0
    %v635 = vadd.f32 %v273, %v634
    %v636 = vpop.f32.mrb[0].mxu0
    %v637 = vpop.f32.mrb[0].mxu0
    %v638 = vadd.f32 %v273, %v637
    %v639 = vpop.f32.mrb[0].mxu0
    %640 = vmatprep.mubr.bf16.mxu0 0
    %641 = vmatmul.mubr.bf16.gmra.mrb[0].mxu0 %v464
    %v642 = vpop.f32.mrb[0].mxu0
    %v643 = vadd.f32 %v273, %v642
    %v644 = vpop.f32.mrb[0].mxu0
    %v645 = vpop.f32.mrb[0].mxu0
    %v646 = vadd.f32 %v273, %v645
    %v647 = vpop.f32.mrb[0].mxu0
    %648 = vmatprep.mubr.bf16.mxu0 0
    %649 = vmatmul.mubr.bf16.gmra.mrb[0].mxu0 %v467
    %v650 = vpop.f32.mrb[0].mxu0
    %v651 = vadd.f32 %v273, %v650
    %v652 = vpop.f32.mrb[0].mxu0
    %v653 = vpop.f32.mrb[0].mxu0
    %v654 = vadd.f32 %v273, %v653
    %v655 = vpop.f32.mrb[0].mxu0
    %656 = vmatprep.mubr.bf16.mxu0 0
    %657 = vmatmul.mubr.bf16.gmra.mrb[0].mxu0 %v470
    %v658 = vpop.f32.mrb[0].mxu0
    %v659 = vadd.f32 %v273, %v658
    %v660 = vpop.f32.mrb[0].mxu0
    %v661 = vpop.f32.mrb[0].mxu0
    %v662 = vadd.f32 %v273, %v661
    %v663 = vpop.f32.mrb[0].mxu0
    %664 = vmatprep.mubr.bf16.mxu0 0
    %665 = vmatmul.mubr.bf16.gmra.mrb[0].mxu0 %v473
    %v666 = vpop.f32.mrb[0].mxu0
    %v667 = vadd.f32 %v273, %v666
    %v668 = vpop.f32.mrb[0].mxu0
    %v669 = vpop.f32.mrb[0].mxu0
    %v670 = vadd.f32 %v273, %v669
    %v671 = vpop.f32.mrb[0].mxu0
    %672 = vmatprep.mubr.bf16.mxu0 0
    %673 = vmatmul.mubr.bf16.gmra.mrb[0].mxu0 %v476
    %v674 = vpop.f32.mrb[0].mxu0
    %v675 = vadd.f32 %v273, %v674
    %v676 = vpop.f32.mrb[0].mxu0
    %v677 = vpop.f32.mrb[0].mxu0
    %v678 = vadd.f32 %v273, %v677
    %v679 = vpop.f32.mrb[0].mxu0
    %680 = vmatprep.mubr.bf16.mxu0 0
    %681 = vmatmul.mubr.bf16.gmra.mrb[0].mxu0 %v479
    %v682 = vpop.f32.mrb[0].mxu0
    %v683 = vadd.f32 %v273, %v682
    %v684 = vpop.f32.mrb[0].mxu0
    %v685 = vpop.f32.mrb[0].mxu0
    %v686 = vadd.f32 %v273, %v685
    %v687 = vpop.f32.mrb[0].mxu0
    %688 = vmatprep.mubr.bf16.mxu0 0
    %689 = vmatmul.mubr.bf16.gmra.mrb[0].mxu0 %v482
    %v690 = vpop.f32.mrb[0].mxu0
    %v691 = vadd.f32 %v273, %v690
    %v692 = vpop.f32.mrb[0].mxu0
    %v693 = vpop.f32.mrb[0].mxu0
    %v694 = vadd.f32 %v273, %v693
    %v695 = vpop.f32.mrb[0].mxu0
    %696 = vmatprep.mubr.bf16.mxu0 0
    %697 = vmatmul.mubr.bf16.gmra.mrb[0].mxu0 %v485
    %v698 = vpop.f32.mrb[0].mxu0
    %v699 = vadd.f32 %v273, %v698
    %v700 = vpop.f32.mrb[0].mxu0
    %v701 = vpop.f32.mrb[0].mxu0
    %v702 = vadd.f32 %v273, %v701
    %v703 = vpop.f32.mrb[0].mxu0
    %704 = vmatprep.mubr.bf16.mxu0 0
    %705 = vmatmul.mubr.bf16.gmra.mrb[0].mxu0 %v488
    %v706 = vpop.f32.mrb[0].mxu0
    %v707 = vadd.f32 %v273, %v706
    %v708 = vpop.f32.mrb[0].mxu0
    %v709 = vpop.f32.mrb[0].mxu0
    %v710 = vadd.f32 %v273, %v709
    %v711 = vpop.f32.mrb[0].mxu0
    %712 = vmatprep.mubr.bf16.mxu0 0
    %713 = vmatmul.mubr.bf16.gmra.mrb[0].mxu0 %v491
    %v714 = vpop.f32.mrb[0].mxu0
    %v715 = vadd.f32 %v273, %v714
    %v716 = vpop.f32.mrb[0].mxu0
    %v717 = vpop.f32.mrb[0].mxu0
    %v718 = vadd.f32 %v273, %v717
    %v719 = vpop.f32.mrb[0].mxu0
    %720 = vmatprep.mubr.bf16.mxu0 0
    %721 = vmatmul.mubr.bf16.gmra.mrb[0].mxu0 %v494
    %v722 = vpop.f32.mrb[0].mxu0
    %v723 = vadd.f32 %v273, %v722
    %v724 = vpop.f32.mrb[0].mxu0
    %v725 = vpop.f32.mrb[0].mxu0
    %v726 = vadd.f32 %v273, %v725
    %v727 = vpop.f32.mrb[0].mxu0
    %728 = vmatprep.mubr.bf16.mxu0 0
    %729 = vmatmul.mubr.bf16.gmra.mrb[0].mxu0 %v497
    %v730 = vpop.f32.mrb[0].mxu0
    %v731 = vadd.f32 %v273, %v730
    %v732 = vpop.f32.mrb[0].mxu0
    %v733 = vpop.f32.mrb[0].mxu0
    %v734 = vadd.f32 %v273, %v733
    %v735 = vpop.f32.mrb[0].mxu0
    %736 = vmatprep.mubr.bf16.mxu0 0
    %737 = vmatmul.mubr.bf16.gmra.mrb[0].mxu0 %v500
    %v738 = vpop.f32.mrb[0].mxu0
    %v739 = vadd.f32 %v273, %v738
    %v740 = vpop.f32.mrb[0].mxu0
    %v741 = vpop.f32.mrb[0].mxu0
    %v742 = vadd.f32 %v273, %v741
    %v743 = vpop.f32.mrb[0].mxu0
    %744 = vmatprep.mubr.bf16.mxu0 0
    %745 = vmatmul.mubr.bf16.gmra.mrb[0].mxu0 %v503
    %v746 = vpop.f32.mrb[0].mxu0
    %v747 = vadd.f32 %v273, %v746
    %v748 = vpop.f32.mrb[0].mxu0
    %v749 = vpop.f32.mrb[0].mxu0
    %v750 = vadd.f32 %v273, %v749
    %v751 = vpop.f32.mrb[0].mxu0
    %752 = vmatprep.mubr.bf16.mxu0 0
    %753 = vmatmul.mubr.bf16.gmra.mrb[0].mxu0 %v506
    %v754 = vpop.f32.mrb[0].mxu0
    %v755 = vadd.f32 %v273, %v754
    %v756 = vpop.f32.mrb[0].mxu0
    %v757 = vpop.f32.mrb[0].mxu0
    %v758 = vadd.f32 %v273, %v757
    %v759 = vpop.f32.mrb[0].mxu0
    %760 = vmatprep.mubr.bf16.mxu0 0
    %761 = vmatmul.mubr.bf16.gmra.mrb[0].mxu0 %v509
    %v762 = vpop.f32.mrb[0].mxu0
    %v763 = vadd.f32 %v273, %v762
    %v764 = vpop.f32.mrb[0].mxu0
    %v765 = vpop.f32.mrb[0].mxu0
    %v766 = vadd.f32 %v273, %v765
    %v767 = vpop.f32.mrb[0].mxu0
    %768 = vmatprep.mubr.bf16.mxu0 0
    %769 = vmatmul.mubr.bf16.gmra.mrb[0].mxu0 %v512
    %v770 = vpop.f32.mrb[0].mxu0
    %v771 = vadd.f32 %v273, %v770
    %v772 = vpop.f32.mrb[0].mxu0
    %v773 = vpop.f32.mrb[0].mxu0
    %v774 = vadd.f32 %v273, %v773
    %v775 = vpop.f32.mrb[0].mxu0
    %776 = vmatprep.mubr.bf16.mxu0 0
    %777 = vmatmul.mubr.bf16.gmra.mrb[0].mxu0 %v515
    %v778 = vpop.f32.mrb[0].mxu0
    %v779 = vadd.f32 %v273, %v778
    %v780 = vpop.f32.mrb[0].mxu0
    %v781 = vpop.f32.mrb[0].mxu0
    %v782 = vadd.f32 %v273, %v781
    %v783 = vpop.f32.mrb[0].mxu0
    %784 = vmatprep.mubr.bf16.mxu0 0
    %785 = vmatmul.mubr.bf16.gmra.mrb[0].mxu0 %v518
    %v786 = vpop.f32.mrb[0].mxu0
    %v787 = vadd.f32 %v273, %v786
    %v788 = vpop.f32.mrb[0].mxu0
    %v789 = vpop.f32.mrb[0].mxu0
    %v790 = vadd.f32 %v273, %v789
    %v791 = vpop.f32.mrb[0].mxu0
    %792 = vmatprep.mubr.bf16.mxu0 0
    %793 = vmatmul.mubr.bf16.gmra.mrb[0].mxu0 %v521
    %v794 = vpop.f32.mrb[0].mxu0
    %v795 = vadd.f32 %v273, %v794
    %v796 = vpop.f32.mrb[0].mxu0
    %v797 = vpop.f32.mrb[0].mxu0
    %v798 = vadd.f32 %v273, %v797
    %v799 = vpop.f32.mrb[0].mxu0
    %800 = vmatprep.mubr.bf16.mxu0 0
    %801 = vmatmul.mubr.bf16.gmra.mrb[0].mxu0 %v524
    %v802 = vpop.f32.mrb[0].mxu0
    %v803 = vadd.f32 %v273, %v802
    %v804 = vpop.f32.mrb[0].mxu0
    %v805 = vpop.f32.mrb[0].mxu0
    %v806 = vadd.f32 %v273, %v805
    %v807 = vpop.f32.mrb[0].mxu0
    %808 = vmatprep.mubr.bf16.mxu0 0
    %809 = vmatmul.mubr.bf16.gmra.mrb[0].mxu0 %v527
    %v810 = vpop.f32.mrb[0].mxu0
    %v811 = vadd.f32 %v273, %v810
    %v812 = vpop.f32.mrb[0].mxu0
    %v813 = vpop.f32.mrb[0].mxu0
    %v814 = vadd.f32 %v273, %v813
    %v815 = vpop.f32.mrb[0].mxu0
    %816 = vmatprep.mubr.bf16.mxu0 0
    %817 = vmatmul.mubr.bf16.gmra.mrb[0].mxu0 %v530
    %v818 = vpop.f32.mrb[0].mxu0
    %v819 = vadd.f32 %v273, %v818
    %v820 = vpop.f32.mrb[0].mxu0
    %v821 = vpop.f32.mrb[0].mxu0
    %v822 = vadd.f32 %v273, %v821
    %v823 = vpop.f32.mrb[0].mxu0
    %824 = vdwg.mxu0
    %v825 = vmax.f32 %v571, 0.0
    %v826 = vmax.f32 %v574, 0.0
    %v827 = vmax.f32 %v579, 0.0
    %v828 = vmax.f32 %v582, 0.0
    %v829 = vmax.f32 %v587, 0.0
    %v830 = vmax.f32 %v590, 0.0
    %v831 = vmax.f32 %v595, 0.0
    %v832 = vmax.f32 %v598, 0.0
    %v833 = vmax.f32 %v603, 0.0
    %v834 = vmax.f32 %v606, 0.0
    %v835 = vmax.f32 %v611, 0.0
    %v836 = vmax.f32 %v614, 0.0
    %v837 = vmax.f32 %v619, 0.0
    %v838 = vmax.f32 %v622, 0.0
    %v839 = vmax.f32 %v627, 0.0
    %v840 = vmax.f32 %v630, 0.0
    %v841 = vmax.f32 %v635, 0.0
    %v842 = vmax.f32 %v638, 0.0
    %v843 = vmax.f32 %v643, 0.0
    %v844 = vmax.f32 %v646, 0.0
    %v845 = vmax.f32 %v651, 0.0
    %v846 = vmax.f32 %v654, 0.0
    %v847 = vmax.f32 %v659, 0.0
    %v848 = vmax.f32 %v662, 0.0
    %v849 = vmax.f32 %v667, 0.0
    %v850 = vmax.f32 %v670, 0.0
    %v851 = vmax.f32 %v675, 0.0
    %v852 = vmax.f32 %v678, 0.0
    %v853 = vmax.f32 %v683, 0.0
    %v854 = vmax.f32 %v686, 0.0
    %v855 = vmax.f32 %v691, 0.0
    %v856 = vmax.f32 %v694, 0.0
    %v857 = vmax.f32 %v699, 0.0
    %v858 = vmax.f32 %v702, 0.0
    %v859 = vmax.f32 %v707, 0.0
    %v860 = vmax.f32 %v710, 0.0
    %v861 = vmax.f32 %v715, 0.0
    %v862 = vmax.f32 %v718, 0.0
    %v863 = vmax.f32 %v723, 0.0
    %v864 = vmax.f32 %v726, 0.0
    %v865 = vmax.f32 %v731, 0.0
    %v866 = vmax.f32 %v734, 0.0
    %v867 = vmax.f32 %v739, 0.0
    %v868 = vmax.f32 %v742, 0.0
    %v869 = vmax.f32 %v747, 0.0
    %v870 = vmax.f32 %v750, 0.0
    %v871 = vmax.f32 %v755, 0.0
    %v872 = vmax.f32 %v758, 0.0
    %v873 = vmax.f32 %v763, 0.0
    %v874 = vmax.f32 %v766, 0.0
    %v875 = vmax.f32 %v771, 0.0
    %v876 = vmax.f32 %v774, 0.0
    %v877 = vmax.f32 %v779, 0.0
    %v878 = vmax.f32 %v782, 0.0
    %v879 = vmax.f32 %v787, 0.0
    %v880 = vmax.f32 %v790, 0.0
    %v881 = vmax.f32 %v795, 0.0
    %v882 = vmax.f32 %v798, 0.0
    %v883 = vmax.f32 %v803, 0.0
    %v884 = vmax.f32 %v806, 0.0
    %v885 = vmax.f32 %v811, 0.0
    %v886 = vmax.f32 %v814, 0.0
    %v887 = vmax.f32 %v819, 0.0
    %v888 = vmax.f32 %v822, 0.0
    %v889 = vld [vmem:[%s7] sm:$0xf]
    %v890 = vld [vmem:[%s7 + $0x4] sm:$0xf]
    %v891 = vld [vmem:[%s7 + $0x8] sm:$0xf]
    %v892 = vld [vmem:[%s7 + $0xc] sm:$0xf]
    %v893 = vpack.c.bf16 %v826, %v825
    %v894 = vpack.c.bf16 %v828, %v827
    %v895 = vpack.c.bf16 %v830, %v829
    %v896 = vpack.c.bf16 %v832, %v831
    %v897 = vpack.c.bf16 %v834, %v833
    %v898 = vpack.c.bf16 %v836, %v835
    %v899 = vpack.c.bf16 %v838, %v837
    %v900 = vpack.c.bf16 %v840, %v839
    %v901 = vpack.c.bf16 %v842, %v841
    %v902 = vpack.c.bf16 %v844, %v843
    %v903 = vpack.c.bf16 %v846, %v845
    %v904 = vpack.c.bf16 %v848, %v847
    %v905 = vpack.c.bf16 %v850, %v849
    %v906 = vpack.c.bf16 %v852, %v851
    %v907 = vpack.c.bf16 %v854, %v853
    %v908 = vpack.c.bf16 %v856, %v855
    %v909 = vpack.c.bf16 %v858, %v857
    %v910 = vpack.c.bf16 %v860, %v859
    %v911 = vpack.c.bf16 %v862, %v861
    %v912 = vpack.c.bf16 %v864, %v863
    %v913 = vpack.c.bf16 %v866, %v865
    %v914 = vpack.c.bf16 %v868, %v867
    %v915 = vpack.c.bf16 %v870, %v869
    %v916 = vpack.c.bf16 %v872, %v871
    %v917 = vpack.c.bf16 %v874, %v873
    %v918 = vpack.c.bf16 %v876, %v875
    %v919 = vpack.c.bf16 %v878, %v877
    %v920 = vpack.c.bf16 %v880, %v879
    %v921 = vpack.c.bf16 %v882, %v881
    %v922 = vpack.c.bf16 %v884, %v883
    %v923 = vpack.c.bf16 %v886, %v885
    %v924 = vpack.c.bf16 %v888, %v887
    %v925 = vld [vmem:[%s8] sm:$0xf]
    %v926 = vld [vmem:[%s8 + $0x4] sm:$0xf]
    %v927 = vld [vmem:[%s8 + $0x8] sm:$0xf]
    %v928 = vld [vmem:[%s8 + $0xc] sm:$0xf]
    %v929 = vld [vmem:[%s8 + $0x10] sm:$0xf]
    %v930 = vld [vmem:[%s8 + $0x14] sm:$0xf]
    %v931 = vld [vmem:[%s8 + $0x18] sm:$0xf]
    %v932 = vld [vmem:[%s8 + $0x1c] sm:$0xf]
    %v941 = vunpack.c.l.b16 %v925
    %v942 = vunpack.c.l.b16 %v926
    %v943 = vunpack.c.l.b16 %v927
    %v944 = vunpack.c.l.b16 %v928
    %v945 = vunpack.c.l.b16 %v929
    %v946 = vunpack.c.l.b16 %v930
    %v947 = vunpack.c.l.b16 %v931
    %v948 = vunpack.c.l.b16 %v932
    %v949 = vpack.c.b16 %v942, %v941
    %v950 = vpack.c.b16 %v944, %v943
    %v951 = vpack.c.b16 %v946, %v945
    %v952 = vpack.c.b16 %v948, %v947
    %vm957 = vcmask 523264
    %v959 = vsel %vm957, %v893, 0
    %v962 = vsel %vm957, %v894, 0
    %v965 = vsel %vm957, %v895, 0
    %v968 = vsel %vm957, %v896, 0
    %v971 = vsel %vm957, %v897, 0
    %v974 = vsel %vm957, %v898, 0
    %v977 = vsel %vm957, %v899, 0
    %v980 = vsel %vm957, %v900, 0
    %v983 = vsel %vm957, %v901, 0
    %v986 = vsel %vm957, %v902, 0
    %v989 = vsel %vm957, %v903, 0
    %v992 = vsel %vm957, %v904, 0
    %v995 = vsel %vm957, %v905, 0
    %v998 = vsel %vm957, %v906, 0
    %v1001 = vsel %vm957, %v907, 0
    %v1004 = vsel %vm957, %v908, 0
    %v1007 = vsel %vm957, %v909, 0
    %v1010 = vsel %vm957, %v910, 0
    %v1013 = vsel %vm957, %v911, 0
    %v1016 = vsel %vm957, %v912, 0
    %v1019 = vsel %vm957, %v913, 0
    %v1022 = vsel %vm957, %v914, 0
    %v1025 = vsel %vm957, %v915, 0
    %v1028 = vsel %vm957, %v916, 0
    %v1031 = vsel %vm957, %v917, 0
    %v1034 = vsel %vm957, %v918, 0
    %v1037 = vsel %vm957, %v919, 0
    %v1040 = vsel %vm957, %v920, 0
    %v1043 = vsel %vm957, %v921, 0
    %v1046 = vsel %vm957, %v922, 0
    %v1049 = vsel %vm957, %v923, 0
    %v1052 = vsel %vm957, %v924, 0
    %1054 = vmatprep.subr.bf16.mxu0 0
    %1055 = vmatpush1.bf16.msra.mxu0 %v949
    %1056 = vmatprep.subr.bf16.mxu0 0
    %1057 = vmatpush1.bf16.msra.mxu0 %v950
    %1058 = vmatprep.subr.bf16.mxu0 0
    %1059 = vmatpush1.bf16.msra.mxu0 %v951
    %1060 = vmatprep.subr.bf16.mxu0 0
    %1061 = vmatpush1.bf16.msra.mxu0 %v952
    %1062 = vmatprep.subr.bf16.mxu0 0
    %1063 = vmatpush1.bf16.msra.mxu0 0
    %1064 = vmatprep.subr.bf16.mxu0 0
    %1065 = vmatpush1.bf16.msra.mxu0 0
    %1066 = vmatprep.subr.bf16.mxu0 0
    %1067 = vmatpush1.bf16.msra.mxu0 0
    %1068 = vmatprep.subr.bf16.mxu0 0
    %1069 = vmatpush1.bf16.msra.mxu0 0
    %1070 = vmatprep.subr.bf16.mxu0 0
    %1071 = vmatpush1.bf16.msra.mxu0 0
    %1072 = vmatprep.subr.bf16.mxu0 0
    %1073 = vmatpush1.bf16.msra.mxu0 0
    %1074 = vmatprep.subr.bf16.mxu0 0
    %1075 = vmatpush1.bf16.msra.mxu0 0
    %1076 = vmatprep.subr.bf16.mxu0 0
    %1077 = vmatpush1.bf16.msra.mxu0 0
    %1078 = vmatprep.subr.bf16.mxu0 0
    %1079 = vmatpush1.bf16.msra.mxu0 0
    %1080 = vmatprep.subr.bf16.mxu0 0
    %1081 = vmatpush1.bf16.msra.mxu0 0
    %1082 = vmatprep.subr.bf16.mxu0 0
    %1083 = vmatpush1.bf16.msra.mxu0 0
    %1084 = vmatprep.subr.bf16.mxu0 0
    %1085 = vmatpush1.bf16.msra.mxu0 0
    %1086 = vmatprep.mubr.bf16.mxu0 0
    %1087 = vmatmul.mubr.bf16.gmra.mrb[0].mxu0 %v959
    %v1088 = vpop.f32.mrb[0].mxu0
    %v1089 = vadd.f32 0.0, %v1088
    %v1090 = vpop.f32.mrb[0].mxu0
    %v1091 = vpop.f32.mrb[0].mxu0
    %v1092 = vadd.f32 0.0, %v1091
    %v1093 = vpop.f32.mrb[0].mxu0
    %1094 = vmatprep.mubr.bf16.mxu0 0
    %1095 = vmatmul.mubr.bf16.gmra.mrb[0].mxu0 %v962
    %v1096 = vpop.f32.mrb[0].mxu0
    %v1097 = vadd.f32 0.0, %v1096
    %v1098 = vpop.f32.mrb[0].mxu0
    %v1099 = vpop.f32.mrb[0].mxu0
    %v1100 = vadd.f32 0.0, %v1099
    %v1101 = vpop.f32.mrb[0].mxu0
    %1102 = vmatprep.mubr.bf16.mxu0 0
    %1103 = vmatmul.mubr.bf16.gmra.mrb[0].mxu0 %v965
    %v1104 = vpop.f32.mrb[0].mxu0
    %v1105 = vadd.f32 0.0, %v1104
    %v1106 = vpop.f32.mrb[0].mxu0
    %v1107 = vpop.f32.mrb[0].mxu0
    %v1108 = vadd.f32 0.0, %v1107
    %v1109 = vpop.f32.mrb[0].mxu0
    %1110 = vmatprep.mubr.bf16.mxu0 0
    %1111 = vmatmul.mubr.bf16.gmra.mrb[0].mxu0 %v968
    %v1112 = vpop.f32.mrb[0].mxu0
    %v1113 = vadd.f32 0.0, %v1112
    %v1114 = vpop.f32.mrb[0].mxu0
    %v1115 = vpop.f32.mrb[0].mxu0
    %v1116 = vadd.f32 0.0, %v1115
    %v1117 = vpop.f32.mrb[0].mxu0
    %1118 = vmatprep.mubr.bf16.mxu0 0
    %1119 = vmatmul.mubr.bf16.gmra.mrb[0].mxu0 %v971
    %v1120 = vpop.f32.mrb[0].mxu0
    %v1121 = vadd.f32 0.0, %v1120
    %v1122 = vpop.f32.mrb[0].mxu0
    %v1123 = vpop.f32.mrb[0].mxu0
    %v1124 = vadd.f32 0.0, %v1123
    %v1125 = vpop.f32.mrb[0].mxu0
    %1126 = vmatprep.mubr.bf16.mxu0 0
    %1127 = vmatmul.mubr.bf16.gmra.mrb[0].mxu0 %v974
    %v1128 = vpop.f32.mrb[0].mxu0
    %v1129 = vadd.f32 0.0, %v1128
    %v1130 = vpop.f32.mrb[0].mxu0
    %v1131 = vpop.f32.mrb[0].mxu0
    %v1132 = vadd.f32 0.0, %v1131
    %v1133 = vpop.f32.mrb[0].mxu0
    %1134 = vmatprep.mubr.bf16.mxu0 0
    %1135 = vmatmul.mubr.bf16.gmra.mrb[0].mxu0 %v977
    %v1136 = vpop.f32.mrb[0].mxu0
    %v1137 = vadd.f32 0.0, %v1136
    %v1138 = vpop.f32.mrb[0].mxu0
    %v1139 = vpop.f32.mrb[0].mxu0
    %v1140 = vadd.f32 0.0, %v1139
    %v1141 = vpop.f32.mrb[0].mxu0
    %1142 = vmatprep.mubr.bf16.mxu0 0
    %1143 = vmatmul.mubr.bf16.gmra.mrb[0].mxu0 %v980
    %v1144 = vpop.f32.mrb[0].mxu0
    %v1145 = vadd.f32 0.0, %v1144
    %v1146 = vpop.f32.mrb[0].mxu0
    %v1147 = vpop.f32.mrb[0].mxu0
    %v1148 = vadd.f32 0.0, %v1147
    %v1149 = vpop.f32.mrb[0].mxu0
    %1150 = vmatprep.mubr.bf16.mxu0 0
    %1151 = vmatmul.mubr.bf16.gmra.mrb[0].mxu0 %v983
    %v1152 = vpop.f32.mrb[0].mxu0
    %v1153 = vadd.f32 0.0, %v1152
    %v1154 = vpop.f32.mrb[0].mxu0
    %v1155 = vpop.f32.mrb[0].mxu0
    %v1156 = vadd.f32 0.0, %v1155
    %v1157 = vpop.f32.mrb[0].mxu0
    %1158 = vmatprep.mubr.bf16.mxu0 0
    %1159 = vmatmul.mubr.bf16.gmra.mrb[0].mxu0 %v986
    %v1160 = vpop.f32.mrb[0].mxu0
    %v1161 = vadd.f32 0.0, %v1160
    %v1162 = vpop.f32.mrb[0].mxu0
    %v1163 = vpop.f32.mrb[0].mxu0
    %v1164 = vadd.f32 0.0, %v1163
    %v1165 = vpop.f32.mrb[0].mxu0
    %1166 = vmatprep.mubr.bf16.mxu0 0
    %1167 = vmatmul.mubr.bf16.gmra.mrb[0].mxu0 %v989
    %v1168 = vpop.f32.mrb[0].mxu0
    %v1169 = vadd.f32 0.0, %v1168
    %v1170 = vpop.f32.mrb[0].mxu0
    %v1171 = vpop.f32.mrb[0].mxu0
    %v1172 = vadd.f32 0.0, %v1171
    %v1173 = vpop.f32.mrb[0].mxu0
    %1174 = vmatprep.mubr.bf16.mxu0 0
    %1175 = vmatmul.mubr.bf16.gmra.mrb[0].mxu0 %v992
    %v1176 = vpop.f32.mrb[0].mxu0
    %v1177 = vadd.f32 0.0, %v1176
    %v1178 = vpop.f32.mrb[0].mxu0
    %v1179 = vpop.f32.mrb[0].mxu0
    %v1180 = vadd.f32 0.0, %v1179
    %v1181 = vpop.f32.mrb[0].mxu0
    %1182 = vmatprep.mubr.bf16.mxu0 0
    %1183 = vmatmul.mubr.bf16.gmra.mrb[0].mxu0 %v995
    %v1184 = vpop.f32.mrb[0].mxu0
    %v1185 = vadd.f32 0.0, %v1184
    %v1186 = vpop.f32.mrb[0].mxu0
    %v1187 = vpop.f32.mrb[0].mxu0
    %v1188 = vadd.f32 0.0, %v1187
    %v1189 = vpop.f32.mrb[0].mxu0
    %1190 = vmatprep.mubr.bf16.mxu0 0
    %1191 = vmatmul.mubr.bf16.gmra.mrb[0].mxu0 %v998
    %v1192 = vpop.f32.mrb[0].mxu0
    %v1193 = vadd.f32 0.0, %v1192
    %v1194 = vpop.f32.mrb[0].mxu0
    %v1195 = vpop.f32.mrb[0].mxu0
    %v1196 = vadd.f32 0.0, %v1195
    %v1197 = vpop.f32.mrb[0].mxu0
    %1198 = vmatprep.mubr.bf16.mxu0 0
    %1199 = vmatmul.mubr.bf16.gmra.mrb[0].mxu0 %v1001
    %v1200 = vpop.f32.mrb[0].mxu0
    %v1201 = vadd.f32 0.0, %v1200
    %v1202 = vpop.f32.mrb[0].mxu0
    %v1203 = vpop.f32.mrb[0].mxu0
    %v1204 = vadd.f32 0.0, %v1203
    %v1205 = vpop.f32.mrb[0].mxu0
    %1206 = vmatprep.mubr.bf16.mxu0 0
    %1207 = vmatmul.mubr.bf16.gmra.mrb[0].mxu0 %v1004
    %v1208 = vpop.f32.mrb[0].mxu0
    %v1209 = vadd.f32 0.0, %v1208
    %v1210 = vpop.f32.mrb[0].mxu0
    %v1211 = vpop.f32.mrb[0].mxu0
    %v1212 = vadd.f32 0.0, %v1211
    %v1213 = vpop.f32.mrb[0].mxu0
    %1214 = vmatprep.mubr.bf16.mxu0 0
    %1215 = vmatmul.mubr.bf16.gmra.mrb[0].mxu0 %v1007
    %v1216 = vpop.f32.mrb[0].mxu0
    %v1217 = vadd.f32 0.0, %v1216
    %v1218 = vpop.f32.mrb[0].mxu0
    %v1219 = vpop.f32.mrb[0].mxu0
    %v1220 = vadd.f32 0.0, %v1219
    %v1221 = vpop.f32.mrb[0].mxu0
    %1222 = vmatprep.mubr.bf16.mxu0 0
    %1223 = vmatmul.mubr.bf16.gmra.mrb[0].mxu0 %v1010
    %v1224 = vpop.f32.mrb[0].mxu0
    %v1225 = vadd.f32 0.0, %v1224
    %v1226 = vpop.f32.mrb[0].mxu0
    %v1227 = vpop.f32.mrb[0].mxu0
    %v1228 = vadd.f32 0.0, %v1227
    %v1229 = vpop.f32.mrb[0].mxu0
    %1230 = vmatprep.mubr.bf16.mxu0 0
    %1231 = vmatmul.mubr.bf16.gmra.mrb[0].mxu0 %v1013
    %v1232 = vpop.f32.mrb[0].mxu0
    %v1233 = vadd.f32 0.0, %v1232
    %v1234 = vpop.f32.mrb[0].mxu0
    %v1235 = vpop.f32.mrb[0].mxu0
    %v1236 = vadd.f32 0.0, %v1235
    %v1237 = vpop.f32.mrb[0].mxu0
    %1238 = vmatprep.mubr.bf16.mxu0 0
    %1239 = vmatmul.mubr.bf16.gmra.mrb[0].mxu0 %v1016
    %v1240 = vpop.f32.mrb[0].mxu0
    %v1241 = vadd.f32 0.0, %v1240
    %v1242 = vpop.f32.mrb[0].mxu0
    %v1243 = vpop.f32.mrb[0].mxu0
    %v1244 = vadd.f32 0.0, %v1243
    %v1245 = vpop.f32.mrb[0].mxu0
    %1246 = vmatprep.mubr.bf16.mxu0 0
    %1247 = vmatmul.mubr.bf16.gmra.mrb[0].mxu0 %v1019
    %v1248 = vpop.f32.mrb[0].mxu0
    %v1249 = vadd.f32 0.0, %v1248
    %v1250 = vpop.f32.mrb[0].mxu0
    %v1251 = vpop.f32.mrb[0].mxu0
    %v1252 = vadd.f32 0.0, %v1251
    %v1253 = vpop.f32.mrb[0].mxu0
    %1254 = vmatprep.mubr.bf16.mxu0 0
    %1255 = vmatmul.mubr.bf16.gmra.mrb[0].mxu0 %v1022
    %v1256 = vpop.f32.mrb[0].mxu0
    %v1257 = vadd.f32 0.0, %v1256
    %v1258 = vpop.f32.mrb[0].mxu0
    %v1259 = vpop.f32.mrb[0].mxu0
    %v1260 = vadd.f32 0.0, %v1259
    %v1261 = vpop.f32.mrb[0].mxu0
    %1262 = vmatprep.mubr.bf16.mxu0 0
    %1263 = vmatmul.mubr.bf16.gmra.mrb[0].mxu0 %v1025
    %v1264 = vpop.f32.mrb[0].mxu0
    %v1265 = vadd.f32 0.0, %v1264
    %v1266 = vpop.f32.mrb[0].mxu0
    %v1267 = vpop.f32.mrb[0].mxu0
    %v1268 = vadd.f32 0.0, %v1267
    %v1269 = vpop.f32.mrb[0].mxu0
    %1270 = vmatprep.mubr.bf16.mxu0 0
    %1271 = vmatmul.mubr.bf16.gmra.mrb[0].mxu0 %v1028
    %v1272 = vpop.f32.mrb[0].mxu0
    %v1273 = vadd.f32 0.0, %v1272
    %v1274 = vpop.f32.mrb[0].mxu0
    %v1275 = vpop.f32.mrb[0].mxu0
    %v1276 = vadd.f32 0.0, %v1275
    %v1277 = vpop.f32.mrb[0].mxu0
    %1278 = vmatprep.mubr.bf16.mxu0 0
    %1279 = vmatmul.mubr.bf16.gmra.mrb[0].mxu0 %v1031
    %v1280 = vpop.f32.mrb[0].mxu0
    %v1281 = vadd.f32 0.0, %v1280
    %v1282 = vpop.f32.mrb[0].mxu0
    %v1283 = vpop.f32.mrb[0].mxu0
    %v1284 = vadd.f32 0.0, %v1283
    %v1285 = vpop.f32.mrb[0].mxu0
    %1286 = vmatprep.mubr.bf16.mxu0 0
    %1287 = vmatmul.mubr.bf16.gmra.mrb[0].mxu0 %v1034
    %v1288 = vpop.f32.mrb[0].mxu0
    %v1289 = vadd.f32 0.0, %v1288
    %v1290 = vpop.f32.mrb[0].mxu0
    %v1291 = vpop.f32.mrb[0].mxu0
    %v1292 = vadd.f32 0.0, %v1291
    %v1293 = vpop.f32.mrb[0].mxu0
    %1294 = vmatprep.mubr.bf16.mxu0 0
    %1295 = vmatmul.mubr.bf16.gmra.mrb[0].mxu0 %v1037
    %v1296 = vpop.f32.mrb[0].mxu0
    %v1297 = vadd.f32 0.0, %v1296
    %v1298 = vpop.f32.mrb[0].mxu0
    %v1299 = vpop.f32.mrb[0].mxu0
    %v1300 = vadd.f32 0.0, %v1299
    %v1301 = vpop.f32.mrb[0].mxu0
    %1302 = vmatprep.mubr.bf16.mxu0 0
    %1303 = vmatmul.mubr.bf16.gmra.mrb[0].mxu0 %v1040
    %v1304 = vpop.f32.mrb[0].mxu0
    %v1305 = vadd.f32 0.0, %v1304
    %v1306 = vpop.f32.mrb[0].mxu0
    %v1307 = vpop.f32.mrb[0].mxu0
    %v1308 = vadd.f32 0.0, %v1307
    %v1309 = vpop.f32.mrb[0].mxu0
    %1310 = vmatprep.mubr.bf16.mxu0 0
    %1311 = vmatmul.mubr.bf16.gmra.mrb[0].mxu0 %v1043
    %v1312 = vpop.f32.mrb[0].mxu0
    %v1313 = vadd.f32 0.0, %v1312
    %v1314 = vpop.f32.mrb[0].mxu0
    %v1315 = vpop.f32.mrb[0].mxu0
    %v1316 = vadd.f32 0.0, %v1315
    %v1317 = vpop.f32.mrb[0].mxu0
    %1318 = vmatprep.mubr.bf16.mxu0 0
    %1319 = vmatmul.mubr.bf16.gmra.mrb[0].mxu0 %v1046
    %v1320 = vpop.f32.mrb[0].mxu0
    %v1321 = vadd.f32 0.0, %v1320
    %v1322 = vpop.f32.mrb[0].mxu0
    %v1323 = vpop.f32.mrb[0].mxu0
    %v1324 = vadd.f32 0.0, %v1323
    %v1325 = vpop.f32.mrb[0].mxu0
    %1326 = vmatprep.mubr.bf16.mxu0 0
    %1327 = vmatmul.mubr.bf16.gmra.mrb[0].mxu0 %v1049
    %v1328 = vpop.f32.mrb[0].mxu0
    %v1329 = vadd.f32 0.0, %v1328
    %v1330 = vpop.f32.mrb[0].mxu0
    %v1331 = vpop.f32.mrb[0].mxu0
    %v1332 = vadd.f32 0.0, %v1331
    %v1333 = vpop.f32.mrb[0].mxu0
    %1334 = vmatprep.mubr.bf16.mxu0 0
    %1335 = vmatmul.mubr.bf16.gmra.mrb[0].mxu0 %v1052
    %v1336 = vpop.f32.mrb[0].mxu0
    %v1337 = vadd.f32 0.0, %v1336
    %v1338 = vpop.f32.mrb[0].mxu0
    %v1339 = vpop.f32.mrb[0].mxu0
    %v1340 = vadd.f32 0.0, %v1339
    %v1341 = vpop.f32.mrb[0].mxu0
    %1342 = vdwg.mxu0
    %v1407 = vunpack.c.l.b16 %v50
    %v1408 = vunpack.c.l.b16 %v51
    %v1409 = vunpack.c.l.b16 %v52
    %v1410 = vunpack.c.l.b16 %v53
    %v1411 = vunpack.c.l.b16 %v54
    %v1412 = vunpack.c.l.b16 %v55
    %v1413 = vunpack.c.l.b16 %v56
    %v1414 = vunpack.c.l.b16 %v57
    %v1415 = vunpack.c.l.b16 %v58
    %v1416 = vunpack.c.l.b16 %v59
    %v1417 = vunpack.c.l.b16 %v60
    %v1418 = vunpack.c.l.b16 %v61
    %v1419 = vunpack.c.l.b16 %v62
    %v1420 = vunpack.c.l.b16 %v63
    %v1421 = vunpack.c.l.b16 %v64
    %v1422 = vunpack.c.l.b16 %v65
    %v1423 = vunpack.c.l.b16 %v66
    %v1424 = vunpack.c.l.b16 %v67
    %v1425 = vunpack.c.l.b16 %v68
    %v1426 = vunpack.c.l.b16 %v69
    %v1427 = vunpack.c.l.b16 %v70
    %v1428 = vunpack.c.l.b16 %v71
    %v1429 = vunpack.c.l.b16 %v72
    %v1430 = vunpack.c.l.b16 %v73
    %v1431 = vunpack.c.l.b16 %v74
    %v1432 = vunpack.c.l.b16 %v75
    %v1433 = vunpack.c.l.b16 %v76
    %v1434 = vunpack.c.l.b16 %v77
    %v1435 = vunpack.c.l.b16 %v78
    %v1436 = vunpack.c.l.b16 %v79
    %v1437 = vunpack.c.l.b16 %v80
    %v1438 = vunpack.c.l.b16 %v81
    %v1439 = vunpack.c.l.b16 %v82
    %v1440 = vunpack.c.l.b16 %v83
    %v1441 = vunpack.c.l.b16 %v84
    %v1442 = vunpack.c.l.b16 %v85
    %v1443 = vunpack.c.l.b16 %v86
    %v1444 = vunpack.c.l.b16 %v87
    %v1445 = vunpack.c.l.b16 %v88
    %v1446 = vunpack.c.l.b16 %v89
    %v1447 = vunpack.c.l.b16 %v90
    %v1448 = vunpack.c.l.b16 %v91
    %v1449 = vunpack.c.l.b16 %v92
    %v1450 = vunpack.c.l.b16 %v93
    %v1451 = vunpack.c.l.b16 %v94
    %v1452 = vunpack.c.l.b16 %v95
    %v1453 = vunpack.c.l.b16 %v96
    %v1454 = vunpack.c.l.b16 %v97
    %v1455 = vunpack.c.l.b16 %v98
    %v1456 = vunpack.c.l.b16 %v99
    %v1457 = vunpack.c.l.b16 %v100
    %v1458 = vunpack.c.l.b16 %v101
    %v1459 = vunpack.c.l.b16 %v102
    %v1460 = vunpack.c.l.b16 %v103
    %v1461 = vunpack.c.l.b16 %v104
    %v1462 = vunpack.c.l.b16 %v105
    %v1463 = vunpack.c.l.b16 %v106
    %v1464 = vunpack.c.l.b16 %v107
    %v1465 = vunpack.c.l.b16 %v108
    %v1466 = vunpack.c.l.b16 %v109
    %v1467 = vunpack.c.l.b16 %v110
    %v1468 = vunpack.c.l.b16 %v111
    %v1469 = vunpack.c.l.b16 %v112
    %v1470 = vunpack.c.l.b16 %v113
    %v1471 = vpack.c.b16 %v1408, %v1407
    %v1472 = vpack.c.b16 %v1410, %v1409
    %v1473 = vpack.c.b16 %v1412, %v1411
    %v1474 = vpack.c.b16 %v1414, %v1413
    %v1475 = vpack.c.b16 %v1416, %v1415
    %v1476 = vpack.c.b16 %v1418, %v1417
    %v1477 = vpack.c.b16 %v1420, %v1419
    %v1478 = vpack.c.b16 %v1422, %v1421
    %v1479 = vpack.c.b16 %v1424, %v1423
    %v1480 = vpack.c.b16 %v1426, %v1425
    %v1481 = vpack.c.b16 %v1428, %v1427
    %v1482 = vpack.c.b16 %v1430, %v1429
    %v1483 = vpack.c.b16 %v1432, %v1431
    %v1484 = vpack.c.b16 %v1434, %v1433
    %v1485 = vpack.c.b16 %v1436, %v1435
    %v1486 = vpack.c.b16 %v1438, %v1437
    %v1487 = vpack.c.b16 %v1440, %v1439
    %v1488 = vpack.c.b16 %v1442, %v1441
    %v1489 = vpack.c.b16 %v1444, %v1443
    %v1490 = vpack.c.b16 %v1446, %v1445
    %v1491 = vpack.c.b16 %v1448, %v1447
    %v1492 = vpack.c.b16 %v1450, %v1449
    %v1493 = vpack.c.b16 %v1452, %v1451
    %v1494 = vpack.c.b16 %v1454, %v1453
    %v1495 = vpack.c.b16 %v1456, %v1455
    %v1496 = vpack.c.b16 %v1458, %v1457
    %v1497 = vpack.c.b16 %v1460, %v1459
    %v1498 = vpack.c.b16 %v1462, %v1461
    %v1499 = vpack.c.b16 %v1464, %v1463
    %v1500 = vpack.c.b16 %v1466, %v1465
    %v1501 = vpack.c.b16 %v1468, %v1467
    %v1502 = vpack.c.b16 %v1470, %v1469
    %v1507 = vunpack.c.l.b16 %v889
    %v1508 = vunpack.c.l.b16 %v890
    %v1509 = vunpack.c.l.b16 %v891
    %v1510 = vunpack.c.l.b16 %v892
    %v1511 = vpack.c.b16 %v1508, %v1507
    %v1512 = vpack.c.b16 %v1510, %v1509
    %v1516 = vsel %vm211, %v1471, 0
    %v1519 = vsel %vm211, %v1472, 0
    %v1522 = vsel %vm211, %v1473, 0
    %v1525 = vsel %vm211, %v1474, 0
    %v1528 = vsel %vm211, %v1475, 0
    %v1531 = vsel %vm211, %v1476, 0
    %v1534 = vsel %vm211, %v1477, 0
    %v1537 = vsel %vm211, %v1478, 0
    %v1540 = vsel %vm211, %v1479, 0
    %v1543 = vsel %vm211, %v1480, 0
    %v1546 = vsel %vm211, %v1481, 0
    %v1549 = vsel %vm211, %v1482, 0
    %v1552 = vsel %vm211, %v1483, 0
    %v1555 = vsel %vm211, %v1484, 0
    %v1558 = vsel %vm211, %v1485, 0
    %v1561 = vsel %vm211, %v1486, 0
    %v1564 = vsel %vm211, %v1487, 0
    %v1567 = vsel %vm211, %v1488, 0
    %v1570 = vsel %vm211, %v1489, 0
    %v1573 = vsel %vm211, %v1490, 0
    %v1576 = vsel %vm211, %v1491, 0
    %v1579 = vsel %vm211, %v1492, 0
    %v1582 = vsel %vm211, %v1493, 0
    %v1585 = vsel %vm211, %v1494, 0
    %v1588 = vsel %vm211, %v1495, 0
    %v1591 = vsel %vm211, %v1496, 0
    %v1594 = vsel %vm211, %v1497, 0
    %v1597 = vsel %vm211, %v1498, 0
    %v1600 = vsel %vm211, %v1499, 0
    %v1603 = vsel %vm211, %v1500, 0
    %v1606 = vsel %vm211, %v1501, 0
    %v1609 = vsel %vm211, %v1502, 0
    %1611 = vmatprep.subr.bf16.mxu0 0
    %1612 = vmatpush1.bf16.msra.mxu0 %v1511
    %1613 = vmatprep.subr.bf16.mxu0 0
    %1614 = vmatpush1.bf16.msra.mxu0 %v1512
    %1615 = vmatprep.subr.bf16.mxu0 0
    %1616 = vmatpush1.bf16.msra.mxu0 0
    %1617 = vmatprep.subr.bf16.mxu0 0
    %1618 = vmatpush1.bf16.msra.mxu0 0
    %1619 = vmatprep.subr.bf16.mxu0 0
    %1620 = vmatpush1.bf16.msra.mxu0 0
    %1621 = vmatprep.subr.bf16.mxu0 0
    %1622 = vmatpush1.bf16.msra.mxu0 0
    %1623 = vmatprep.subr.bf16.mxu0 0
    %1624 = vmatpush1.bf16.msra.mxu0 0
    %1625 = vmatprep.subr.bf16.mxu0 0
    %1626 = vmatpush1.bf16.msra.mxu0 0
    %1627 = vmatprep.subr.bf16.mxu0 0
    %1628 = vmatpush1.bf16.msra.mxu0 0
    %1629 = vmatprep.subr.bf16.mxu0 0
    %1630 = vmatpush1.bf16.msra.mxu0 0
    %1631 = vmatprep.subr.bf16.mxu0 0
    %1632 = vmatpush1.bf16.msra.mxu0 0
    %1633 = vmatprep.subr.bf16.mxu0 0
    %1634 = vmatpush1.bf16.msra.mxu0 0
    %1635 = vmatprep.subr.bf16.mxu0 0
    %1636 = vmatpush1.bf16.msra.mxu0 0
    %1637 = vmatprep.subr.bf16.mxu0 0
    %1638 = vmatpush1.bf16.msra.mxu0 0
    %1639 = vmatprep.subr.bf16.mxu0 0
    %1640 = vmatpush1.bf16.msra.mxu0 0
    %1641 = vmatprep.subr.bf16.mxu0 0
    %1642 = vmatpush1.bf16.msra.mxu0 0
    %1643 = vmatprep.mubr.bf16.mxu0 0
    %1644 = vmatmul.mubr.bf16.gmra.mrb[0].mxu0 %v1516
    %v1645 = vpop.f32.mrb[0].mxu0
    %v1646 = vadd.f32 %v1089, %v1645
    %v1647 = vpop.f32.mrb[0].mxu0
    %v1648 = vpop.f32.mrb[0].mxu0
    %v1649 = vadd.f32 %v1092, %v1648
    %v1650 = vpop.f32.mrb[0].mxu0
    %1651 = vmatprep.mubr.bf16.mxu0 0
    %1652 = vmatmul.mubr.bf16.gmra.mrb[0].mxu0 %v1519
    %v1653 = vpop.f32.mrb[0].mxu0
    %v1654 = vadd.f32 %v1097, %v1653
    %v1655 = vpop.f32.mrb[0].mxu0
    %v1656 = vpop.f32.mrb[0].mxu0
    %v1657 = vadd.f32 %v1100, %v1656
    %v1658 = vpop.f32.mrb[0].mxu0
    %1659 = vmatprep.mubr.bf16.mxu0 0
    %1660 = vmatmul.mubr.bf16.gmra.mrb[0].mxu0 %v1522
    %v1661 = vpop.f32.mrb[0].mxu0
    %v1662 = vadd.f32 %v1105, %v1661
    %v1663 = vpop.f32.mrb[0].mxu0
    %v1664 = vpop.f32.mrb[0].mxu0
    %v1665 = vadd.f32 %v1108, %v1664
    %v1666 = vpop.f32.mrb[0].mxu0
    %1667 = vmatprep.mubr.bf16.mxu0 0
    %1668 = vmatmul.mubr.bf16.gmra.mrb[0].mxu0 %v1525
    %v1669 = vpop.f32.mrb[0].mxu0
    %v1670 = vadd.f32 %v1113, %v1669
    %v1671 = vpop.f32.mrb[0].mxu0
    %v1672 = vpop.f32.mrb[0].mxu0
    %v1673 = vadd.f32 %v1116, %v1672
    %v1674 = vpop.f32.mrb[0].mxu0
    %1675 = vmatprep.mubr.bf16.mxu0 0
    %1676 = vmatmul.mubr.bf16.gmra.mrb[0].mxu0 %v1528
    %v1677 = vpop.f32.mrb[0].mxu0
    %v1678 = vadd.f32 %v1121, %v1677
    %v1679 = vpop.f32.mrb[0].mxu0
    %v1680 = vpop.f32.mrb[0].mxu0
    %v1681 = vadd.f32 %v1124, %v1680
    %v1682 = vpop.f32.mrb[0].mxu0
    %1683 = vmatprep.mubr.bf16.mxu0 0
    %1684 = vmatmul.mubr.bf16.gmra.mrb[0].mxu0 %v1531
    %v1685 = vpop.f32.mrb[0].mxu0
    %v1686 = vadd.f32 %v1129, %v1685
    %v1687 = vpop.f32.mrb[0].mxu0
    %v1688 = vpop.f32.mrb[0].mxu0
    %v1689 = vadd.f32 %v1132, %v1688
    %v1690 = vpop.f32.mrb[0].mxu0
    %1691 = vmatprep.mubr.bf16.mxu0 0
    %1692 = vmatmul.mubr.bf16.gmra.mrb[0].mxu0 %v1534
    %v1693 = vpop.f32.mrb[0].mxu0
    %v1694 = vadd.f32 %v1137, %v1693
    %v1695 = vpop.f32.mrb[0].mxu0
    %v1696 = vpop.f32.mrb[0].mxu0
    %v1697 = vadd.f32 %v1140, %v1696
    %v1698 = vpop.f32.mrb[0].mxu0
    %1699 = vmatprep.mubr.bf16.mxu0 0
    %1700 = vmatmul.mubr.bf16.gmra.mrb[0].mxu0 %v1537
    %v1701 = vpop.f32.mrb[0].mxu0
    %v1702 = vadd.f32 %v1145, %v1701
    %v1703 = vpop.f32.mrb[0].mxu0
    %v1704 = vpop.f32.mrb[0].mxu0
    %v1705 = vadd.f32 %v1148, %v1704
    %v1706 = vpop.f32.mrb[0].mxu0
    %1707 = vmatprep.mubr.bf16.mxu0 0
    %1708 = vmatmul.mubr.bf16.gmra.mrb[0].mxu0 %v1540
    %v1709 = vpop.f32.mrb[0].mxu0
    %v1710 = vadd.f32 %v1153, %v1709
    %v1711 = vpop.f32.mrb[0].mxu0
    %v1712 = vpop.f32.mrb[0].mxu0
    %v1713 = vadd.f32 %v1156, %v1712
    %v1714 = vpop.f32.mrb[0].mxu0
    %1715 = vmatprep.mubr.bf16.mxu0 0
    %1716 = vmatmul.mubr.bf16.gmra.mrb[0].mxu0 %v1543
    %v1717 = vpop.f32.mrb[0].mxu0
    %v1718 = vadd.f32 %v1161, %v1717
    %v1719 = vpop.f32.mrb[0].mxu0
    %v1720 = vpop.f32.mrb[0].mxu0
    %v1721 = vadd.f32 %v1164, %v1720
    %v1722 = vpop.f32.mrb[0].mxu0
    %1723 = vmatprep.mubr.bf16.mxu0 0
    %1724 = vmatmul.mubr.bf16.gmra.mrb[0].mxu0 %v1546
    %v1725 = vpop.f32.mrb[0].mxu0
    %v1726 = vadd.f32 %v1169, %v1725
    %v1727 = vpop.f32.mrb[0].mxu0
    %v1728 = vpop.f32.mrb[0].mxu0
    %v1729 = vadd.f32 %v1172, %v1728
    %v1730 = vpop.f32.mrb[0].mxu0
    %1731 = vmatprep.mubr.bf16.mxu0 0
    %1732 = vmatmul.mubr.bf16.gmra.mrb[0].mxu0 %v1549
    %v1733 = vpop.f32.mrb[0].mxu0
    %v1734 = vadd.f32 %v1177, %v1733
    %v1735 = vpop.f32.mrb[0].mxu0
    %v1736 = vpop.f32.mrb[0].mxu0
    %v1737 = vadd.f32 %v1180, %v1736
    %v1738 = vpop.f32.mrb[0].mxu0
    %1739 = vmatprep.mubr.bf16.mxu0 0
    %1740 = vmatmul.mubr.bf16.gmra.mrb[0].mxu0 %v1552
    %v1741 = vpop.f32.mrb[0].mxu0
    %v1742 = vadd.f32 %v1185, %v1741
    %v1743 = vpop.f32.mrb[0].mxu0
    %v1744 = vpop.f32.mrb[0].mxu0
    %v1745 = vadd.f32 %v1188, %v1744
    %v1746 = vpop.f32.mrb[0].mxu0
    %1747 = vmatprep.mubr.bf16.mxu0 0
    %1748 = vmatmul.mubr.bf16.gmra.mrb[0].mxu0 %v1555
    %v1749 = vpop.f32.mrb[0].mxu0
    %v1750 = vadd.f32 %v1193, %v1749
    %v1751 = vpop.f32.mrb[0].mxu0
    %v1752 = vpop.f32.mrb[0].mxu0
    %v1753 = vadd.f32 %v1196, %v1752
    %v1754 = vpop.f32.mrb[0].mxu0
    %1755 = vmatprep.mubr.bf16.mxu0 0
    %1756 = vmatmul.mubr.bf16.gmra.mrb[0].mxu0 %v1558
    %v1757 = vpop.f32.mrb[0].mxu0
    %v1758 = vadd.f32 %v1201, %v1757
    %v1759 = vpop.f32.mrb[0].mxu0
    %v1760 = vpop.f32.mrb[0].mxu0
    %v1761 = vadd.f32 %v1204, %v1760
    %v1762 = vpop.f32.mrb[0].mxu0
    %1763 = vmatprep.mubr.bf16.mxu0 0
    %1764 = vmatmul.mubr.bf16.gmra.mrb[0].mxu0 %v1561
    %v1765 = vpop.f32.mrb[0].mxu0
    %v1766 = vadd.f32 %v1209, %v1765
    %v1767 = vpop.f32.mrb[0].mxu0
    %v1768 = vpop.f32.mrb[0].mxu0
    %v1769 = vadd.f32 %v1212, %v1768
    %v1770 = vpop.f32.mrb[0].mxu0
    %1771 = vmatprep.mubr.bf16.mxu0 0
    %1772 = vmatmul.mubr.bf16.gmra.mrb[0].mxu0 %v1564
    %v1773 = vpop.f32.mrb[0].mxu0
    %v1774 = vadd.f32 %v1217, %v1773
    %v1775 = vpop.f32.mrb[0].mxu0
    %v1776 = vpop.f32.mrb[0].mxu0
    %v1777 = vadd.f32 %v1220, %v1776
    %v1778 = vpop.f32.mrb[0].mxu0
    %1779 = vmatprep.mubr.bf16.mxu0 0
    %1780 = vmatmul.mubr.bf16.gmra.mrb[0].mxu0 %v1567
    %v1781 = vpop.f32.mrb[0].mxu0
    %v1782 = vadd.f32 %v1225, %v1781
    %v1783 = vpop.f32.mrb[0].mxu0
    %v1784 = vpop.f32.mrb[0].mxu0
    %v1785 = vadd.f32 %v1228, %v1784
    %v1786 = vpop.f32.mrb[0].mxu0
    %1787 = vmatprep.mubr.bf16.mxu0 0
    %1788 = vmatmul.mubr.bf16.gmra.mrb[0].mxu0 %v1570
    %v1789 = vpop.f32.mrb[0].mxu0
    %v1790 = vadd.f32 %v1233, %v1789
    %v1791 = vpop.f32.mrb[0].mxu0
    %v1792 = vpop.f32.mrb[0].mxu0
    %v1793 = vadd.f32 %v1236, %v1792
    %v1794 = vpop.f32.mrb[0].mxu0
    %1795 = vmatprep.mubr.bf16.mxu0 0
    %1796 = vmatmul.mubr.bf16.gmra.mrb[0].mxu0 %v1573
    %v1797 = vpop.f32.mrb[0].mxu0
    %v1798 = vadd.f32 %v1241, %v1797
    %v1799 = vpop.f32.mrb[0].mxu0
    %v1800 = vpop.f32.mrb[0].mxu0
    %v1801 = vadd.f32 %v1244, %v1800
    %v1802 = vpop.f32.mrb[0].mxu0
    %1803 = vmatprep.mubr.bf16.mxu0 0
    %1804 = vmatmul.mubr.bf16.gmra.mrb[0].mxu0 %v1576
    %v1805 = vpop.f32.mrb[0].mxu0
    %v1806 = vadd.f32 %v1249, %v1805
    %v1807 = vpop.f32.mrb[0].mxu0
    %v1808 = vpop.f32.mrb[0].mxu0
    %v1809 = vadd.f32 %v1252, %v1808
    %v1810 = vpop.f32.mrb[0].mxu0
    %1811 = vmatprep.mubr.bf16.mxu0 0
    %1812 = vmatmul.mubr.bf16.gmra.mrb[0].mxu0 %v1579
    %v1813 = vpop.f32.mrb[0].mxu0
    %v1814 = vadd.f32 %v1257, %v1813
    %v1815 = vpop.f32.mrb[0].mxu0
    %v1816 = vpop.f32.mrb[0].mxu0
    %v1817 = vadd.f32 %v1260, %v1816
    %v1818 = vpop.f32.mrb[0].mxu0
    %1819 = vmatprep.mubr.bf16.mxu0 0
    %1820 = vmatmul.mubr.bf16.gmra.mrb[0].mxu0 %v1582
    %v1821 = vpop.f32.mrb[0].mxu0
    %v1822 = vadd.f32 %v1265, %v1821
    %v1823 = vpop.f32.mrb[0].mxu0
    %v1824 = vpop.f32.mrb[0].mxu0
    %v1825 = vadd.f32 %v1268, %v1824
    %v1826 = vpop.f32.mrb[0].mxu0
    %1827 = vmatprep.mubr.bf16.mxu0 0
    %1828 = vmatmul.mubr.bf16.gmra.mrb[0].mxu0 %v1585
    %v1829 = vpop.f32.mrb[0].mxu0
    %v1830 = vadd.f32 %v1273, %v1829
    %v1831 = vpop.f32.mrb[0].mxu0
    %v1832 = vpop.f32.mrb[0].mxu0
    %v1833 = vadd.f32 %v1276, %v1832
    %v1834 = vpop.f32.mrb[0].mxu0
    %1835 = vmatprep.mubr.bf16.mxu0 0
    %1836 = vmatmul.mubr.bf16.gmra.mrb[0].mxu0 %v1588
    %v1837 = vpop.f32.mrb[0].mxu0
    %v1838 = vadd.f32 %v1281, %v1837
    %v1839 = vpop.f32.mrb[0].mxu0
    %v1840 = vpop.f32.mrb[0].mxu0
    %v1841 = vadd.f32 %v1284, %v1840
    %v1842 = vpop.f32.mrb[0].mxu0
    %1843 = vmatprep.mubr.bf16.mxu0 0
    %1844 = vmatmul.mubr.bf16.gmra.mrb[0].mxu0 %v1591
    %v1845 = vpop.f32.mrb[0].mxu0
    %v1846 = vadd.f32 %v1289, %v1845
    %v1847 = vpop.f32.mrb[0].mxu0
    %v1848 = vpop.f32.mrb[0].mxu0
    %v1849 = vadd.f32 %v1292, %v1848
    %v1850 = vpop.f32.mrb[0].mxu0
    %1851 = vmatprep.mubr.bf16.mxu0 0
    %1852 = vmatmul.mubr.bf16.gmra.mrb[0].mxu0 %v1594
    %v1853 = vpop.f32.mrb[0].mxu0
    %v1854 = vadd.f32 %v1297, %v1853
    %v1855 = vpop.f32.mrb[0].mxu0
    %v1856 = vpop.f32.mrb[0].mxu0
    %v1857 = vadd.f32 %v1300, %v1856
    %v1858 = vpop.f32.mrb[0].mxu0
    %1859 = vmatprep.mubr.bf16.mxu0 0
    %1860 = vmatmul.mubr.bf16.gmra.mrb[0].mxu0 %v1597
    %v1861 = vpop.f32.mrb[0].mxu0
    %v1862 = vadd.f32 %v1305, %v1861
    %v1863 = vpop.f32.mrb[0].mxu0
    %v1864 = vpop.f32.mrb[0].mxu0
    %v1865 = vadd.f32 %v1308, %v1864
    %v1866 = vpop.f32.mrb[0].mxu0
    %1867 = vmatprep.mubr.bf16.mxu0 0
    %1868 = vmatmul.mubr.bf16.gmra.mrb[0].mxu0 %v1600
    %v1869 = vpop.f32.mrb[0].mxu0
    %v1870 = vadd.f32 %v1313, %v1869
    %v1871 = vpop.f32.mrb[0].mxu0
    %v1872 = vpop.f32.mrb[0].mxu0
    %v1873 = vadd.f32 %v1316, %v1872
    %v1874 = vpop.f32.mrb[0].mxu0
    %1875 = vmatprep.mubr.bf16.mxu0 0
    %1876 = vmatmul.mubr.bf16.gmra.mrb[0].mxu0 %v1603
    %v1877 = vpop.f32.mrb[0].mxu0
    %v1878 = vadd.f32 %v1321, %v1877
    %v1879 = vpop.f32.mrb[0].mxu0
    %v1880 = vpop.f32.mrb[0].mxu0
    %v1881 = vadd.f32 %v1324, %v1880
    %v1882 = vpop.f32.mrb[0].mxu0
    %1883 = vmatprep.mubr.bf16.mxu0 0
    %1884 = vmatmul.mubr.bf16.gmra.mrb[0].mxu0 %v1606
    %v1885 = vpop.f32.mrb[0].mxu0
    %v1886 = vadd.f32 %v1329, %v1885
    %v1887 = vpop.f32.mrb[0].mxu0
    %v1888 = vpop.f32.mrb[0].mxu0
    %v1889 = vadd.f32 %v1332, %v1888
    %v1890 = vpop.f32.mrb[0].mxu0
    %1891 = vmatprep.mubr.bf16.mxu0 0
    %1892 = vmatmul.mubr.bf16.gmra.mrb[0].mxu0 %v1609
    %v1893 = vpop.f32.mrb[0].mxu0
    %v1894 = vadd.f32 %v1337, %v1893
    %v1895 = vpop.f32.mrb[0].mxu0
    %v1896 = vpop.f32.mrb[0].mxu0
    %v1897 = vadd.f32 %v1340, %v1896
    %v1898 = vpop.f32.mrb[0].mxu0
    %1899 = vdwg.mxu0
    %v1900 = vld [vmem:[%s9] sm:$0x1]
    %v1902 = vlaneseq
    %v1903 = vshrl.u32 %v1902, 7
    %v1904 = vsub.s32 0, %v1903
    %v1905 = vrot.slane %v1900, %v1904
    %v1907 = vadd.f32 %v1646, %v1905
    %v1908 = vadd.f32 %v1649, %v1905
    %v1909 = vadd.f32 %v1654, %v1905
    %v1910 = vadd.f32 %v1657, %v1905
    %v1911 = vadd.f32 %v1662, %v1905
    %v1912 = vadd.f32 %v1665, %v1905
    %v1913 = vadd.f32 %v1670, %v1905
    %v1914 = vadd.f32 %v1673, %v1905
    %v1915 = vadd.f32 %v1678, %v1905
    %v1916 = vadd.f32 %v1681, %v1905
    %v1917 = vadd.f32 %v1686, %v1905
    %v1918 = vadd.f32 %v1689, %v1905
    %v1919 = vadd.f32 %v1694, %v1905
    %v1920 = vadd.f32 %v1697, %v1905
    %v1921 = vadd.f32 %v1702, %v1905
    %v1922 = vadd.f32 %v1705, %v1905
    %v1923 = vadd.f32 %v1710, %v1905
    %v1924 = vadd.f32 %v1713, %v1905
    %v1925 = vadd.f32 %v1718, %v1905
    %v1926 = vadd.f32 %v1721, %v1905
    %v1927 = vadd.f32 %v1726, %v1905
    %v1928 = vadd.f32 %v1729, %v1905
    %v1929 = vadd.f32 %v1734, %v1905
    %v1930 = vadd.f32 %v1737, %v1905
    %v1931 = vadd.f32 %v1742, %v1905
    %v1932 = vadd.f32 %v1745, %v1905
    %v1933 = vadd.f32 %v1750, %v1905
    %v1934 = vadd.f32 %v1753, %v1905
    %v1935 = vadd.f32 %v1758, %v1905
    %v1936 = vadd.f32 %v1761, %v1905
    %v1937 = vadd.f32 %v1766, %v1905
    %v1938 = vadd.f32 %v1769, %v1905
    %v1939 = vadd.f32 %v1774, %v1905
    %v1940 = vadd.f32 %v1777, %v1905
    %v1941 = vadd.f32 %v1782, %v1905
    %v1942 = vadd.f32 %v1785, %v1905
    %v1943 = vadd.f32 %v1790, %v1905
    %v1944 = vadd.f32 %v1793, %v1905
    %v1945 = vadd.f32 %v1798, %v1905
    %v1946 = vadd.f32 %v1801, %v1905
    %v1947 = vadd.f32 %v1806, %v1905
    %v1948 = vadd.f32 %v1809, %v1905
    %v1949 = vadd.f32 %v1814, %v1905
    %v1950 = vadd.f32 %v1817, %v1905
    %v1951 = vadd.f32 %v1822, %v1905
    %v1952 = vadd.f32 %v1825, %v1905
    %v1953 = vadd.f32 %v1830, %v1905
    %v1954 = vadd.f32 %v1833, %v1905
    %v1955 = vadd.f32 %v1838, %v1905
    %v1956 = vadd.f32 %v1841, %v1905
    %v1957 = vadd.f32 %v1846, %v1905
    %v1958 = vadd.f32 %v1849, %v1905
    %v1959 = vadd.f32 %v1854, %v1905
    %v1960 = vadd.f32 %v1857, %v1905
    %v1961 = vadd.f32 %v1862, %v1905
    %v1962 = vadd.f32 %v1865, %v1905
    %v1963 = vadd.f32 %v1870, %v1905
    %v1964 = vadd.f32 %v1873, %v1905
    %v1965 = vadd.f32 %v1878, %v1905
    %v1966 = vadd.f32 %v1881, %v1905
    %v1967 = vadd.f32 %v1886, %v1905
    %v1968 = vadd.f32 %v1889, %v1905
    %v1969 = vadd.f32 %v1894, %v1905
    %v1970 = vadd.f32 %v1897, %v1905
    %v1975 = vcombine.high %v253, %v253
    %v1977 = vunpack.c.l.s4 1966171168
    %v1978 = vunpack.c.0.s8 %v1977
    %v1979 = vlaneseq
    %v1980 = vshrl.u32 %v1979, 7
    %v1981 = vsub.s32 %v1978, %v1980
    %v1982 = vrot.slane %v253, %v1981
    %v1984 = vunpack.c.l.s4 1966171168
    %v1985 = vunpack.c.0.s8 %v1984
    %v1986 = vlaneseq
    %v1987 = vshrl.u32 %v1986, 7
    %v1988 = vsub.s32 %v1985, %v1987
    %v1989 = vrot.slane %v1975, %v1988
    %v1990 = vcombine.high %v1982, %v1982
    %v1991 = vcombine.high %v1989, %v1989
    %v1993 = vunpack.c.l.s4 1966171168
    %v1994 = vunpack.c.0.s8 %v1993
    %v1995 = vlaneseq
    %v1996 = vshrl.u32 %v1995, 7
    %v1997 = vsub.s32 %v1994, %v1996
    %v1998 = vrot.slane %v1982, %v1997
    %v2000 = vunpack.c.l.s4 1966171168
    %v2001 = vunpack.c.0.s8 %v2000
    %v2002 = vlaneseq
    %v2003 = vshrl.u32 %v2002, 7
    %v2004 = vsub.s32 %v2001, %v2003
    %v2005 = vrot.slane %v1989, %v2004
    %v2007 = vunpack.c.l.s4 1966171168
    %v2008 = vunpack.c.0.s8 %v2007
    %v2009 = vlaneseq
    %v2010 = vshrl.u32 %v2009, 7
    %v2011 = vsub.s32 %v2008, %v2010
    %v2012 = vrot.slane %v1990, %v2011
    %v2014 = vunpack.c.l.s4 1966171168
    %v2015 = vunpack.c.0.s8 %v2014
    %v2016 = vlaneseq
    %v2017 = vshrl.u32 %v2016, 7
    %v2018 = vsub.s32 %v2015, %v2017
    %v2019 = vrot.slane %v1991, %v2018
    %v2020 = vcombine.high %v1998, %v1998
    %v2021 = vcombine.high %v2005, %v2005
    %v2022 = vcombine.high %v2012, %v2012
    %v2023 = vcombine.high %v2019, %v2019
    %v2024 = vcombine.high %v256, %v256
    %v2026 = vunpack.c.l.s4 1966171168
    %v2027 = vunpack.c.0.s8 %v2026
    %v2028 = vlaneseq
    %v2029 = vshrl.u32 %v2028, 7
    %v2030 = vsub.s32 %v2027, %v2029
    %v2031 = vrot.slane %v256, %v2030
    %v2033 = vunpack.c.l.s4 1966171168
    %v2034 = vunpack.c.0.s8 %v2033
    %v2035 = vlaneseq
    %v2036 = vshrl.u32 %v2035, 7
    %v2037 = vsub.s32 %v2034, %v2036
    %v2038 = vrot.slane %v2024, %v2037
    %v2039 = vcombine.high %v2031, %v2031
    %v2040 = vcombine.high %v2038, %v2038
    %v2042 = vunpack.c.l.s4 1966171168
    %v2043 = vunpack.c.0.s8 %v2042
    %v2044 = vlaneseq
    %v2045 = vshrl.u32 %v2044, 7
    %v2046 = vsub.s32 %v2043, %v2045
    %v2047 = vrot.slane %v2031, %v2046
    %v2049 = vunpack.c.l.s4 1966171168
    %v2050 = vunpack.c.0.s8 %v2049
    %v2051 = vlaneseq
    %v2052 = vshrl.u32 %v2051, 7
    %v2053 = vsub.s32 %v2050, %v2052
    %v2054 = vrot.slane %v2038, %v2053
    %v2056 = vunpack.c.l.s4 1966171168
    %v2057 = vunpack.c.0.s8 %v2056
    %v2058 = vlaneseq
    %v2059 = vshrl.u32 %v2058, 7
    %v2060 = vsub.s32 %v2057, %v2059
    %v2061 = vrot.slane %v2039, %v2060
    %v2063 = vunpack.c.l.s4 1966171168
    %v2064 = vunpack.c.0.s8 %v2063
    %v2065 = vlaneseq
    %v2066 = vshrl.u32 %v2065, 7
    %v2067 = vsub.s32 %v2064, %v2066
    %v2068 = vrot.slane %v2040, %v2067
    %v2069 = vcombine.high %v2047, %v2047
    %v2070 = vcombine.high %v2054, %v2054
    %v2071 = vcombine.high %v2061, %v2061
    %v2072 = vcombine.high %v2068, %v2068
    %v2073 = vcombine.high %v261, %v261
    %v2075 = vunpack.c.l.s4 1966171168
    %v2076 = vunpack.c.0.s8 %v2075
    %v2077 = vlaneseq
    %v2078 = vshrl.u32 %v2077, 7
    %v2079 = vsub.s32 %v2076, %v2078
    %v2080 = vrot.slane %v261, %v2079
    %v2082 = vunpack.c.l.s4 1966171168
    %v2083 = vunpack.c.0.s8 %v2082
    %v2084 = vlaneseq
    %v2085 = vshrl.u32 %v2084, 7
    %v2086 = vsub.s32 %v2083, %v2085
    %v2087 = vrot.slane %v2073, %v2086
    %v2088 = vcombine.high %v2080, %v2080
    %v2089 = vcombine.high %v2087, %v2087
    %v2091 = vunpack.c.l.s4 1966171168
    %v2092 = vunpack.c.0.s8 %v2091
    %v2093 = vlaneseq
    %v2094 = vshrl.u32 %v2093, 7
    %v2095 = vsub.s32 %v2092, %v2094
    %v2096 = vrot.slane %v2080, %v2095
    %v2098 = vunpack.c.l.s4 1966171168
    %v2099 = vunpack.c.0.s8 %v2098
    %v2100 = vlaneseq
    %v2101 = vshrl.u32 %v2100, 7
    %v2102 = vsub.s32 %v2099, %v2101
    %v2103 = vrot.slane %v2087, %v2102
    %v2105 = vunpack.c.l.s4 1966171168
    %v2106 = vunpack.c.0.s8 %v2105
    %v2107 = vlaneseq
    %v2108 = vshrl.u32 %v2107, 7
    %v2109 = vsub.s32 %v2106, %v2108
    %v2110 = vrot.slane %v2088, %v2109
    %v2112 = vunpack.c.l.s4 1966171168
    %v2113 = vunpack.c.0.s8 %v2112
    %v2114 = vlaneseq
    %v2115 = vshrl.u32 %v2114, 7
    %v2116 = vsub.s32 %v2113, %v2115
    %v2117 = vrot.slane %v2089, %v2116
    %v2118 = vcombine.high %v2096, %v2096
    %v2119 = vcombine.high %v2103, %v2103
    %v2120 = vcombine.high %v2110, %v2110
    %v2121 = vcombine.high %v2117, %v2117
    %v2122 = vcombine.high %v264, %v264
    %v2124 = vunpack.c.l.s4 1966171168
    %v2125 = vunpack.c.0.s8 %v2124
    %v2126 = vlaneseq
    %v2127 = vshrl.u32 %v2126, 7
    %v2128 = vsub.s32 %v2125, %v2127
    %v2129 = vrot.slane %v264, %v2128
    %v2131 = vunpack.c.l.s4 1966171168
    %v2132 = vunpack.c.0.s8 %v2131
    %v2133 = vlaneseq
    %v2134 = vshrl.u32 %v2133, 7
    %v2135 = vsub.s32 %v2132, %v2134
    %v2136 = vrot.slane %v2122, %v2135
    %v2137 = vcombine.high %v2129, %v2129
    %v2138 = vcombine.high %v2136, %v2136
    %v2140 = vunpack.c.l.s4 1966171168
    %v2141 = vunpack.c.0.s8 %v2140
    %v2142 = vlaneseq
    %v2143 = vshrl.u32 %v2142, 7
    %v2144 = vsub.s32 %v2141, %v2143
    %v2145 = vrot.slane %v2129, %v2144
    %v2147 = vunpack.c.l.s4 1966171168
    %v2148 = vunpack.c.0.s8 %v2147
    %v2149 = vlaneseq
    %v2150 = vshrl.u32 %v2149, 7
    %v2151 = vsub.s32 %v2148, %v2150
    %v2152 = vrot.slane %v2136, %v2151
    %v2154 = vunpack.c.l.s4 1966171168
    %v2155 = vunpack.c.0.s8 %v2154
    %v2156 = vlaneseq
    %v2157 = vshrl.u32 %v2156, 7
    %v2158 = vsub.s32 %v2155, %v2157
    %v2159 = vrot.slane %v2137, %v2158
    %v2161 = vunpack.c.l.s4 1966171168
    %v2162 = vunpack.c.0.s8 %v2161
    %v2163 = vlaneseq
    %v2164 = vshrl.u32 %v2163, 7
    %v2165 = vsub.s32 %v2162, %v2164
    %v2166 = vrot.slane %v2138, %v2165
    %v2167 = vcombine.high %v2145, %v2145
    %v2168 = vcombine.high %v2152, %v2152
    %v2169 = vcombine.high %v2159, %v2159
    %v2170 = vcombine.high %v2166, %v2166
    %v2171 = vlaneseq
    %v2172 = vshrl.u32 %v2171, 7
    %v2173 = vsub.s32 0, %v2172
    %v2174 = vrot.slane %v1998, %v2173
    %v2175 = vlaneseq
    %v2176 = vshrl.u32 %v2175, 7
    %v2177 = vsub.s32 0, %v2176
    %v2178 = vrot.slane %v2012, %v2177
    %v2179 = vlaneseq
    %v2180 = vshrl.u32 %v2179, 7
    %v2181 = vsub.s32 0, %v2180
    %v2182 = vrot.slane %v2020, %v2181
    %v2183 = vlaneseq
    %v2184 = vshrl.u32 %v2183, 7
    %v2185 = vsub.s32 0, %v2184
    %v2186 = vrot.slane %v2022, %v2185
    %v2187 = vlaneseq
    %v2188 = vshrl.u32 %v2187, 7
    %v2189 = vsub.s32 0, %v2188
    %v2190 = vrot.slane %v2005, %v2189
    %v2191 = vlaneseq
    %v2192 = vshrl.u32 %v2191, 7
    %v2193 = vsub.s32 0, %v2192
    %v2194 = vrot.slane %v2019, %v2193
    %v2195 = vlaneseq
    %v2196 = vshrl.u32 %v2195, 7
    %v2197 = vsub.s32 0, %v2196
    %v2198 = vrot.slane %v2021, %v2197
    %v2199 = vlaneseq
    %v2200 = vshrl.u32 %v2199, 7
    %v2201 = vsub.s32 0, %v2200
    %v2202 = vrot.slane %v2023, %v2201
    %v2203 = vlaneseq
    %v2204 = vshrl.u32 %v2203, 7
    %v2205 = vsub.s32 0, %v2204
    %v2206 = vrot.slane %v2047, %v2205
    %v2207 = vlaneseq
    %v2208 = vshrl.u32 %v2207, 7
    %v2209 = vsub.s32 0, %v2208
    %v2210 = vrot.slane %v2061, %v2209
    %v2211 = vlaneseq
    %v2212 = vshrl.u32 %v2211, 7
    %v2213 = vsub.s32 0, %v2212
    %v2214 = vrot.slane %v2069, %v2213
    %v2215 = vlaneseq
    %v2216 = vshrl.u32 %v2215, 7
    %v2217 = vsub.s32 0, %v2216
    %v2218 = vrot.slane %v2071, %v2217
    %v2219 = vlaneseq
    %v2220 = vshrl.u32 %v2219, 7
    %v2221 = vsub.s32 0, %v2220
    %v2222 = vrot.slane %v2054, %v2221
    %v2223 = vlaneseq
    %v2224 = vshrl.u32 %v2223, 7
    %v2225 = vsub.s32 0, %v2224
    %v2226 = vrot.slane %v2068, %v2225
    %v2227 = vlaneseq
    %v2228 = vshrl.u32 %v2227, 7
    %v2229 = vsub.s32 0, %v2228
    %v2230 = vrot.slane %v2070, %v2229
    %v2231 = vlaneseq
    %v2232 = vshrl.u32 %v2231, 7
    %v2233 = vsub.s32 0, %v2232
    %v2234 = vrot.slane %v2072, %v2233
    %v2235 = vlaneseq
    %v2236 = vshrl.u32 %v2235, 7
    %v2237 = vsub.s32 0, %v2236
    %v2238 = vrot.slane %v2096, %v2237
    %v2239 = vlaneseq
    %v2240 = vshrl.u32 %v2239, 7
    %v2241 = vsub.s32 0, %v2240
    %v2242 = vrot.slane %v2110, %v2241
    %v2243 = vlaneseq
    %v2244 = vshrl.u32 %v2243, 7
    %v2245 = vsub.s32 0, %v2244
    %v2246 = vrot.slane %v2118, %v2245
    %v2247 = vlaneseq
    %v2248 = vshrl.u32 %v2247, 7
    %v2249 = vsub.s32 0, %v2248
    %v2250 = vrot.slane %v2120, %v2249
    %v2251 = vlaneseq
    %v2252 = vshrl.u32 %v2251, 7
    %v2253 = vsub.s32 0, %v2252
    %v2254 = vrot.slane %v2103, %v2253
    %v2255 = vlaneseq
    %v2256 = vshrl.u32 %v2255, 7
    %v2257 = vsub.s32 0, %v2256
    %v2258 = vrot.slane %v2117, %v2257
    %v2259 = vlaneseq
    %v2260 = vshrl.u32 %v2259, 7
    %v2261 = vsub.s32 0, %v2260
    %v2262 = vrot.slane %v2119, %v2261
    %v2263 = vlaneseq
    %v2264 = vshrl.u32 %v2263, 7
    %v2265 = vsub.s32 0, %v2264
    %v2266 = vrot.slane %v2121, %v2265
    %v2267 = vlaneseq
    %v2268 = vshrl.u32 %v2267, 7
    %v2269 = vsub.s32 0, %v2268
    %v2270 = vrot.slane %v2145, %v2269
    %v2271 = vlaneseq
    %v2272 = vshrl.u32 %v2271, 7
    %v2273 = vsub.s32 0, %v2272
    %v2274 = vrot.slane %v2159, %v2273
    %v2275 = vlaneseq
    %v2276 = vshrl.u32 %v2275, 7
    %v2277 = vsub.s32 0, %v2276
    %v2278 = vrot.slane %v2167, %v2277
    %v2279 = vlaneseq
    %v2280 = vshrl.u32 %v2279, 7
    %v2281 = vsub.s32 0, %v2280
    %v2282 = vrot.slane %v2169, %v2281
    %v2283 = vlaneseq
    %v2284 = vshrl.u32 %v2283, 7
    %v2285 = vsub.s32 0, %v2284
    %v2286 = vrot.slane %v2152, %v2285
    %v2287 = vlaneseq
    %v2288 = vshrl.u32 %v2287, 7
    %v2289 = vsub.s32 0, %v2288
    %v2290 = vrot.slane %v2166, %v2289
    %v2291 = vlaneseq
    %v2292 = vshrl.u32 %v2291, 7
    %v2293 = vsub.s32 0, %v2292
    %v2294 = vrot.slane %v2168, %v2293
    %v2295 = vlaneseq
    %v2296 = vshrl.u32 %v2295, 7
    %v2297 = vsub.s32 0, %v2296
    %v2298 = vrot.slane %v2170, %v2297
    %v2331 = vmul.f32 %v2174, %v1907
    %v2332 = vmul.f32 %v2174, %v1908
    %v2333 = vmul.f32 %v2178, %v1909
    %v2334 = vmul.f32 %v2178, %v1910
    %v2335 = vmul.f32 %v2182, %v1911
    %v2336 = vmul.f32 %v2182, %v1912
    %v2337 = vmul.f32 %v2186, %v1913
    %v2338 = vmul.f32 %v2186, %v1914
    %v2339 = vmul.f32 %v2190, %v1915
    %v2340 = vmul.f32 %v2190, %v1916
    %v2341 = vmul.f32 %v2194, %v1917
    %v2342 = vmul.f32 %v2194, %v1918
    %v2343 = vmul.f32 %v2198, %v1919
    %v2344 = vmul.f32 %v2198, %v1920
    %v2345 = vmul.f32 %v2202, %v1921
    %v2346 = vmul.f32 %v2202, %v1922
    %v2347 = vmul.f32 %v2206, %v1923
    %v2348 = vmul.f32 %v2206, %v1924
    %v2349 = vmul.f32 %v2210, %v1925
    %v2350 = vmul.f32 %v2210, %v1926
    %v2351 = vmul.f32 %v2214, %v1927
    %v2352 = vmul.f32 %v2214, %v1928
    %v2353 = vmul.f32 %v2218, %v1929
    %v2354 = vmul.f32 %v2218, %v1930
    %v2355 = vmul.f32 %v2222, %v1931
    %v2356 = vmul.f32 %v2222, %v1932
    %v2357 = vmul.f32 %v2226, %v1933
    %v2358 = vmul.f32 %v2226, %v1934
    %v2359 = vmul.f32 %v2230, %v1935
    %v2360 = vmul.f32 %v2230, %v1936
    %v2361 = vmul.f32 %v2234, %v1937
    %v2362 = vmul.f32 %v2234, %v1938
    %v2363 = vmul.f32 %v2238, %v1939
    %v2364 = vmul.f32 %v2238, %v1940
    %v2365 = vmul.f32 %v2242, %v1941
    %v2366 = vmul.f32 %v2242, %v1942
    %v2367 = vmul.f32 %v2246, %v1943
    %v2368 = vmul.f32 %v2246, %v1944
    %v2369 = vmul.f32 %v2250, %v1945
    %v2370 = vmul.f32 %v2250, %v1946
    %v2371 = vmul.f32 %v2254, %v1947
    %v2372 = vmul.f32 %v2254, %v1948
    %v2373 = vmul.f32 %v2258, %v1949
    %v2374 = vmul.f32 %v2258, %v1950
    %v2375 = vmul.f32 %v2262, %v1951
    %v2376 = vmul.f32 %v2262, %v1952
    %v2377 = vmul.f32 %v2266, %v1953
    %v2378 = vmul.f32 %v2266, %v1954
    %v2379 = vmul.f32 %v2270, %v1955
    %v2380 = vmul.f32 %v2270, %v1956
    %v2381 = vmul.f32 %v2274, %v1957
    %v2382 = vmul.f32 %v2274, %v1958
    %v2383 = vmul.f32 %v2278, %v1959
    %v2384 = vmul.f32 %v2278, %v1960
    %v2385 = vmul.f32 %v2282, %v1961
    %v2386 = vmul.f32 %v2282, %v1962
    %v2387 = vmul.f32 %v2286, %v1963
    %v2388 = vmul.f32 %v2286, %v1964
    %v2389 = vmul.f32 %v2290, %v1965
    %v2390 = vmul.f32 %v2290, %v1966
    %v2391 = vmul.f32 %v2294, %v1967
    %v2392 = vmul.f32 %v2294, %v1968
    %v2393 = vmul.f32 %v2298, %v1969
    %v2394 = vmul.f32 %v2298, %v1970
    %v2395 = vld [vmem:[%s10] sm:$0xff]
    %v2396 = vld [vmem:[%s10 + $0x8] sm:$0xff]
    %v2397 = vld [vmem:[%s10 + $0x10] sm:$0xff]
    %v2398 = vld [vmem:[%s10 + $0x18] sm:$0xff]
    %v2399 = vld [vmem:[%s10 + $0x20] sm:$0xff]
    %v2400 = vld [vmem:[%s10 + $0x28] sm:$0xff]
    %v2401 = vld [vmem:[%s10 + $0x30] sm:$0xff]
    %v2402 = vld [vmem:[%s10 + $0x38] sm:$0xff]
    %v2404 = vsel %vm957, %v2331, 0
    %v2407 = vsel %vm957, %v2332, 0
    %v2410 = vsel %vm957, %v2333, 0
    %v2413 = vsel %vm957, %v2334, 0
    %v2416 = vsel %vm957, %v2335, 0
    %v2419 = vsel %vm957, %v2336, 0
    %v2422 = vsel %vm957, %v2337, 0
    %v2425 = vsel %vm957, %v2338, 0
    %v2428 = vsel %vm957, %v2339, 0
    %v2431 = vsel %vm957, %v2340, 0
    %v2434 = vsel %vm957, %v2341, 0
    %v2437 = vsel %vm957, %v2342, 0
    %v2440 = vsel %vm957, %v2343, 0
    %v2443 = vsel %vm957, %v2344, 0
    %v2446 = vsel %vm957, %v2345, 0
    %v2449 = vsel %vm957, %v2346, 0
    %v2452 = vsel %vm957, %v2347, 0
    %v2455 = vsel %vm957, %v2348, 0
    %v2458 = vsel %vm957, %v2349, 0
    %v2461 = vsel %vm957, %v2350, 0
    %v2464 = vsel %vm957, %v2351, 0
    %v2467 = vsel %vm957, %v2352, 0
    %v2470 = vsel %vm957, %v2353, 0
    %v2473 = vsel %vm957, %v2354, 0
    %v2476 = vsel %vm957, %v2355, 0
    %v2479 = vsel %vm957, %v2356, 0
    %v2482 = vsel %vm957, %v2357, 0
    %v2485 = vsel %vm957, %v2358, 0
    %v2488 = vsel %vm957, %v2359, 0
    %v2491 = vsel %vm957, %v2360, 0
    %v2494 = vsel %vm957, %v2361, 0
    %v2497 = vsel %vm957, %v2362, 0
    %v2500 = vsel %vm957, %v2363, 0
    %v2503 = vsel %vm957, %v2364, 0
    %v2506 = vsel %vm957, %v2365, 0
    %v2509 = vsel %vm957, %v2366, 0
    %v2512 = vsel %vm957, %v2367, 0
    %v2515 = vsel %vm957, %v2368, 0
    %v2518 = vsel %vm957, %v2369, 0
    %v2521 = vsel %vm957, %v2370, 0
    %v2524 = vsel %vm957, %v2371, 0
    %v2527 = vsel %vm957, %v2372, 0
    %v2530 = vsel %vm957, %v2373, 0
    %v2533 = vsel %vm957, %v2374, 0
    %v2536 = vsel %vm957, %v2375, 0
    %v2539 = vsel %vm957, %v2376, 0
    %v2542 = vsel %vm957, %v2377, 0
    %v2545 = vsel %vm957, %v2378, 0
    %v2548 = vsel %vm957, %v2379, 0
    %v2551 = vsel %vm957, %v2380, 0
    %v2554 = vsel %vm957, %v2381, 0
    %v2557 = vsel %vm957, %v2382, 0
    %v2560 = vsel %vm957, %v2383, 0
    %v2563 = vsel %vm957, %v2384, 0
    %v2566 = vsel %vm957, %v2385, 0
    %v2569 = vsel %vm957, %v2386, 0
    %v2572 = vsel %vm957, %v2387, 0
    %v2575 = vsel %vm957, %v2388, 0
    %v2578 = vsel %vm957, %v2389, 0
    %v2581 = vsel %vm957, %v2390, 0
    %v2584 = vsel %vm957, %v2391, 0
    %v2587 = vsel %vm957, %v2392, 0
    %v2590 = vsel %vm957, %v2393, 0
    %v2593 = vsel %vm957, %v2394, 0
    %2595 = vmatprep.subr.mxu0 0.0
    %2596 = vmatpush1.msra.mxu0 %v2395
    %2597 = vmatprep.subr.mxu0 0.0
    %2598 = vmatpush1.msra.mxu0 %v2396
    %2599 = vmatprep.subr.mxu0 0.0
    %2600 = vmatpush1.msra.mxu0 %v2397
    %2601 = vmatprep.subr.mxu0 0.0
    %2602 = vmatpush1.msra.mxu0 %v2398
    %2603 = vmatprep.subr.mxu0 0.0
    %2604 = vmatpush1.msra.mxu0 %v2399
    %2605 = vmatprep.subr.mxu0 0.0
    %2606 = vmatpush1.msra.mxu0 %v2400
    %2607 = vmatprep.subr.mxu0 0.0
    %2608 = vmatpush1.msra.mxu0 %v2401
    %2609 = vmatprep.subr.mxu0 0.0
    %2610 = vmatpush1.msra.mxu0 %v2402
    %2611 = vmatprep.subr.mxu0 0.0
    %2612 = vmatpush1.msra.mxu0 0.0
    %2613 = vmatprep.subr.mxu0 0.0
    %2614 = vmatpush1.msra.mxu0 0.0
    %2615 = vmatprep.subr.mxu0 0.0
    %2616 = vmatpush1.msra.mxu0 0.0
    %2617 = vmatprep.subr.mxu0 0.0
    %2618 = vmatpush1.msra.mxu0 0.0
    %2619 = vmatprep.subr.mxu0 0.0
    %2620 = vmatpush1.msra.mxu0 0.0
    %2621 = vmatprep.subr.mxu0 0.0
    %2622 = vmatpush1.msra.mxu0 0.0
    %2623 = vmatprep.subr.mxu0 0.0
    %2624 = vmatpush1.msra.mxu0 0.0
    %2625 = vmatprep.subr.mxu0 0.0
    %2626 = vmatpush1.msra.mxu0 0.0
    %2627 = vmatprep.subr.mxu0 0.0
    %2628 = vmatpush1.msra.mxu0 0.0
    %2629 = vmatprep.subr.mxu0 0.0
    %2630 = vmatpush1.msra.mxu0 0.0
    %2631 = vmatprep.subr.mxu0 0.0
    %2632 = vmatpush1.msra.mxu0 0.0
    %2633 = vmatprep.subr.mxu0 0.0
    %2634 = vmatpush1.msra.mxu0 0.0
    %2635 = vmatprep.subr.mxu0 0.0
    %2636 = vmatpush1.msra.mxu0 0.0
    %2637 = vmatprep.subr.mxu0 0.0
    %2638 = vmatpush1.msra.mxu0 0.0
    %2639 = vmatprep.subr.mxu0 0.0
    %2640 = vmatpush1.msra.mxu0 0.0
    %2641 = vmatprep.subr.mxu0 0.0
    %2642 = vmatpush1.msra.mxu0 0.0
    %2643 = vmatprep.subr.mxu0 0.0
    %2644 = vmatpush1.msra.mxu0 0.0
    %2645 = vmatprep.subr.mxu0 0.0
    %2646 = vmatpush1.msra.mxu0 0.0
    %2647 = vmatprep.subr.mxu0 0.0
    %2648 = vmatpush1.msra.mxu0 0.0
    %2649 = vmatprep.subr.mxu0 0.0
    %2650 = vmatpush1.msra.mxu0 0.0
    %2651 = vmatprep.subr.mxu0 0.0
    %2652 = vmatpush1.msra.mxu0 0.0
    %2653 = vmatprep.subr.mxu0 0.0
    %2654 = vmatpush1.msra.mxu0 0.0
    %2655 = vmatprep.subr.mxu0 0.0
    %2656 = vmatpush1.msra.mxu0 0.0
    %2657 = vmatprep.subr.mxu0 0.0
    %2658 = vmatpush1.msra.mxu0 0.0
    %2659 = vmatprep.mubr.f32.mxu0 0.0
    %2660 = vmatmul.mubr.f32.gmra.mrb[0].mxu0 %v2404
    %v2661 = vpop.f32.mrb[0].mxu0
    %v2662 = vadd.f32 0.0, %v2661
    %v2663 = vpop.f32.mrb[0].mxu0
    %2664 = vmatprep.mubr.f32.mxu0 0.0
    %2665 = vmatmul.mubr.f32.gmra.mrb[0].mxu0 %v2407
    %v2666 = vpop.f32.mrb[0].mxu0
    %v2667 = vadd.f32 0.0, %v2666
    %v2668 = vpop.f32.mrb[0].mxu0
    %2669 = vmatprep.mubr.f32.mxu0 0.0
    %2670 = vmatmul.mubr.f32.gmra.mrb[0].mxu0 %v2410
    %v2671 = vpop.f32.mrb[0].mxu0
    %v2672 = vadd.f32 0.0, %v2671
    %v2673 = vpop.f32.mrb[0].mxu0
    %2674 = vmatprep.mubr.f32.mxu0 0.0
    %2675 = vmatmul.mubr.f32.gmra.mrb[0].mxu0 %v2413
    %v2676 = vpop.f32.mrb[0].mxu0
    %v2677 = vadd.f32 0.0, %v2676
    %v2678 = vpop.f32.mrb[0].mxu0
    %2679 = vmatprep.mubr.f32.mxu0 0.0
    %2680 = vmatmul.mubr.f32.gmra.mrb[0].mxu0 %v2416
    %v2681 = vpop.f32.mrb[0].mxu0
    %v2682 = vadd.f32 0.0, %v2681
    %v2683 = vpop.f32.mrb[0].mxu0
    %2684 = vmatprep.mubr.f32.mxu0 0.0
    %2685 = vmatmul.mubr.f32.gmra.mrb[0].mxu0 %v2419
    %v2686 = vpop.f32.mrb[0].mxu0
    %v2687 = vadd.f32 0.0, %v2686
    %v2688 = vpop.f32.mrb[0].mxu0
    %2689 = vmatprep.mubr.f32.mxu0 0.0
    %2690 = vmatmul.mubr.f32.gmra.mrb[0].mxu0 %v2422
    %v2691 = vpop.f32.mrb[0].mxu0
    %v2692 = vadd.f32 0.0, %v2691
    %v2693 = vpop.f32.mrb[0].mxu0
    %2694 = vmatprep.mubr.f32.mxu0 0.0
    %2695 = vmatmul.mubr.f32.gmra.mrb[0].mxu0 %v2425
    %v2696 = vpop.f32.mrb[0].mxu0
    %v2697 = vadd.f32 0.0, %v2696
    %v2698 = vpop.f32.mrb[0].mxu0
    %2699 = vmatprep.mubr.f32.mxu0 0.0
    %2700 = vmatmul.mubr.f32.gmra.mrb[0].mxu0 %v2428
    %v2701 = vpop.f32.mrb[0].mxu0
    %v2702 = vadd.f32 0.0, %v2701
    %v2703 = vpop.f32.mrb[0].mxu0
    %2704 = vmatprep.mubr.f32.mxu0 0.0
    %2705 = vmatmul.mubr.f32.gmra.mrb[0].mxu0 %v2431
    %v2706 = vpop.f32.mrb[0].mxu0
    %v2707 = vadd.f32 0.0, %v2706
    %v2708 = vpop.f32.mrb[0].mxu0
    %2709 = vmatprep.mubr.f32.mxu0 0.0
    %2710 = vmatmul.mubr.f32.gmra.mrb[0].mxu0 %v2434
    %v2711 = vpop.f32.mrb[0].mxu0
    %v2712 = vadd.f32 0.0, %v2711
    %v2713 = vpop.f32.mrb[0].mxu0
    %2714 = vmatprep.mubr.f32.mxu0 0.0
    %2715 = vmatmul.mubr.f32.gmra.mrb[0].mxu0 %v2437
    %v2716 = vpop.f32.mrb[0].mxu0
    %v2717 = vadd.f32 0.0, %v2716
    %v2718 = vpop.f32.mrb[0].mxu0
    %2719 = vmatprep.mubr.f32.mxu0 0.0
    %2720 = vmatmul.mubr.f32.gmra.mrb[0].mxu0 %v2440
    %v2721 = vpop.f32.mrb[0].mxu0
    %v2722 = vadd.f32 0.0, %v2721
    %v2723 = vpop.f32.mrb[0].mxu0
    %2724 = vmatprep.mubr.f32.mxu0 0.0
    %2725 = vmatmul.mubr.f32.gmra.mrb[0].mxu0 %v2443
    %v2726 = vpop.f32.mrb[0].mxu0
    %v2727 = vadd.f32 0.0, %v2726
    %v2728 = vpop.f32.mrb[0].mxu0
    %2729 = vmatprep.mubr.f32.mxu0 0.0
    %2730 = vmatmul.mubr.f32.gmra.mrb[0].mxu0 %v2446
    %v2731 = vpop.f32.mrb[0].mxu0
    %v2732 = vadd.f32 0.0, %v2731
    %v2733 = vpop.f32.mrb[0].mxu0
    %2734 = vmatprep.mubr.f32.mxu0 0.0
    %2735 = vmatmul.mubr.f32.gmra.mrb[0].mxu0 %v2449
    %v2736 = vpop.f32.mrb[0].mxu0
    %v2737 = vadd.f32 0.0, %v2736
    %v2738 = vpop.f32.mrb[0].mxu0
    %2739 = vmatprep.mubr.f32.mxu0 0.0
    %2740 = vmatmul.mubr.f32.gmra.mrb[0].mxu0 %v2452
    %v2741 = vpop.f32.mrb[0].mxu0
    %v2742 = vadd.f32 0.0, %v2741
    %v2743 = vpop.f32.mrb[0].mxu0
    %2744 = vmatprep.mubr.f32.mxu0 0.0
    %2745 = vmatmul.mubr.f32.gmra.mrb[0].mxu0 %v2455
    %v2746 = vpop.f32.mrb[0].mxu0
    %v2747 = vadd.f32 0.0, %v2746
    %v2748 = vpop.f32.mrb[0].mxu0
    %2749 = vmatprep.mubr.f32.mxu0 0.0
    %2750 = vmatmul.mubr.f32.gmra.mrb[0].mxu0 %v2458
    %v2751 = vpop.f32.mrb[0].mxu0
    %v2752 = vadd.f32 0.0, %v2751
    %v2753 = vpop.f32.mrb[0].mxu0
    %2754 = vmatprep.mubr.f32.mxu0 0.0
    %2755 = vmatmul.mubr.f32.gmra.mrb[0].mxu0 %v2461
    %v2756 = vpop.f32.mrb[0].mxu0
    %v2757 = vadd.f32 0.0, %v2756
    %v2758 = vpop.f32.mrb[0].mxu0
    %2759 = vmatprep.mubr.f32.mxu0 0.0
    %2760 = vmatmul.mubr.f32.gmra.mrb[0].mxu0 %v2464
    %v2761 = vpop.f32.mrb[0].mxu0
    %v2762 = vadd.f32 0.0, %v2761
    %v2763 = vpop.f32.mrb[0].mxu0
    %2764 = vmatprep.mubr.f32.mxu0 0.0
    %2765 = vmatmul.mubr.f32.gmra.mrb[0].mxu0 %v2467
    %v2766 = vpop.f32.mrb[0].mxu0
    %v2767 = vadd.f32 0.0, %v2766
    %v2768 = vpop.f32.mrb[0].mxu0
    %2769 = vmatprep.mubr.f32.mxu0 0.0
    %2770 = vmatmul.mubr.f32.gmra.mrb[0].mxu0 %v2470
    %v2771 = vpop.f32.mrb[0].mxu0
    %v2772 = vadd.f32 0.0, %v2771
    %v2773 = vpop.f32.mrb[0].mxu0
    %2774 = vmatprep.mubr.f32.mxu0 0.0
    %2775 = vmatmul.mubr.f32.gmra.mrb[0].mxu0 %v2473
    %v2776 = vpop.f32.mrb[0].mxu0
    %v2777 = vadd.f32 0.0, %v2776
    %v2778 = vpop.f32.mrb[0].mxu0
    %2779 = vmatprep.mubr.f32.mxu0 0.0
    %2780 = vmatmul.mubr.f32.gmra.mrb[0].mxu0 %v2476
    %v2781 = vpop.f32.mrb[0].mxu0
    %v2782 = vadd.f32 0.0, %v2781
    %v2783 = vpop.f32.mrb[0].mxu0
    %2784 = vmatprep.mubr.f32.mxu0 0.0
    %2785 = vmatmul.mubr.f32.gmra.mrb[0].mxu0 %v2479
    %v2786 = vpop.f32.mrb[0].mxu0
    %v2787 = vadd.f32 0.0, %v2786
    %v2788 = vpop.f32.mrb[0].mxu0
    %2789 = vmatprep.mubr.f32.mxu0 0.0
    %2790 = vmatmul.mubr.f32.gmra.mrb[0].mxu0 %v2482
    %v2791 = vpop.f32.mrb[0].mxu0
    %v2792 = vadd.f32 0.0, %v2791
    %v2793 = vpop.f32.mrb[0].mxu0
    %2794 = vmatprep.mubr.f32.mxu0 0.0
    %2795 = vmatmul.mubr.f32.gmra.mrb[0].mxu0 %v2485
    %v2796 = vpop.f32.mrb[0].mxu0
    %v2797 = vadd.f32 0.0, %v2796
    %v2798 = vpop.f32.mrb[0].mxu0
    %2799 = vmatprep.mubr.f32.mxu0 0.0
    %2800 = vmatmul.mubr.f32.gmra.mrb[0].mxu0 %v2488
    %v2801 = vpop.f32.mrb[0].mxu0
    %v2802 = vadd.f32 0.0, %v2801
    %v2803 = vpop.f32.mrb[0].mxu0
    %2804 = vmatprep.mubr.f32.mxu0 0.0
    %2805 = vmatmul.mubr.f32.gmra.mrb[0].mxu0 %v2491
    %v2806 = vpop.f32.mrb[0].mxu0
    %v2807 = vadd.f32 0.0, %v2806
    %v2808 = vpop.f32.mrb[0].mxu0
    %2809 = vmatprep.mubr.f32.mxu0 0.0
    %2810 = vmatmul.mubr.f32.gmra.mrb[0].mxu0 %v2494
    %v2811 = vpop.f32.mrb[0].mxu0
    %v2812 = vadd.f32 0.0, %v2811
    %v2813 = vpop.f32.mrb[0].mxu0
    %2814 = vmatprep.mubr.f32.mxu0 0.0
    %2815 = vmatmul.mubr.f32.gmra.mrb[0].mxu0 %v2497
    %v2816 = vpop.f32.mrb[0].mxu0
    %v2817 = vadd.f32 0.0, %v2816
    %v2818 = vpop.f32.mrb[0].mxu0
    %2819 = vmatprep.mubr.f32.mxu0 0.0
    %2820 = vmatmul.mubr.f32.gmra.mrb[0].mxu0 %v2500
    %v2821 = vpop.f32.mrb[0].mxu0
    %v2822 = vadd.f32 0.0, %v2821
    %v2823 = vpop.f32.mrb[0].mxu0
    %2824 = vmatprep.mubr.f32.mxu0 0.0
    %2825 = vmatmul.mubr.f32.gmra.mrb[0].mxu0 %v2503
    %v2826 = vpop.f32.mrb[0].mxu0
    %v2827 = vadd.f32 0.0, %v2826
    %v2828 = vpop.f32.mrb[0].mxu0
    %2829 = vmatprep.mubr.f32.mxu0 0.0
    %2830 = vmatmul.mubr.f32.gmra.mrb[0].mxu0 %v2506
    %v2831 = vpop.f32.mrb[0].mxu0
    %v2832 = vadd.f32 0.0, %v2831
    %v2833 = vpop.f32.mrb[0].mxu0
    %2834 = vmatprep.mubr.f32.mxu0 0.0
    %2835 = vmatmul.mubr.f32.gmra.mrb[0].mxu0 %v2509
    %v2836 = vpop.f32.mrb[0].mxu0
    %v2837 = vadd.f32 0.0, %v2836
    %v2838 = vpop.f32.mrb[0].mxu0
    %2839 = vmatprep.mubr.f32.mxu0 0.0
    %2840 = vmatmul.mubr.f32.gmra.mrb[0].mxu0 %v2512
    %v2841 = vpop.f32.mrb[0].mxu0
    %v2842 = vadd.f32 0.0, %v2841
    %v2843 = vpop.f32.mrb[0].mxu0
    %2844 = vmatprep.mubr.f32.mxu0 0.0
    %2845 = vmatmul.mubr.f32.gmra.mrb[0].mxu0 %v2515
    %v2846 = vpop.f32.mrb[0].mxu0
    %v2847 = vadd.f32 0.0, %v2846
    %v2848 = vpop.f32.mrb[0].mxu0
    %2849 = vmatprep.mubr.f32.mxu0 0.0
    %2850 = vmatmul.mubr.f32.gmra.mrb[0].mxu0 %v2518
    %v2851 = vpop.f32.mrb[0].mxu0
    %v2852 = vadd.f32 0.0, %v2851
    %v2853 = vpop.f32.mrb[0].mxu0
    %2854 = vmatprep.mubr.f32.mxu0 0.0
    %2855 = vmatmul.mubr.f32.gmra.mrb[0].mxu0 %v2521
    %v2856 = vpop.f32.mrb[0].mxu0
    %v2857 = vadd.f32 0.0, %v2856
    %v2858 = vpop.f32.mrb[0].mxu0
    %2859 = vmatprep.mubr.f32.mxu0 0.0
    %2860 = vmatmul.mubr.f32.gmra.mrb[0].mxu0 %v2524
    %v2861 = vpop.f32.mrb[0].mxu0
    %v2862 = vadd.f32 0.0, %v2861
    %v2863 = vpop.f32.mrb[0].mxu0
    %2864 = vmatprep.mubr.f32.mxu0 0.0
    %2865 = vmatmul.mubr.f32.gmra.mrb[0].mxu0 %v2527
    %v2866 = vpop.f32.mrb[0].mxu0
    %v2867 = vadd.f32 0.0, %v2866
    %v2868 = vpop.f32.mrb[0].mxu0
    %2869 = vmatprep.mubr.f32.mxu0 0.0
    %2870 = vmatmul.mubr.f32.gmra.mrb[0].mxu0 %v2530
    %v2871 = vpop.f32.mrb[0].mxu0
    %v2872 = vadd.f32 0.0, %v2871
    %v2873 = vpop.f32.mrb[0].mxu0
    %2874 = vmatprep.mubr.f32.mxu0 0.0
    %2875 = vmatmul.mubr.f32.gmra.mrb[0].mxu0 %v2533
    %v2876 = vpop.f32.mrb[0].mxu0
    %v2877 = vadd.f32 0.0, %v2876
    %v2878 = vpop.f32.mrb[0].mxu0
    %2879 = vmatprep.mubr.f32.mxu0 0.0
    %2880 = vmatmul.mubr.f32.gmra.mrb[0].mxu0 %v2536
    %v2881 = vpop.f32.mrb[0].mxu0
    %v2882 = vadd.f32 0.0, %v2881
    %v2883 = vpop.f32.mrb[0].mxu0
    %2884 = vmatprep.mubr.f32.mxu0 0.0
    %2885 = vmatmul.mubr.f32.gmra.mrb[0].mxu0 %v2539
    %v2886 = vpop.f32.mrb[0].mxu0
    %v2887 = vadd.f32 0.0, %v2886
    %v2888 = vpop.f32.mrb[0].mxu0
    %2889 = vmatprep.mubr.f32.mxu0 0.0
    %2890 = vmatmul.mubr.f32.gmra.mrb[0].mxu0 %v2542
    %v2891 = vpop.f32.mrb[0].mxu0
    %v2892 = vadd.f32 0.0, %v2891
    %v2893 = vpop.f32.mrb[0].mxu0
    %2894 = vmatprep.mubr.f32.mxu0 0.0
    %2895 = vmatmul.mubr.f32.gmra.mrb[0].mxu0 %v2545
    %v2896 = vpop.f32.mrb[0].mxu0
    %v2897 = vadd.f32 0.0, %v2896
    %v2898 = vpop.f32.mrb[0].mxu0
    %2899 = vmatprep.mubr.f32.mxu0 0.0
    %2900 = vmatmul.mubr.f32.gmra.mrb[0].mxu0 %v2548
    %v2901 = vpop.f32.mrb[0].mxu0
    %v2902 = vadd.f32 0.0, %v2901
    %v2903 = vpop.f32.mrb[0].mxu0
    %2904 = vmatprep.mubr.f32.mxu0 0.0
    %2905 = vmatmul.mubr.f32.gmra.mrb[0].mxu0 %v2551
    %v2906 = vpop.f32.mrb[0].mxu0
    %v2907 = vadd.f32 0.0, %v2906
    %v2908 = vpop.f32.mrb[0].mxu0
    %2909 = vmatprep.mubr.f32.mxu0 0.0
    %2910 = vmatmul.mubr.f32.gmra.mrb[0].mxu0 %v2554
    %v2911 = vpop.f32.mrb[0].mxu0
    %v2912 = vadd.f32 0.0, %v2911
    %v2913 = vpop.f32.mrb[0].mxu0
    %2914 = vmatprep.mubr.f32.mxu0 0.0
    %2915 = vmatmul.mubr.f32.gmra.mrb[0].mxu0 %v2557
    %v2916 = vpop.f32.mrb[0].mxu0
    %v2917 = vadd.f32 0.0, %v2916
    %v2918 = vpop.f32.mrb[0].mxu0
    %2919 = vmatprep.mubr.f32.mxu0 0.0
    %2920 = vmatmul.mubr.f32.gmra.mrb[0].mxu0 %v2560
    %v2921 = vpop.f32.mrb[0].mxu0
    %v2922 = vadd.f32 0.0, %v2921
    %v2923 = vpop.f32.mrb[0].mxu0
    %2924 = vmatprep.mubr.f32.mxu0 0.0
    %2925 = vmatmul.mubr.f32.gmra.mrb[0].mxu0 %v2563
    %v2926 = vpop.f32.mrb[0].mxu0
    %v2927 = vadd.f32 0.0, %v2926
    %v2928 = vpop.f32.mrb[0].mxu0
    %2929 = vmatprep.mubr.f32.mxu0 0.0
    %2930 = vmatmul.mubr.f32.gmra.mrb[0].mxu0 %v2566
    %v2931 = vpop.f32.mrb[0].mxu0
    %v2932 = vadd.f32 0.0, %v2931
    %v2933 = vpop.f32.mrb[0].mxu0
    %2934 = vmatprep.mubr.f32.mxu0 0.0
    %2935 = vmatmul.mubr.f32.gmra.mrb[0].mxu0 %v2569
    %v2936 = vpop.f32.mrb[0].mxu0
    %v2937 = vadd.f32 0.0, %v2936
    %v2938 = vpop.f32.mrb[0].mxu0
    %2939 = vmatprep.mubr.f32.mxu0 0.0
    %2940 = vmatmul.mubr.f32.gmra.mrb[0].mxu0 %v2572
    %v2941 = vpop.f32.mrb[0].mxu0
    %v2942 = vadd.f32 0.0, %v2941
    %v2943 = vpop.f32.mrb[0].mxu0
    %2944 = vmatprep.mubr.f32.mxu0 0.0
    %2945 = vmatmul.mubr.f32.gmra.mrb[0].mxu0 %v2575
    %v2946 = vpop.f32.mrb[0].mxu0
    %v2947 = vadd.f32 0.0, %v2946
    %v2948 = vpop.f32.mrb[0].mxu0
    %2949 = vmatprep.mubr.f32.mxu0 0.0
    %2950 = vmatmul.mubr.f32.gmra.mrb[0].mxu0 %v2578
    %v2951 = vpop.f32.mrb[0].mxu0
    %v2952 = vadd.f32 0.0, %v2951
    %v2953 = vpop.f32.mrb[0].mxu0
    %2954 = vmatprep.mubr.f32.mxu0 0.0
    %2955 = vmatmul.mubr.f32.gmra.mrb[0].mxu0 %v2581
    %v2956 = vpop.f32.mrb[0].mxu0
    %v2957 = vadd.f32 0.0, %v2956
    %v2958 = vpop.f32.mrb[0].mxu0
    %2959 = vmatprep.mubr.f32.mxu0 0.0
    %2960 = vmatmul.mubr.f32.gmra.mrb[0].mxu0 %v2584
    %v2961 = vpop.f32.mrb[0].mxu0
    %v2962 = vadd.f32 0.0, %v2961
    %v2963 = vpop.f32.mrb[0].mxu0
    %2964 = vmatprep.mubr.f32.mxu0 0.0
    %2965 = vmatmul.mubr.f32.gmra.mrb[0].mxu0 %v2587
    %v2966 = vpop.f32.mrb[0].mxu0
    %v2967 = vadd.f32 0.0, %v2966
    %v2968 = vpop.f32.mrb[0].mxu0
    %2969 = vmatprep.mubr.f32.mxu0 0.0
    %2970 = vmatmul.mubr.f32.gmra.mrb[0].mxu0 %v2590
    %v2971 = vpop.f32.mrb[0].mxu0
    %v2972 = vadd.f32 0.0, %v2971
    %v2973 = vpop.f32.mrb[0].mxu0
    %2974 = vmatprep.mubr.f32.mxu0 0.0
    %2975 = vmatmul.mubr.f32.gmra.mrb[0].mxu0 %v2593
    %v2976 = vpop.f32.mrb[0].mxu0
    %v2977 = vadd.f32 0.0, %v2976
    %v2978 = vpop.f32.mrb[0].mxu0
    %2979 = vdwg.mxu0
    %v2980 = vsel %vm957, %v2662, -inf
    %v2981 = vsel %vm957, %v2667, -inf
    %v2982 = vmax.f32 %v2980, %v2981
    %v2983 = vrot.slane %v2982, 4
    %v2984 = vmax.f32 %v2982, %v2983
    %v2985 = vrot.slane %v2984, 2
    %v2986 = vmax.f32 %v2984, %v2985
    %v2987 = vrot.slane %v2986, 1
    %v2988 = vmax.f32 %v2986, %v2987
    %v2989 = vsel %vm957, %v2672, -inf
    %v2990 = vsel %vm957, %v2677, -inf
    %v2991 = vmax.f32 %v2989, %v2990
    %v2992 = vrot.slane %v2991, 4
    %v2993 = vmax.f32 %v2991, %v2992
    %v2994 = vrot.slane %v2993, 2
    %v2995 = vmax.f32 %v2993, %v2994
    %v2996 = vrot.slane %v2995, 1
    %v2997 = vmax.f32 %v2995, %v2996
    %v2998 = vsel %vm957, %v2682, -inf
    %v2999 = vsel %vm957, %v2687, -inf
    %v3000 = vmax.f32 %v2998, %v2999
    %v3001 = vrot.slane %v3000, 4
    %v3002 = vmax.f32 %v3000, %v3001
    %v3003 = vrot.slane %v3002, 2
    %v3004 = vmax.f32 %v3002, %v3003
    %v3005 = vrot.slane %v3004, 1
    %v3006 = vmax.f32 %v3004, %v3005
    %v3007 = vsel %vm957, %v2692, -inf
    %v3008 = vsel %vm957, %v2697, -inf
    %v3009 = vmax.f32 %v3007, %v3008
    %v3010 = vrot.slane %v3009, 4
    %v3011 = vmax.f32 %v3009, %v3010
    %v3012 = vrot.slane %v3011, 2
    %v3013 = vmax.f32 %v3011, %v3012
    %v3014 = vrot.slane %v3013, 1
    %v3015 = vmax.f32 %v3013, %v3014
    %v3016 = vsel %vm957, %v2702, -inf
    %v3017 = vsel %vm957, %v2707, -inf
    %v3018 = vmax.f32 %v3016, %v3017
    %v3019 = vrot.slane %v3018, 4
    %v3020 = vmax.f32 %v3018, %v3019
    %v3021 = vrot.slane %v3020, 2
    %v3022 = vmax.f32 %v3020, %v3021
    %v3023 = vrot.slane %v3022, 1
    %v3024 = vmax.f32 %v3022, %v3023
    %v3025 = vsel %vm957, %v2712, -inf
    %v3026 = vsel %vm957, %v2717, -inf
    %v3027 = vmax.f32 %v3025, %v3026
    %v3028 = vrot.slane %v3027, 4
    %v3029 = vmax.f32 %v3027, %v3028
    %v3030 = vrot.slane %v3029, 2
    %v3031 = vmax.f32 %v3029, %v3030
    %v3032 = vrot.slane %v3031, 1
    %v3033 = vmax.f32 %v3031, %v3032
    %v3034 = vsel %vm957, %v2722, -inf
    %v3035 = vsel %vm957, %v2727, -inf
    %v3036 = vmax.f32 %v3034, %v3035
    %v3037 = vrot.slane %v3036, 4
    %v3038 = vmax.f32 %v3036, %v3037
    %v3039 = vrot.slane %v3038, 2
    %v3040 = vmax.f32 %v3038, %v3039
    %v3041 = vrot.slane %v3040, 1
    %v3042 = vmax.f32 %v3040, %v3041
    %v3043 = vsel %vm957, %v2732, -inf
    %v3044 = vsel %vm957, %v2737, -inf
    %v3045 = vmax.f32 %v3043, %v3044
    %v3046 = vrot.slane %v3045, 4
    %v3047 = vmax.f32 %v3045, %v3046
    %v3048 = vrot.slane %v3047, 2
    %v3049 = vmax.f32 %v3047, %v3048
    %v3050 = vrot.slane %v3049, 1
    %v3051 = vmax.f32 %v3049, %v3050
    %v3052 = vsel %vm957, %v2742, -inf
    %v3053 = vsel %vm957, %v2747, -inf
    %v3054 = vmax.f32 %v3052, %v3053
    %v3055 = vrot.slane %v3054, 4
    %v3056 = vmax.f32 %v3054, %v3055
    %v3057 = vrot.slane %v3056, 2
    %v3058 = vmax.f32 %v3056, %v3057
    %v3059 = vrot.slane %v3058, 1
    %v3060 = vmax.f32 %v3058, %v3059
    %v3061 = vsel %vm957, %v2752, -inf
    %v3062 = vsel %vm957, %v2757, -inf
    %v3063 = vmax.f32 %v3061, %v3062
    %v3064 = vrot.slane %v3063, 4
    %v3065 = vmax.f32 %v3063, %v3064
    %v3066 = vrot.slane %v3065, 2
    %v3067 = vmax.f32 %v3065, %v3066
    %v3068 = vrot.slane %v3067, 1
    %v3069 = vmax.f32 %v3067, %v3068
    %v3070 = vsel %vm957, %v2762, -inf
    %v3071 = vsel %vm957, %v2767, -inf
    %v3072 = vmax.f32 %v3070, %v3071
    %v3073 = vrot.slane %v3072, 4
    %v3074 = vmax.f32 %v3072, %v3073
    %v3075 = vrot.slane %v3074, 2
    %v3076 = vmax.f32 %v3074, %v3075
    %v3077 = vrot.slane %v3076, 1
    %v3078 = vmax.f32 %v3076, %v3077
    %v3079 = vsel %vm957, %v2772, -inf
    %v3080 = vsel %vm957, %v2777, -inf
    %v3081 = vmax.f32 %v3079, %v3080
    %v3082 = vrot.slane %v3081, 4
    %v3083 = vmax.f32 %v3081, %v3082
    %v3084 = vrot.slane %v3083, 2
    %v3085 = vmax.f32 %v3083, %v3084
    %v3086 = vrot.slane %v3085, 1
    %v3087 = vmax.f32 %v3085, %v3086
    %v3088 = vsel %vm957, %v2782, -inf
    %v3089 = vsel %vm957, %v2787, -inf
    %v3090 = vmax.f32 %v3088, %v3089
    %v3091 = vrot.slane %v3090, 4
    %v3092 = vmax.f32 %v3090, %v3091
    %v3093 = vrot.slane %v3092, 2
    %v3094 = vmax.f32 %v3092, %v3093
    %v3095 = vrot.slane %v3094, 1
    %v3096 = vmax.f32 %v3094, %v3095
    %v3097 = vsel %vm957, %v2792, -inf
    %v3098 = vsel %vm957, %v2797, -inf
    %v3099 = vmax.f32 %v3097, %v3098
    %v3100 = vrot.slane %v3099, 4
    %v3101 = vmax.f32 %v3099, %v3100
    %v3102 = vrot.slane %v3101, 2
    %v3103 = vmax.f32 %v3101, %v3102
    %v3104 = vrot.slane %v3103, 1
    %v3105 = vmax.f32 %v3103, %v3104
    %v3106 = vsel %vm957, %v2802, -inf
    %v3107 = vsel %vm957, %v2807, -inf
    %v3108 = vmax.f32 %v3106, %v3107
    %v3109 = vrot.slane %v3108, 4
    %v3110 = vmax.f32 %v3108, %v3109
    %v3111 = vrot.slane %v3110, 2
    %v3112 = vmax.f32 %v3110, %v3111
    %v3113 = vrot.slane %v3112, 1
    %v3114 = vmax.f32 %v3112, %v3113
    %v3115 = vsel %vm957, %v2812, -inf
    %v3116 = vsel %vm957, %v2817, -inf
    %v3117 = vmax.f32 %v3115, %v3116
    %v3118 = vrot.slane %v3117, 4
    %v3119 = vmax.f32 %v3117, %v3118
    %v3120 = vrot.slane %v3119, 2
    %v3121 = vmax.f32 %v3119, %v3120
    %v3122 = vrot.slane %v3121, 1
    %v3123 = vmax.f32 %v3121, %v3122
    %v3124 = vsel %vm957, %v2822, -inf
    %v3125 = vsel %vm957, %v2827, -inf
    %v3126 = vmax.f32 %v3124, %v3125
    %v3127 = vrot.slane %v3126, 4
    %v3128 = vmax.f32 %v3126, %v3127
    %v3129 = vrot.slane %v3128, 2
    %v3130 = vmax.f32 %v3128, %v3129
    %v3131 = vrot.slane %v3130, 1
    %v3132 = vmax.f32 %v3130, %v3131
    %v3133 = vsel %vm957, %v2832, -inf
    %v3134 = vsel %vm957, %v2837, -inf
    %v3135 = vmax.f32 %v3133, %v3134
    %v3136 = vrot.slane %v3135, 4
    %v3137 = vmax.f32 %v3135, %v3136
    %v3138 = vrot.slane %v3137, 2
    %v3139 = vmax.f32 %v3137, %v3138
    %v3140 = vrot.slane %v3139, 1
    %v3141 = vmax.f32 %v3139, %v3140
    %v3142 = vsel %vm957, %v2842, -inf
    %v3143 = vsel %vm957, %v2847, -inf
    %v3144 = vmax.f32 %v3142, %v3143
    %v3145 = vrot.slane %v3144, 4
    %v3146 = vmax.f32 %v3144, %v3145
    %v3147 = vrot.slane %v3146, 2
    %v3148 = vmax.f32 %v3146, %v3147
    %v3149 = vrot.slane %v3148, 1
    %v3150 = vmax.f32 %v3148, %v3149
    %v3151 = vsel %vm957, %v2852, -inf
    %v3152 = vsel %vm957, %v2857, -inf
    %v3153 = vmax.f32 %v3151, %v3152
    %v3154 = vrot.slane %v3153, 4
    %v3155 = vmax.f32 %v3153, %v3154
    %v3156 = vrot.slane %v3155, 2
    %v3157 = vmax.f32 %v3155, %v3156
    %v3158 = vrot.slane %v3157, 1
    %v3159 = vmax.f32 %v3157, %v3158
    %v3160 = vsel %vm957, %v2862, -inf
    %v3161 = vsel %vm957, %v2867, -inf
    %v3162 = vmax.f32 %v3160, %v3161
    %v3163 = vrot.slane %v3162, 4
    %v3164 = vmax.f32 %v3162, %v3163
    %v3165 = vrot.slane %v3164, 2
    %v3166 = vmax.f32 %v3164, %v3165
    %v3167 = vrot.slane %v3166, 1
    %v3168 = vmax.f32 %v3166, %v3167
    %v3169 = vsel %vm957, %v2872, -inf
    %v3170 = vsel %vm957, %v2877, -inf
    %v3171 = vmax.f32 %v3169, %v3170
    %v3172 = vrot.slane %v3171, 4
    %v3173 = vmax.f32 %v3171, %v3172
    %v3174 = vrot.slane %v3173, 2
    %v3175 = vmax.f32 %v3173, %v3174
    %v3176 = vrot.slane %v3175, 1
    %v3177 = vmax.f32 %v3175, %v3176
    %v3178 = vsel %vm957, %v2882, -inf
    %v3179 = vsel %vm957, %v2887, -inf
    %v3180 = vmax.f32 %v3178, %v3179
    %v3181 = vrot.slane %v3180, 4
    %v3182 = vmax.f32 %v3180, %v3181
    %v3183 = vrot.slane %v3182, 2
    %v3184 = vmax.f32 %v3182, %v3183
    %v3185 = vrot.slane %v3184, 1
    %v3186 = vmax.f32 %v3184, %v3185
    %v3187 = vsel %vm957, %v2892, -inf
    %v3188 = vsel %vm957, %v2897, -inf
    %v3189 = vmax.f32 %v3187, %v3188
    %v3190 = vrot.slane %v3189, 4
    %v3191 = vmax.f32 %v3189, %v3190
    %v3192 = vrot.slane %v3191, 2
    %v3193 = vmax.f32 %v3191, %v3192
    %v3194 = vrot.slane %v3193, 1
    %v3195 = vmax.f32 %v3193, %v3194
    %v3196 = vsel %vm957, %v2902, -inf
    %v3197 = vsel %vm957, %v2907, -inf
    %v3198 = vmax.f32 %v3196, %v3197
    %v3199 = vrot.slane %v3198, 4
    %v3200 = vmax.f32 %v3198, %v3199
    %v3201 = vrot.slane %v3200, 2
    %v3202 = vmax.f32 %v3200, %v3201
    %v3203 = vrot.slane %v3202, 1
    %v3204 = vmax.f32 %v3202, %v3203
    %v3205 = vsel %vm957, %v2912, -inf
    %v3206 = vsel %vm957, %v2917, -inf
    %v3207 = vmax.f32 %v3205, %v3206
    %v3208 = vrot.slane %v3207, 4
    %v3209 = vmax.f32 %v3207, %v3208
    %v3210 = vrot.slane %v3209, 2
    %v3211 = vmax.f32 %v3209, %v3210
    %v3212 = vrot.slane %v3211, 1
    %v3213 = vmax.f32 %v3211, %v3212
    %v3214 = vsel %vm957, %v2922, -inf
    %v3215 = vsel %vm957, %v2927, -inf
    %v3216 = vmax.f32 %v3214, %v3215
    %v3217 = vrot.slane %v3216, 4
    %v3218 = vmax.f32 %v3216, %v3217
    %v3219 = vrot.slane %v3218, 2
    %v3220 = vmax.f32 %v3218, %v3219
    %v3221 = vrot.slane %v3220, 1
    %v3222 = vmax.f32 %v3220, %v3221
    %v3223 = vsel %vm957, %v2932, -inf
    %v3224 = vsel %vm957, %v2937, -inf
    %v3225 = vmax.f32 %v3223, %v3224
    %v3226 = vrot.slane %v3225, 4
    %v3227 = vmax.f32 %v3225, %v3226
    %v3228 = vrot.slane %v3227, 2
    %v3229 = vmax.f32 %v3227, %v3228
    %v3230 = vrot.slane %v3229, 1
    %v3231 = vmax.f32 %v3229, %v3230
    %v3232 = vsel %vm957, %v2942, -inf
    %v3233 = vsel %vm957, %v2947, -inf
    %v3234 = vmax.f32 %v3232, %v3233
    %v3235 = vrot.slane %v3234, 4
    %v3236 = vmax.f32 %v3234, %v3235
    %v3237 = vrot.slane %v3236, 2
    %v3238 = vmax.f32 %v3236, %v3237
    %v3239 = vrot.slane %v3238, 1
    %v3240 = vmax.f32 %v3238, %v3239
    %v3241 = vsel %vm957, %v2952, -inf
    %v3242 = vsel %vm957, %v2957, -inf
    %v3243 = vmax.f32 %v3241, %v3242
    %v3244 = vrot.slane %v3243, 4
    %v3245 = vmax.f32 %v3243, %v3244
    %v3246 = vrot.slane %v3245, 2
    %v3247 = vmax.f32 %v3245, %v3246
    %v3248 = vrot.slane %v3247, 1
    %v3249 = vmax.f32 %v3247, %v3248
    %v3250 = vsel %vm957, %v2962, -inf
    %v3251 = vsel %vm957, %v2967, -inf
    %v3252 = vmax.f32 %v3250, %v3251
    %v3253 = vrot.slane %v3252, 4
    %v3254 = vmax.f32 %v3252, %v3253
    %v3255 = vrot.slane %v3254, 2
    %v3256 = vmax.f32 %v3254, %v3255
    %v3257 = vrot.slane %v3256, 1
    %v3258 = vmax.f32 %v3256, %v3257
    %v3259 = vsel %vm957, %v2972, -inf
    %v3260 = vsel %vm957, %v2977, -inf
    %v3261 = vmax.f32 %v3259, %v3260
    %v3262 = vrot.slane %v3261, 4
    %v3263 = vmax.f32 %v3261, %v3262
    %v3264 = vrot.slane %v3263, 2
    %v3265 = vmax.f32 %v3263, %v3264
    %v3266 = vrot.slane %v3265, 1
    %v3267 = vmax.f32 %v3265, %v3266
    %v3268 = vsub.f32 %v2662, %v2988
    %v3269 = vsub.f32 %v2667, %v2988
    %v3270 = vsub.f32 %v2672, %v2997
    %v3271 = vsub.f32 %v2677, %v2997
    %v3272 = vsub.f32 %v2682, %v3006
    %v3273 = vsub.f32 %v2687, %v3006
    %v3274 = vsub.f32 %v2692, %v3015
    %v3275 = vsub.f32 %v2697, %v3015
    %v3276 = vsub.f32 %v2702, %v3024
    %v3277 = vsub.f32 %v2707, %v3024
    %v3278 = vsub.f32 %v2712, %v3033
    %v3279 = vsub.f32 %v2717, %v3033
    %v3280 = vsub.f32 %v2722, %v3042
    %v3281 = vsub.f32 %v2727, %v3042
    %v3282 = vsub.f32 %v2732, %v3051
    %v3283 = vsub.f32 %v2737, %v3051
    %v3284 = vsub.f32 %v2742, %v3060
    %v3285 = vsub.f32 %v2747, %v3060
    %v3286 = vsub.f32 %v2752, %v3069
    %v3287 = vsub.f32 %v2757, %v3069
    %v3288 = vsub.f32 %v2762, %v3078
    %v3289 = vsub.f32 %v2767, %v3078
    %v3290 = vsub.f32 %v2772, %v3087
    %v3291 = vsub.f32 %v2777, %v3087
    %v3292 = vsub.f32 %v2782, %v3096
    %v3293 = vsub.f32 %v2787, %v3096
    %v3294 = vsub.f32 %v2792, %v3105
    %v3295 = vsub.f32 %v2797, %v3105
    %v3296 = vsub.f32 %v2802, %v3114
    %v3297 = vsub.f32 %v2807, %v3114
    %v3298 = vsub.f32 %v2812, %v3123
    %v3299 = vsub.f32 %v2817, %v3123
    %v3300 = vsub.f32 %v2822, %v3132
    %v3301 = vsub.f32 %v2827, %v3132
    %v3302 = vsub.f32 %v2832, %v3141
    %v3303 = vsub.f32 %v2837, %v3141
    %v3304 = vsub.f32 %v2842, %v3150
    %v3305 = vsub.f32 %v2847, %v3150
    %v3306 = vsub.f32 %v2852, %v3159
    %v3307 = vsub.f32 %v2857, %v3159
    %v3308 = vsub.f32 %v2862, %v3168
    %v3309 = vsub.f32 %v2867, %v3168
    %v3310 = vsub.f32 %v2872, %v3177
    %v3311 = vsub.f32 %v2877, %v3177
    %v3312 = vsub.f32 %v2882, %v3186
    %v3313 = vsub.f32 %v2887, %v3186
    %v3314 = vsub.f32 %v2892, %v3195
    %v3315 = vsub.f32 %v2897, %v3195
    %v3316 = vsub.f32 %v2902, %v3204
    %v3317 = vsub.f32 %v2907, %v3204
    %v3318 = vsub.f32 %v2912, %v3213
    %v3319 = vsub.f32 %v2917, %v3213
    %v3320 = vsub.f32 %v2922, %v3222
    %v3321 = vsub.f32 %v2927, %v3222
    %v3322 = vsub.f32 %v2932, %v3231
    %v3323 = vsub.f32 %v2937, %v3231
    %v3324 = vsub.f32 %v2942, %v3240
    %v3325 = vsub.f32 %v2947, %v3240
    %v3326 = vsub.f32 %v2952, %v3249
    %v3327 = vsub.f32 %v2957, %v3249
    %v3328 = vsub.f32 %v2962, %v3258
    %v3329 = vsub.f32 %v2967, %v3258
    %v3330 = vsub.f32 %v2972, %v3267
    %v3331 = vsub.f32 %v2977, %v3267
    %v3332 = vmul.f32 %v3268, 1.442695
    %v3333 = vpow.pop %v3332
    %v3334 = vmul.f32 %v3269, 1.442695
    %v3335 = vpow.pop %v3334
    %v3336 = vmul.f32 %v3270, 1.442695
    %v3337 = vpow.pop %v3336
    %v3338 = vmul.f32 %v3271, 1.442695
    %v3339 = vpow.pop %v3338
    %v3340 = vmul.f32 %v3272, 1.442695
    %v3341 = vpow.pop %v3340
    %v3342 = vmul.f32 %v3273, 1.442695
    %v3343 = vpow.pop %v3342
    %v3344 = vmul.f32 %v3274, 1.442695
    %v3345 = vpow.pop %v3344
    %v3346 = vmul.f32 %v3275, 1.442695
    %v3347 = vpow.pop %v3346
    %v3348 = vmul.f32 %v3276, 1.442695
    %v3349 = vpow.pop %v3348
    %v3350 = vmul.f32 %v3277, 1.442695
    %v3351 = vpow.pop %v3350
    %v3352 = vmul.f32 %v3278, 1.442695
    %v3353 = vpow.pop %v3352
    %v3354 = vmul.f32 %v3279, 1.442695
    %v3355 = vpow.pop %v3354
    %v3356 = vmul.f32 %v3280, 1.442695
    %v3357 = vpow.pop %v3356
    %v3358 = vmul.f32 %v3281, 1.442695
    %v3359 = vpow.pop %v3358
    %v3360 = vmul.f32 %v3282, 1.442695
    %v3361 = vpow.pop %v3360
    %v3362 = vmul.f32 %v3283, 1.442695
    %v3363 = vpow.pop %v3362
    %v3364 = vmul.f32 %v3284, 1.442695
    %v3365 = vpow.pop %v3364
    %v3366 = vmul.f32 %v3285, 1.442695
    %v3367 = vpow.pop %v3366
    %v3368 = vmul.f32 %v3286, 1.442695
    %v3369 = vpow.pop %v3368
    %v3370 = vmul.f32 %v3287, 1.442695
    %v3371 = vpow.pop %v3370
    %v3372 = vmul.f32 %v3288, 1.442695
    %v3373 = vpow.pop %v3372
    %v3374 = vmul.f32 %v3289, 1.442695
    %v3375 = vpow.pop %v3374
    %v3376 = vmul.f32 %v3290, 1.442695
    %v3377 = vpow.pop %v3376
    %v3378 = vmul.f32 %v3291, 1.442695
    %v3379 = vpow.pop %v3378
    %v3380 = vmul.f32 %v3292, 1.442695
    %v3381 = vpow.pop %v3380
    %v3382 = vmul.f32 %v3293, 1.442695
    %v3383 = vpow.pop %v3382
    %v3384 = vmul.f32 %v3294, 1.442695
    %v3385 = vpow.pop %v3384
    %v3386 = vmul.f32 %v3295, 1.442695
    %v3387 = vpow.pop %v3386
    %v3388 = vmul.f32 %v3296, 1.442695
    %v3389 = vpow.pop %v3388
    %v3390 = vmul.f32 %v3297, 1.442695
    %v3391 = vpow.pop %v3390
    %v3392 = vmul.f32 %v3298, 1.442695
    %v3393 = vpow.pop %v3392
    %v3394 = vmul.f32 %v3299, 1.442695
    %v3395 = vpow.pop %v3394
    %v3396 = vmul.f32 %v3300, 1.442695
    %v3397 = vpow.pop %v3396
    %v3398 = vmul.f32 %v3301, 1.442695
    %v3399 = vpow.pop %v3398
    %v3400 = vmul.f32 %v3302, 1.442695
    %v3401 = vpow.pop %v3400
    %v3402 = vmul.f32 %v3303, 1.442695
    %v3403 = vpow.pop %v3402
    %v3404 = vmul.f32 %v3304, 1.442695
    %v3405 = vpow.pop %v3404
    %v3406 = vmul.f32 %v3305, 1.442695
    %v3407 = vpow.pop %v3406
    %v3408 = vmul.f32 %v3306, 1.442695
    %v3409 = vpow.pop %v3408
    %v3410 = vmul.f32 %v3307, 1.442695
    %v3411 = vpow.pop %v3410
    %v3412 = vmul.f32 %v3308, 1.442695
    %v3413 = vpow.pop %v3412
    %v3414 = vmul.f32 %v3309, 1.442695
    %v3415 = vpow.pop %v3414
    %v3416 = vmul.f32 %v3310, 1.442695
    %v3417 = vpow.pop %v3416
    %v3418 = vmul.f32 %v3311, 1.442695
    %v3419 = vpow.pop %v3418
    %v3420 = vmul.f32 %v3312, 1.442695
    %v3421 = vpow.pop %v3420
    %v3422 = vmul.f32 %v3313, 1.442695
    %v3423 = vpow.pop %v3422
    %v3424 = vmul.f32 %v3314, 1.442695
    %v3425 = vpow.pop %v3424
    %v3426 = vmul.f32 %v3315, 1.442695
    %v3427 = vpow.pop %v3426
    %v3428 = vmul.f32 %v3316, 1.442695
    %v3429 = vpow.pop %v3428
    %v3430 = vmul.f32 %v3317, 1.442695
    %v3431 = vpow.pop %v3430
    %v3432 = vmul.f32 %v3318, 1.442695
    %v3433 = vpow.pop %v3432
    %v3434 = vmul.f32 %v3319, 1.442695
    %v3435 = vpow.pop %v3434
    %v3436 = vmul.f32 %v3320, 1.442695
    %v3437 = vpow.pop %v3436
    %v3438 = vmul.f32 %v3321, 1.442695
    %v3439 = vpow.pop %v3438
    %v3440 = vmul.f32 %v3322, 1.442695
    %v3441 = vpow.pop %v3440
    %v3442 = vmul.f32 %v3323, 1.442695
    %v3443 = vpow.pop %v3442
    %v3444 = vmul.f32 %v3324, 1.442695
    %v3445 = vpow.pop %v3444
    %v3446 = vmul.f32 %v3325, 1.442695
    %v3447 = vpow.pop %v3446
    %v3448 = vmul.f32 %v3326, 1.442695
    %v3449 = vpow.pop %v3448
    %v3450 = vmul.f32 %v3327, 1.442695
    %v3451 = vpow.pop %v3450
    %v3452 = vmul.f32 %v3328, 1.442695
    %v3453 = vpow.pop %v3452
    %v3454 = vmul.f32 %v3329, 1.442695
    %v3455 = vpow.pop %v3454
    %v3456 = vmul.f32 %v3330, 1.442695
    %v3457 = vpow.pop %v3456
    %v3458 = vmul.f32 %v3331, 1.442695
    %v3459 = vpow.pop %v3458
    %v3460 = vsel %vm957, %v3333, 0.0
    %v3461 = vsel %vm957, %v3335, 0.0
    %v3462 = vadd.f32 %v3460, %v3461
    %v3463 = vrot.slane %v3462, 4
    %v3464 = vadd.f32 %v3462, %v3463
    %v3465 = vrot.slane %v3464, 2
    %v3466 = vadd.f32 %v3464, %v3465
    %v3467 = vrot.slane %v3466, 1
    %v3468 = vadd.f32 %v3466, %v3467
    %v3469 = vsel %vm957, %v3337, 0.0
    %v3470 = vsel %vm957, %v3339, 0.0
    %v3471 = vadd.f32 %v3469, %v3470
    %v3472 = vrot.slane %v3471, 4
    %v3473 = vadd.f32 %v3471, %v3472
    %v3474 = vrot.slane %v3473, 2
    %v3475 = vadd.f32 %v3473, %v3474
    %v3476 = vrot.slane %v3475, 1
    %v3477 = vadd.f32 %v3475, %v3476
    %v3478 = vsel %vm957, %v3341, 0.0
    %v3479 = vsel %vm957, %v3343, 0.0
    %v3480 = vadd.f32 %v3478, %v3479
    %v3481 = vrot.slane %v3480, 4
    %v3482 = vadd.f32 %v3480, %v3481
    %v3483 = vrot.slane %v3482, 2
    %v3484 = vadd.f32 %v3482, %v3483
    %v3485 = vrot.slane %v3484, 1
    %v3486 = vadd.f32 %v3484, %v3485
    %v3487 = vsel %vm957, %v3345, 0.0
    %v3488 = vsel %vm957, %v3347, 0.0
    %v3489 = vadd.f32 %v3487, %v3488
    %v3490 = vrot.slane %v3489, 4
    %v3491 = vadd.f32 %v3489, %v3490
    %v3492 = vrot.slane %v3491, 2
    %v3493 = vadd.f32 %v3491, %v3492
    %v3494 = vrot.slane %v3493, 1
    %v3495 = vadd.f32 %v3493, %v3494
    %v3496 = vsel %vm957, %v3349, 0.0
    %v3497 = vsel %vm957, %v3351, 0.0
    %v3498 = vadd.f32 %v3496, %v3497
    %v3499 = vrot.slane %v3498, 4
    %v3500 = vadd.f32 %v3498, %v3499
    %v3501 = vrot.slane %v3500, 2
    %v3502 = vadd.f32 %v3500, %v3501
    %v3503 = vrot.slane %v3502, 1
    %v3504 = vadd.f32 %v3502, %v3503
    %v3505 = vsel %vm957, %v3353, 0.0
    %v3506 = vsel %vm957, %v3355, 0.0
    %v3507 = vadd.f32 %v3505, %v3506
    %v3508 = vrot.slane %v3507, 4
    %v3509 = vadd.f32 %v3507, %v3508
    %v3510 = vrot.slane %v3509, 2
    %v3511 = vadd.f32 %v3509, %v3510
    %v3512 = vrot.slane %v3511, 1
    %v3513 = vadd.f32 %v3511, %v3512
    %v3514 = vsel %vm957, %v3357, 0.0
    %v3515 = vsel %vm957, %v3359, 0.0
    %v3516 = vadd.f32 %v3514, %v3515
    %v3517 = vrot.slane %v3516, 4
    %v3518 = vadd.f32 %v3516, %v3517
    %v3519 = vrot.slane %v3518, 2
    %v3520 = vadd.f32 %v3518, %v3519
    %v3521 = vrot.slane %v3520, 1
    %v3522 = vadd.f32 %v3520, %v3521
    %v3523 = vsel %vm957, %v3361, 0.0
    %v3524 = vsel %vm957, %v3363, 0.0
    %v3525 = vadd.f32 %v3523, %v3524
    %v3526 = vrot.slane %v3525, 4
    %v3527 = vadd.f32 %v3525, %v3526
    %v3528 = vrot.slane %v3527, 2
    %v3529 = vadd.f32 %v3527, %v3528
    %v3530 = vrot.slane %v3529, 1
    %v3531 = vadd.f32 %v3529, %v3530
    %v3532 = vsel %vm957, %v3365, 0.0
    %v3533 = vsel %vm957, %v3367, 0.0
    %v3534 = vadd.f32 %v3532, %v3533
    %v3535 = vrot.slane %v3534, 4
    %v3536 = vadd.f32 %v3534, %v3535
    %v3537 = vrot.slane %v3536, 2
    %v3538 = vadd.f32 %v3536, %v3537
    %v3539 = vrot.slane %v3538, 1
    %v3540 = vadd.f32 %v3538, %v3539
    %v3541 = vsel %vm957, %v3369, 0.0
    %v3542 = vsel %vm957, %v3371, 0.0
    %v3543 = vadd.f32 %v3541, %v3542
    %v3544 = vrot.slane %v3543, 4
    %v3545 = vadd.f32 %v3543, %v3544
    %v3546 = vrot.slane %v3545, 2
    %v3547 = vadd.f32 %v3545, %v3546
    %v3548 = vrot.slane %v3547, 1
    %v3549 = vadd.f32 %v3547, %v3548
    %v3550 = vsel %vm957, %v3373, 0.0
    %v3551 = vsel %vm957, %v3375, 0.0
    %v3552 = vadd.f32 %v3550, %v3551
    %v3553 = vrot.slane %v3552, 4
    %v3554 = vadd.f32 %v3552, %v3553
    %v3555 = vrot.slane %v3554, 2
    %v3556 = vadd.f32 %v3554, %v3555
    %v3557 = vrot.slane %v3556, 1
    %v3558 = vadd.f32 %v3556, %v3557
    %v3559 = vsel %vm957, %v3377, 0.0
    %v3560 = vsel %vm957, %v3379, 0.0
    %v3561 = vadd.f32 %v3559, %v3560
    %v3562 = vrot.slane %v3561, 4
    %v3563 = vadd.f32 %v3561, %v3562
    %v3564 = vrot.slane %v3563, 2
    %v3565 = vadd.f32 %v3563, %v3564
    %v3566 = vrot.slane %v3565, 1
    %v3567 = vadd.f32 %v3565, %v3566
    %v3568 = vsel %vm957, %v3381, 0.0
    %v3569 = vsel %vm957, %v3383, 0.0
    %v3570 = vadd.f32 %v3568, %v3569
    %v3571 = vrot.slane %v3570, 4
    %v3572 = vadd.f32 %v3570, %v3571
    %v3573 = vrot.slane %v3572, 2
    %v3574 = vadd.f32 %v3572, %v3573
    %v3575 = vrot.slane %v3574, 1
    %v3576 = vadd.f32 %v3574, %v3575
    %v3577 = vsel %vm957, %v3385, 0.0
    %v3578 = vsel %vm957, %v3387, 0.0
    %v3579 = vadd.f32 %v3577, %v3578
    %v3580 = vrot.slane %v3579, 4
    %v3581 = vadd.f32 %v3579, %v3580
    %v3582 = vrot.slane %v3581, 2
    %v3583 = vadd.f32 %v3581, %v3582
    %v3584 = vrot.slane %v3583, 1
    %v3585 = vadd.f32 %v3583, %v3584
    %v3586 = vsel %vm957, %v3389, 0.0
    %v3587 = vsel %vm957, %v3391, 0.0
    %v3588 = vadd.f32 %v3586, %v3587
    %v3589 = vrot.slane %v3588, 4
    %v3590 = vadd.f32 %v3588, %v3589
    %v3591 = vrot.slane %v3590, 2
    %v3592 = vadd.f32 %v3590, %v3591
    %v3593 = vrot.slane %v3592, 1
    %v3594 = vadd.f32 %v3592, %v3593
    %v3595 = vsel %vm957, %v3393, 0.0
    %v3596 = vsel %vm957, %v3395, 0.0
    %v3597 = vadd.f32 %v3595, %v3596
    %v3598 = vrot.slane %v3597, 4
    %v3599 = vadd.f32 %v3597, %v3598
    %v3600 = vrot.slane %v3599, 2
    %v3601 = vadd.f32 %v3599, %v3600
    %v3602 = vrot.slane %v3601, 1
    %v3603 = vadd.f32 %v3601, %v3602
    %v3604 = vsel %vm957, %v3397, 0.0
    %v3605 = vsel %vm957, %v3399, 0.0
    %v3606 = vadd.f32 %v3604, %v3605
    %v3607 = vrot.slane %v3606, 4
    %v3608 = vadd.f32 %v3606, %v3607
    %v3609 = vrot.slane %v3608, 2
    %v3610 = vadd.f32 %v3608, %v3609
    %v3611 = vrot.slane %v3610, 1
    %v3612 = vadd.f32 %v3610, %v3611
    %v3613 = vsel %vm957, %v3401, 0.0
    %v3614 = vsel %vm957, %v3403, 0.0
    %v3615 = vadd.f32 %v3613, %v3614
    %v3616 = vrot.slane %v3615, 4
    %v3617 = vadd.f32 %v3615, %v3616
    %v3618 = vrot.slane %v3617, 2
    %v3619 = vadd.f32 %v3617, %v3618
    %v3620 = vrot.slane %v3619, 1
    %v3621 = vadd.f32 %v3619, %v3620
    %v3622 = vsel %vm957, %v3405, 0.0
    %v3623 = vsel %vm957, %v3407, 0.0
    %v3624 = vadd.f32 %v3622, %v3623
    %v3625 = vrot.slane %v3624, 4
    %v3626 = vadd.f32 %v3624, %v3625
    %v3627 = vrot.slane %v3626, 2
    %v3628 = vadd.f32 %v3626, %v3627
    %v3629 = vrot.slane %v3628, 1
    %v3630 = vadd.f32 %v3628, %v3629
    %v3631 = vsel %vm957, %v3409, 0.0
    %v3632 = vsel %vm957, %v3411, 0.0
    %v3633 = vadd.f32 %v3631, %v3632
    %v3634 = vrot.slane %v3633, 4
    %v3635 = vadd.f32 %v3633, %v3634
    %v3636 = vrot.slane %v3635, 2
    %v3637 = vadd.f32 %v3635, %v3636
    %v3638 = vrot.slane %v3637, 1
    %v3639 = vadd.f32 %v3637, %v3638
    %v3640 = vsel %vm957, %v3413, 0.0
    %v3641 = vsel %vm957, %v3415, 0.0
    %v3642 = vadd.f32 %v3640, %v3641
    %v3643 = vrot.slane %v3642, 4
    %v3644 = vadd.f32 %v3642, %v3643
    %v3645 = vrot.slane %v3644, 2
    %v3646 = vadd.f32 %v3644, %v3645
    %v3647 = vrot.slane %v3646, 1
    %v3648 = vadd.f32 %v3646, %v3647
    %v3649 = vsel %vm957, %v3417, 0.0
    %v3650 = vsel %vm957, %v3419, 0.0
    %v3651 = vadd.f32 %v3649, %v3650
    %v3652 = vrot.slane %v3651, 4
    %v3653 = vadd.f32 %v3651, %v3652
    %v3654 = vrot.slane %v3653, 2
    %v3655 = vadd.f32 %v3653, %v3654
    %v3656 = vrot.slane %v3655, 1
    %v3657 = vadd.f32 %v3655, %v3656
    %v3658 = vsel %vm957, %v3421, 0.0
    %v3659 = vsel %vm957, %v3423, 0.0
    %v3660 = vadd.f32 %v3658, %v3659
    %v3661 = vrot.slane %v3660, 4
    %v3662 = vadd.f32 %v3660, %v3661
    %v3663 = vrot.slane %v3662, 2
    %v3664 = vadd.f32 %v3662, %v3663
    %v3665 = vrot.slane %v3664, 1
    %v3666 = vadd.f32 %v3664, %v3665
    %v3667 = vsel %vm957, %v3425, 0.0
    %v3668 = vsel %vm957, %v3427, 0.0
    %v3669 = vadd.f32 %v3667, %v3668
    %v3670 = vrot.slane %v3669, 4
    %v3671 = vadd.f32 %v3669, %v3670
    %v3672 = vrot.slane %v3671, 2
    %v3673 = vadd.f32 %v3671, %v3672
    %v3674 = vrot.slane %v3673, 1
    %v3675 = vadd.f32 %v3673, %v3674
    %v3676 = vsel %vm957, %v3429, 0.0
    %v3677 = vsel %vm957, %v3431, 0.0
    %v3678 = vadd.f32 %v3676, %v3677
    %v3679 = vrot.slane %v3678, 4
    %v3680 = vadd.f32 %v3678, %v3679
    %v3681 = vrot.slane %v3680, 2
    %v3682 = vadd.f32 %v3680, %v3681
    %v3683 = vrot.slane %v3682, 1
    %v3684 = vadd.f32 %v3682, %v3683
    %v3685 = vsel %vm957, %v3433, 0.0
    %v3686 = vsel %vm957, %v3435, 0.0
    %v3687 = vadd.f32 %v3685, %v3686
    %v3688 = vrot.slane %v3687, 4
    %v3689 = vadd.f32 %v3687, %v3688
    %v3690 = vrot.slane %v3689, 2
    %v3691 = vadd.f32 %v3689, %v3690
    %v3692 = vrot.slane %v3691, 1
    %v3693 = vadd.f32 %v3691, %v3692
    %v3694 = vsel %vm957, %v3437, 0.0
    %v3695 = vsel %vm957, %v3439, 0.0
    %v3696 = vadd.f32 %v3694, %v3695
    %v3697 = vrot.slane %v3696, 4
    %v3698 = vadd.f32 %v3696, %v3697
    %v3699 = vrot.slane %v3698, 2
    %v3700 = vadd.f32 %v3698, %v3699
    %v3701 = vrot.slane %v3700, 1
    %v3702 = vadd.f32 %v3700, %v3701
    %v3703 = vsel %vm957, %v3441, 0.0
    %v3704 = vsel %vm957, %v3443, 0.0
    %v3705 = vadd.f32 %v3703, %v3704
    %v3706 = vrot.slane %v3705, 4
    %v3707 = vadd.f32 %v3705, %v3706
    %v3708 = vrot.slane %v3707, 2
    %v3709 = vadd.f32 %v3707, %v3708
    %v3710 = vrot.slane %v3709, 1
    %v3711 = vadd.f32 %v3709, %v3710
    %v3712 = vsel %vm957, %v3445, 0.0
    %v3713 = vsel %vm957, %v3447, 0.0
    %v3714 = vadd.f32 %v3712, %v3713
    %v3715 = vrot.slane %v3714, 4
    %v3716 = vadd.f32 %v3714, %v3715
    %v3717 = vrot.slane %v3716, 2
    %v3718 = vadd.f32 %v3716, %v3717
    %v3719 = vrot.slane %v3718, 1
    %v3720 = vadd.f32 %v3718, %v3719
    %v3721 = vsel %vm957, %v3449, 0.0
    %v3722 = vsel %vm957, %v3451, 0.0
    %v3723 = vadd.f32 %v3721, %v3722
    %v3724 = vrot.slane %v3723, 4
    %v3725 = vadd.f32 %v3723, %v3724
    %v3726 = vrot.slane %v3725, 2
    %v3727 = vadd.f32 %v3725, %v3726
    %v3728 = vrot.slane %v3727, 1
    %v3729 = vadd.f32 %v3727, %v3728
    %v3730 = vsel %vm957, %v3453, 0.0
    %v3731 = vsel %vm957, %v3455, 0.0
    %v3732 = vadd.f32 %v3730, %v3731
    %v3733 = vrot.slane %v3732, 4
    %v3734 = vadd.f32 %v3732, %v3733
    %v3735 = vrot.slane %v3734, 2
    %v3736 = vadd.f32 %v3734, %v3735
    %v3737 = vrot.slane %v3736, 1
    %v3738 = vadd.f32 %v3736, %v3737
    %v3739 = vsel %vm957, %v3457, 0.0
    %v3740 = vsel %vm957, %v3459, 0.0
    %v3741 = vadd.f32 %v3739, %v3740
    %v3742 = vrot.slane %v3741, 4
    %v3743 = vadd.f32 %v3741, %v3742
    %v3744 = vrot.slane %v3743, 2
    %v3745 = vadd.f32 %v3743, %v3744
    %v3746 = vrot.slane %v3745, 1
    %v3747 = vadd.f32 %v3745, %v3746
    %v3748 = vrcp.pop %v3468
    %v3749 = vrcp.pop %v3477
    %v3750 = vrcp.pop %v3486
    %v3751 = vrcp.pop %v3495
    %v3752 = vrcp.pop %v3504
    %v3753 = vrcp.pop %v3513
    %v3754 = vrcp.pop %v3522
    %v3755 = vrcp.pop %v3531
    %v3756 = vrcp.pop %v3540
    %v3757 = vrcp.pop %v3549
    %v3758 = vrcp.pop %v3558
    %v3759 = vrcp.pop %v3567
    %v3760 = vrcp.pop %v3576
    %v3761 = vrcp.pop %v3585
    %v3762 = vrcp.pop %v3594
    %v3763 = vrcp.pop %v3603
    %v3764 = vrcp.pop %v3612
    %v3765 = vrcp.pop %v3621
    %v3766 = vrcp.pop %v3630
    %v3767 = vrcp.pop %v3639
    %v3768 = vrcp.pop %v3648
    %v3769 = vrcp.pop %v3657
    %v3770 = vrcp.pop %v3666
    %v3771 = vrcp.pop %v3675
    %v3772 = vrcp.pop %v3684
    %v3773 = vrcp.pop %v3693
    %v3774 = vrcp.pop %v3702
    %v3775 = vrcp.pop %v3711
    %v3776 = vrcp.pop %v3720
    %v3777 = vrcp.pop %v3729
    %v3778 = vrcp.pop %v3738
    %v3779 = vrcp.pop %v3747
    %3844 = vrot.lane.b32.xlu0 %v1907, 64
    %v3845 = vpop.permute.xlu0 %3844
    %3846 = vrot.lane.b32.xlu0 %v1908, 64
    %v3847 = vpop.permute.xlu0 %3846
    %3848 = vrot.lane.b32.xlu0 %v1909, 64
    %v3849 = vpop.permute.xlu0 %3848
    %3850 = vrot.lane.b32.xlu0 %v1910, 64
    %v3851 = vpop.permute.xlu0 %3850
    %3852 = vrot.lane.b32.xlu0 %v1911, 64
    %v3853 = vpop.permute.xlu0 %3852
    %3854 = vrot.lane.b32.xlu0 %v1912, 64
    %v3855 = vpop.permute.xlu0 %3854
    %3856 = vrot.lane.b32.xlu0 %v1913, 64
    %v3857 = vpop.permute.xlu0 %3856
    %3858 = vrot.lane.b32.xlu0 %v1914, 64
    %v3859 = vpop.permute.xlu0 %3858
    %3860 = vrot.lane.b32.xlu0 %v1915, 64
    %v3861 = vpop.permute.xlu0 %3860
    %3862 = vrot.lane.b32.xlu0 %v1916, 64
    %v3863 = vpop.permute.xlu0 %3862
    %3864 = vrot.lane.b32.xlu0 %v1917, 64
    %v3865 = vpop.permute.xlu0 %3864
    %3866 = vrot.lane.b32.xlu0 %v1918, 64
    %v3867 = vpop.permute.xlu0 %3866
    %3868 = vrot.lane.b32.xlu0 %v1919, 64
    %v3869 = vpop.permute.xlu0 %3868
    %3870 = vrot.lane.b32.xlu0 %v1920, 64
    %v3871 = vpop.permute.xlu0 %3870
    %3872 = vrot.lane.b32.xlu0 %v1921, 64
    %v3873 = vpop.permute.xlu0 %3872
    %3874 = vrot.lane.b32.xlu0 %v1922, 64
    %v3875 = vpop.permute.xlu0 %3874
    %3876 = vrot.lane.b32.xlu0 %v1923, 64
    %v3877 = vpop.permute.xlu0 %3876
    %3878 = vrot.lane.b32.xlu0 %v1924, 64
    %v3879 = vpop.permute.xlu0 %3878
    %3880 = vrot.lane.b32.xlu0 %v1925, 64
    %v3881 = vpop.permute.xlu0 %3880
    %3882 = vrot.lane.b32.xlu0 %v1926, 64
    %v3883 = vpop.permute.xlu0 %3882
    %3884 = vrot.lane.b32.xlu0 %v1927, 64
    %v3885 = vpop.permute.xlu0 %3884
    %3886 = vrot.lane.b32.xlu0 %v1928, 64
    %v3887 = vpop.permute.xlu0 %3886
    %3888 = vrot.lane.b32.xlu0 %v1929, 64
    %v3889 = vpop.permute.xlu0 %3888
    %3890 = vrot.lane.b32.xlu0 %v1930, 64
    %v3891 = vpop.permute.xlu0 %3890
    %3892 = vrot.lane.b32.xlu0 %v1931, 64
    %v3893 = vpop.permute.xlu0 %3892
    %3894 = vrot.lane.b32.xlu0 %v1932, 64
    %v3895 = vpop.permute.xlu0 %3894
    %3896 = vrot.lane.b32.xlu0 %v1933, 64
    %v3897 = vpop.permute.xlu0 %3896
    %3898 = vrot.lane.b32.xlu0 %v1934, 64
    %v3899 = vpop.permute.xlu0 %3898
    %3900 = vrot.lane.b32.xlu0 %v1935, 64
    %v3901 = vpop.permute.xlu0 %3900
    %3902 = vrot.lane.b32.xlu0 %v1936, 64
    %v3903 = vpop.permute.xlu0 %3902
    %3904 = vrot.lane.b32.xlu0 %v1937, 64
    %v3905 = vpop.permute.xlu0 %3904
    %3906 = vrot.lane.b32.xlu0 %v1938, 64
    %v3907 = vpop.permute.xlu0 %3906
    %3908 = vrot.lane.b32.xlu0 %v1939, 64
    %v3909 = vpop.permute.xlu0 %3908
    %3910 = vrot.lane.b32.xlu0 %v1940, 64
    %v3911 = vpop.permute.xlu0 %3910
    %3912 = vrot.lane.b32.xlu0 %v1941, 64
    %v3913 = vpop.permute.xlu0 %3912
    %3914 = vrot.lane.b32.xlu0 %v1942, 64
    %v3915 = vpop.permute.xlu0 %3914
    %3916 = vrot.lane.b32.xlu0 %v1943, 64
    %v3917 = vpop.permute.xlu0 %3916
    %3918 = vrot.lane.b32.xlu0 %v1944, 64
    %v3919 = vpop.permute.xlu0 %3918
    %3920 = vrot.lane.b32.xlu0 %v1945, 64
    %v3921 = vpop.permute.xlu0 %3920
    %3922 = vrot.lane.b32.xlu0 %v1946, 64
    %v3923 = vpop.permute.xlu0 %3922
    %3924 = vrot.lane.b32.xlu0 %v1947, 64
    %v3925 = vpop.permute.xlu0 %3924
    %3926 = vrot.lane.b32.xlu0 %v1948, 64
    %v3927 = vpop.permute.xlu0 %3926
    %3928 = vrot.lane.b32.xlu0 %v1949, 64
    %v3929 = vpop.permute.xlu0 %3928
    %3930 = vrot.lane.b32.xlu0 %v1950, 64
    %v3931 = vpop.permute.xlu0 %3930
    %3932 = vrot.lane.b32.xlu0 %v1951, 64
    %v3933 = vpop.permute.xlu0 %3932
    %3934 = vrot.lane.b32.xlu0 %v1952, 64
    %v3935 = vpop.permute.xlu0 %3934
    %3936 = vrot.lane.b32.xlu0 %v1953, 64
    %v3937 = vpop.permute.xlu0 %3936
    %3938 = vrot.lane.b32.xlu0 %v1954, 64
    %v3939 = vpop.permute.xlu0 %3938
    %3940 = vrot.lane.b32.xlu0 %v1955, 64
    %v3941 = vpop.permute.xlu0 %3940
    %3942 = vrot.lane.b32.xlu0 %v1956, 64
    %v3943 = vpop.permute.xlu0 %3942
    %3944 = vrot.lane.b32.xlu0 %v1957, 64
    %v3945 = vpop.permute.xlu0 %3944
    %3946 = vrot.lane.b32.xlu0 %v1958, 64
    %v3947 = vpop.permute.xlu0 %3946
    %3948 = vrot.lane.b32.xlu0 %v1959, 64
    %v3949 = vpop.permute.xlu0 %3948
    %3950 = vrot.lane.b32.xlu0 %v1960, 64
    %v3951 = vpop.permute.xlu0 %3950
    %3952 = vrot.lane.b32.xlu0 %v1961, 64
    %v3953 = vpop.permute.xlu0 %3952
    %3954 = vrot.lane.b32.xlu0 %v1962, 64
    %v3955 = vpop.permute.xlu0 %3954
    %3956 = vrot.lane.b32.xlu0 %v1963, 64
    %v3957 = vpop.permute.xlu0 %3956
    %3958 = vrot.lane.b32.xlu0 %v1964, 64
    %v3959 = vpop.permute.xlu0 %3958
    %3960 = vrot.lane.b32.xlu0 %v1965, 64
    %v3961 = vpop.permute.xlu0 %3960
    %3962 = vrot.lane.b32.xlu0 %v1966, 64
    %v3963 = vpop.permute.xlu0 %3962
    %3964 = vrot.lane.b32.xlu0 %v1967, 64
    %v3965 = vpop.permute.xlu0 %3964
    %3966 = vrot.lane.b32.xlu0 %v1968, 64
    %v3967 = vpop.permute.xlu0 %3966
    %3968 = vrot.lane.b32.xlu0 %v1969, 64
    %v3969 = vpop.permute.xlu0 %3968
    %3970 = vrot.lane.b32.xlu0 %v1970, 64
    %v3971 = vpop.permute.xlu0 %3970
    %v4036 = vmul.f32 %v3333, %v3845
    %v4037 = vmul.f32 %v3335, %v3847
    %v4038 = vmul.f32 %v3337, %v3849
    %v4039 = vmul.f32 %v3339, %v3851
    %v4040 = vmul.f32 %v3341, %v3853
    %v4041 = vmul.f32 %v3343, %v3855
    %v4042 = vmul.f32 %v3345, %v3857
    %v4043 = vmul.f32 %v3347, %v3859
    %v4044 = vmul.f32 %v3349, %v3861
    %v4045 = vmul.f32 %v3351, %v3863
    %v4046 = vmul.f32 %v3353, %v3865
    %v4047 = vmul.f32 %v3355, %v3867
    %v4048 = vmul.f32 %v3357, %v3869
    %v4049 = vmul.f32 %v3359, %v3871
    %v4050 = vmul.f32 %v3361, %v3873
    %v4051 = vmul.f32 %v3363, %v3875
    %v4052 = vmul.f32 %v3365, %v3877
    %v4053 = vmul.f32 %v3367, %v3879
    %v4054 = vmul.f32 %v3369, %v3881
    %v4055 = vmul.f32 %v3371, %v3883
    %v4056 = vmul.f32 %v3373, %v3885
    %v4057 = vmul.f32 %v3375, %v3887
    %v4058 = vmul.f32 %v3377, %v3889
    %v4059 = vmul.f32 %v3379, %v3891
    %v4060 = vmul.f32 %v3381, %v3893
    %v4061 = vmul.f32 %v3383, %v3895
    %v4062 = vmul.f32 %v3385, %v3897
    %v4063 = vmul.f32 %v3387, %v3899
    %v4064 = vmul.f32 %v3389, %v3901
    %v4065 = vmul.f32 %v3391, %v3903
    %v4066 = vmul.f32 %v3393, %v3905
    %v4067 = vmul.f32 %v3395, %v3907
    %v4068 = vmul.f32 %v3397, %v3909
    %v4069 = vmul.f32 %v3399, %v3911
    %v4070 = vmul.f32 %v3401, %v3913
    %v4071 = vmul.f32 %v3403, %v3915
    %v4072 = vmul.f32 %v3405, %v3917
    %v4073 = vmul.f32 %v3407, %v3919
    %v4074 = vmul.f32 %v3409, %v3921
    %v4075 = vmul.f32 %v3411, %v3923
    %v4076 = vmul.f32 %v3413, %v3925
    %v4077 = vmul.f32 %v3415, %v3927
    %v4078 = vmul.f32 %v3417, %v3929
    %v4079 = vmul.f32 %v3419, %v3931
    %v4080 = vmul.f32 %v3421, %v3933
    %v4081 = vmul.f32 %v3423, %v3935
    %v4082 = vmul.f32 %v3425, %v3937
    %v4083 = vmul.f32 %v3427, %v3939
    %v4084 = vmul.f32 %v3429, %v3941
    %v4085 = vmul.f32 %v3431, %v3943
    %v4086 = vmul.f32 %v3433, %v3945
    %v4087 = vmul.f32 %v3435, %v3947
    %v4088 = vmul.f32 %v3437, %v3949
    %v4089 = vmul.f32 %v3439, %v3951
    %v4090 = vmul.f32 %v3441, %v3953
    %v4091 = vmul.f32 %v3443, %v3955
    %v4092 = vmul.f32 %v3445, %v3957
    %v4093 = vmul.f32 %v3447, %v3959
    %v4094 = vmul.f32 %v3449, %v3961
    %v4095 = vmul.f32 %v3451, %v3963
    %v4096 = vmul.f32 %v3453, %v3965
    %v4097 = vmul.f32 %v3455, %v3967
    %v4098 = vmul.f32 %v3457, %v3969
    %v4099 = vmul.f32 %v3459, %v3971
    %v4100 = vsel %vm957, %v4036, 0.0
    %v4101 = vsel %vm957, %v4037, 0.0
    %v4102 = vadd.f32 %v4100, %v4101
    %v4103 = vrot.slane %v4102, 4
    %v4104 = vadd.f32 %v4102, %v4103
    %v4105 = vrot.slane %v4104, 2
    %v4106 = vadd.f32 %v4104, %v4105
    %v4107 = vrot.slane %v4106, 1
    %v4108 = vadd.f32 %v4106, %v4107
    %v4109 = vsel %vm957, %v4038, 0.0
    %v4110 = vsel %vm957, %v4039, 0.0
    %v4111 = vadd.f32 %v4109, %v4110
    %v4112 = vrot.slane %v4111, 4
    %v4113 = vadd.f32 %v4111, %v4112
    %v4114 = vrot.slane %v4113, 2
    %v4115 = vadd.f32 %v4113, %v4114
    %v4116 = vrot.slane %v4115, 1
    %v4117 = vadd.f32 %v4115, %v4116
    %v4118 = vsel %vm957, %v4040, 0.0
    %v4119 = vsel %vm957, %v4041, 0.0
    %v4120 = vadd.f32 %v4118, %v4119
    %v4121 = vrot.slane %v4120, 4
    %v4122 = vadd.f32 %v4120, %v4121
    %v4123 = vrot.slane %v4122, 2
    %v4124 = vadd.f32 %v4122, %v4123
    %v4125 = vrot.slane %v4124, 1
    %v4126 = vadd.f32 %v4124, %v4125
    %v4127 = vsel %vm957, %v4042, 0.0
    %v4128 = vsel %vm957, %v4043, 0.0
    %v4129 = vadd.f32 %v4127, %v4128
    %v4130 = vrot.slane %v4129, 4
    %v4131 = vadd.f32 %v4129, %v4130
    %v4132 = vrot.slane %v4131, 2
    %v4133 = vadd.f32 %v4131, %v4132
    %v4134 = vrot.slane %v4133, 1
    %v4135 = vadd.f32 %v4133, %v4134
    %v4136 = vsel %vm957, %v4044, 0.0
    %v4137 = vsel %vm957, %v4045, 0.0
    %v4138 = vadd.f32 %v4136, %v4137
    %v4139 = vrot.slane %v4138, 4
    %v4140 = vadd.f32 %v4138, %v4139
    %v4141 = vrot.slane %v4140, 2
    %v4142 = vadd.f32 %v4140, %v4141
    %v4143 = vrot.slane %v4142, 1
    %v4144 = vadd.f32 %v4142, %v4143
    %v4145 = vsel %vm957, %v4046, 0.0
    %v4146 = vsel %vm957, %v4047, 0.0
    %v4147 = vadd.f32 %v4145, %v4146
    %v4148 = vrot.slane %v4147, 4
    %v4149 = vadd.f32 %v4147, %v4148
    %v4150 = vrot.slane %v4149, 2
    %v4151 = vadd.f32 %v4149, %v4150
    %v4152 = vrot.slane %v4151, 1
    %v4153 = vadd.f32 %v4151, %v4152
    %v4154 = vsel %vm957, %v4048, 0.0
    %v4155 = vsel %vm957, %v4049, 0.0
    %v4156 = vadd.f32 %v4154, %v4155
    %v4157 = vrot.slane %v4156, 4
    %v4158 = vadd.f32 %v4156, %v4157
    %v4159 = vrot.slane %v4158, 2
    %v4160 = vadd.f32 %v4158, %v4159
    %v4161 = vrot.slane %v4160, 1
    %v4162 = vadd.f32 %v4160, %v4161
    %v4163 = vsel %vm957, %v4050, 0.0
    %v4164 = vsel %vm957, %v4051, 0.0
    %v4165 = vadd.f32 %v4163, %v4164
    %v4166 = vrot.slane %v4165, 4
    %v4167 = vadd.f32 %v4165, %v4166
    %v4168 = vrot.slane %v4167, 2
    %v4169 = vadd.f32 %v4167, %v4168
    %v4170 = vrot.slane %v4169, 1
    %v4171 = vadd.f32 %v4169, %v4170
    %v4172 = vsel %vm957, %v4052, 0.0
    %v4173 = vsel %vm957, %v4053, 0.0
    %v4174 = vadd.f32 %v4172, %v4173
    %v4175 = vrot.slane %v4174, 4
    %v4176 = vadd.f32 %v4174, %v4175
    %v4177 = vrot.slane %v4176, 2
    %v4178 = vadd.f32 %v4176, %v4177
    %v4179 = vrot.slane %v4178, 1
    %v4180 = vadd.f32 %v4178, %v4179
    %v4181 = vsel %vm957, %v4054, 0.0
    %v4182 = vsel %vm957, %v4055, 0.0
    %v4183 = vadd.f32 %v4181, %v4182
    %v4184 = vrot.slane %v4183, 4
    %v4185 = vadd.f32 %v4183, %v4184
    %v4186 = vrot.slane %v4185, 2
    %v4187 = vadd.f32 %v4185, %v4186
    %v4188 = vrot.slane %v4187, 1
    %v4189 = vadd.f32 %v4187, %v4188
    %v4190 = vsel %vm957, %v4056, 0.0
    %v4191 = vsel %vm957, %v4057, 0.0
    %v4192 = vadd.f32 %v4190, %v4191
    %v4193 = vrot.slane %v4192, 4
    %v4194 = vadd.f32 %v4192, %v4193
    %v4195 = vrot.slane %v4194, 2
    %v4196 = vadd.f32 %v4194, %v4195
    %v4197 = vrot.slane %v4196, 1
    %v4198 = vadd.f32 %v4196, %v4197
    %v4199 = vsel %vm957, %v4058, 0.0
    %v4200 = vsel %vm957, %v4059, 0.0
    %v4201 = vadd.f32 %v4199, %v4200
    %v4202 = vrot.slane %v4201, 4
    %v4203 = vadd.f32 %v4201, %v4202
    %v4204 = vrot.slane %v4203, 2
    %v4205 = vadd.f32 %v4203, %v4204
    %v4206 = vrot.slane %v4205, 1
    %v4207 = vadd.f32 %v4205, %v4206
    %v4208 = vsel %vm957, %v4060, 0.0
    %v4209 = vsel %vm957, %v4061, 0.0
    %v4210 = vadd.f32 %v4208, %v4209
    %v4211 = vrot.slane %v4210, 4
    %v4212 = vadd.f32 %v4210, %v4211
    %v4213 = vrot.slane %v4212, 2
    %v4214 = vadd.f32 %v4212, %v4213
    %v4215 = vrot.slane %v4214, 1
    %v4216 = vadd.f32 %v4214, %v4215
    %v4217 = vsel %vm957, %v4062, 0.0
    %v4218 = vsel %vm957, %v4063, 0.0
    %v4219 = vadd.f32 %v4217, %v4218
    %v4220 = vrot.slane %v4219, 4
    %v4221 = vadd.f32 %v4219, %v4220
    %v4222 = vrot.slane %v4221, 2
    %v4223 = vadd.f32 %v4221, %v4222
    %v4224 = vrot.slane %v4223, 1
    %v4225 = vadd.f32 %v4223, %v4224
    %v4226 = vsel %vm957, %v4064, 0.0
    %v4227 = vsel %vm957, %v4065, 0.0
    %v4228 = vadd.f32 %v4226, %v4227
    %v4229 = vrot.slane %v4228, 4
    %v4230 = vadd.f32 %v4228, %v4229
    %v4231 = vrot.slane %v4230, 2
    %v4232 = vadd.f32 %v4230, %v4231
    %v4233 = vrot.slane %v4232, 1
    %v4234 = vadd.f32 %v4232, %v4233
    %v4235 = vsel %vm957, %v4066, 0.0
    %v4236 = vsel %vm957, %v4067, 0.0
    %v4237 = vadd.f32 %v4235, %v4236
    %v4238 = vrot.slane %v4237, 4
    %v4239 = vadd.f32 %v4237, %v4238
    %v4240 = vrot.slane %v4239, 2
    %v4241 = vadd.f32 %v4239, %v4240
    %v4242 = vrot.slane %v4241, 1
    %v4243 = vadd.f32 %v4241, %v4242
    %v4244 = vsel %vm957, %v4068, 0.0
    %v4245 = vsel %vm957, %v4069, 0.0
    %v4246 = vadd.f32 %v4244, %v4245
    %v4247 = vrot.slane %v4246, 4
    %v4248 = vadd.f32 %v4246, %v4247
    %v4249 = vrot.slane %v4248, 2
    %v4250 = vadd.f32 %v4248, %v4249
    %v4251 = vrot.slane %v4250, 1
    %v4252 = vadd.f32 %v4250, %v4251
    %v4253 = vsel %vm957, %v4070, 0.0
    %v4254 = vsel %vm957, %v4071, 0.0
    %v4255 = vadd.f32 %v4253, %v4254
    %v4256 = vrot.slane %v4255, 4
    %v4257 = vadd.f32 %v4255, %v4256
    %v4258 = vrot.slane %v4257, 2
    %v4259 = vadd.f32 %v4257, %v4258
    %v4260 = vrot.slane %v4259, 1
    %v4261 = vadd.f32 %v4259, %v4260
    %v4262 = vsel %vm957, %v4072, 0.0
    %v4263 = vsel %vm957, %v4073, 0.0
    %v4264 = vadd.f32 %v4262, %v4263
    %v4265 = vrot.slane %v4264, 4
    %v4266 = vadd.f32 %v4264, %v4265
    %v4267 = vrot.slane %v4266, 2
    %v4268 = vadd.f32 %v4266, %v4267
    %v4269 = vrot.slane %v4268, 1
    %v4270 = vadd.f32 %v4268, %v4269
    %v4271 = vsel %vm957, %v4074, 0.0
    %v4272 = vsel %vm957, %v4075, 0.0
    %v4273 = vadd.f32 %v4271, %v4272
    %v4274 = vrot.slane %v4273, 4
    %v4275 = vadd.f32 %v4273, %v4274
    %v4276 = vrot.slane %v4275, 2
    %v4277 = vadd.f32 %v4275, %v4276
    %v4278 = vrot.slane %v4277, 1
    %v4279 = vadd.f32 %v4277, %v4278
    %v4280 = vsel %vm957, %v4076, 0.0
    %v4281 = vsel %vm957, %v4077, 0.0
    %v4282 = vadd.f32 %v4280, %v4281
    %v4283 = vrot.slane %v4282, 4
    %v4284 = vadd.f32 %v4282, %v4283
    %v4285 = vrot.slane %v4284, 2
    %v4286 = vadd.f32 %v4284, %v4285
    %v4287 = vrot.slane %v4286, 1
    %v4288 = vadd.f32 %v4286, %v4287
    %v4289 = vsel %vm957, %v4078, 0.0
    %v4290 = vsel %vm957, %v4079, 0.0
    %v4291 = vadd.f32 %v4289, %v4290
    %v4292 = vrot.slane %v4291, 4
    %v4293 = vadd.f32 %v4291, %v4292
    %v4294 = vrot.slane %v4293, 2
    %v4295 = vadd.f32 %v4293, %v4294
    %v4296 = vrot.slane %v4295, 1
    %v4297 = vadd.f32 %v4295, %v4296
    %v4298 = vsel %vm957, %v4080, 0.0
    %v4299 = vsel %vm957, %v4081, 0.0
    %v4300 = vadd.f32 %v4298, %v4299
    %v4301 = vrot.slane %v4300, 4
    %v4302 = vadd.f32 %v4300, %v4301
    %v4303 = vrot.slane %v4302, 2
    %v4304 = vadd.f32 %v4302, %v4303
    %v4305 = vrot.slane %v4304, 1
    %v4306 = vadd.f32 %v4304, %v4305
    %v4307 = vsel %vm957, %v4082, 0.0
    %v4308 = vsel %vm957, %v4083, 0.0
    %v4309 = vadd.f32 %v4307, %v4308
    %v4310 = vrot.slane %v4309, 4
    %v4311 = vadd.f32 %v4309, %v4310
    %v4312 = vrot.slane %v4311, 2
    %v4313 = vadd.f32 %v4311, %v4312
    %v4314 = vrot.slane %v4313, 1
    %v4315 = vadd.f32 %v4313, %v4314
    %v4316 = vsel %vm957, %v4084, 0.0
    %v4317 = vsel %vm957, %v4085, 0.0
    %v4318 = vadd.f32 %v4316, %v4317
    %v4319 = vrot.slane %v4318, 4
    %v4320 = vadd.f32 %v4318, %v4319
    %v4321 = vrot.slane %v4320, 2
    %v4322 = vadd.f32 %v4320, %v4321
    %v4323 = vrot.slane %v4322, 1
    %v4324 = vadd.f32 %v4322, %v4323
    %v4325 = vsel %vm957, %v4086, 0.0
    %v4326 = vsel %vm957, %v4087, 0.0
    %v4327 = vadd.f32 %v4325, %v4326
    %v4328 = vrot.slane %v4327, 4
    %v4329 = vadd.f32 %v4327, %v4328
    %v4330 = vrot.slane %v4329, 2
    %v4331 = vadd.f32 %v4329, %v4330
    %v4332 = vrot.slane %v4331, 1
    %v4333 = vadd.f32 %v4331, %v4332
    %v4334 = vsel %vm957, %v4088, 0.0
    %v4335 = vsel %vm957, %v4089, 0.0
    %v4336 = vadd.f32 %v4334, %v4335
    %v4337 = vrot.slane %v4336, 4
    %v4338 = vadd.f32 %v4336, %v4337
    %v4339 = vrot.slane %v4338, 2
    %v4340 = vadd.f32 %v4338, %v4339
    %v4341 = vrot.slane %v4340, 1
    %v4342 = vadd.f32 %v4340, %v4341
    %v4343 = vsel %vm957, %v4090, 0.0
    %v4344 = vsel %vm957, %v4091, 0.0
    %v4345 = vadd.f32 %v4343, %v4344
    %v4346 = vrot.slane %v4345, 4
    %v4347 = vadd.f32 %v4345, %v4346
    %v4348 = vrot.slane %v4347, 2
    %v4349 = vadd.f32 %v4347, %v4348
    %v4350 = vrot.slane %v4349, 1
    %v4351 = vadd.f32 %v4349, %v4350
    %v4352 = vsel %vm957, %v4092, 0.0
    %v4353 = vsel %vm957, %v4093, 0.0
    %v4354 = vadd.f32 %v4352, %v4353
    %v4355 = vrot.slane %v4354, 4
    %v4356 = vadd.f32 %v4354, %v4355
    %v4357 = vrot.slane %v4356, 2
    %v4358 = vadd.f32 %v4356, %v4357
    %v4359 = vrot.slane %v4358, 1
    %v4360 = vadd.f32 %v4358, %v4359
    %v4361 = vsel %vm957, %v4094, 0.0
    %v4362 = vsel %vm957, %v4095, 0.0
    %v4363 = vadd.f32 %v4361, %v4362
    %v4364 = vrot.slane %v4363, 4
    %v4365 = vadd.f32 %v4363, %v4364
    %v4366 = vrot.slane %v4365, 2
    %v4367 = vadd.f32 %v4365, %v4366
    %v4368 = vrot.slane %v4367, 1
    %v4369 = vadd.f32 %v4367, %v4368
    %v4370 = vsel %vm957, %v4096, 0.0
    %v4371 = vsel %vm957, %v4097, 0.0
    %v4372 = vadd.f32 %v4370, %v4371
    %v4373 = vrot.slane %v4372, 4
    %v4374 = vadd.f32 %v4372, %v4373
    %v4375 = vrot.slane %v4374, 2
    %v4376 = vadd.f32 %v4374, %v4375
    %v4377 = vrot.slane %v4376, 1
    %v4378 = vadd.f32 %v4376, %v4377
    %v4379 = vsel %vm957, %v4098, 0.0
    %v4380 = vsel %vm957, %v4099, 0.0
    %v4381 = vadd.f32 %v4379, %v4380
    %v4382 = vrot.slane %v4381, 4
    %v4383 = vadd.f32 %v4381, %v4382
    %v4384 = vrot.slane %v4383, 2
    %v4385 = vadd.f32 %v4383, %v4384
    %v4386 = vrot.slane %v4385, 1
    %v4387 = vadd.f32 %v4385, %v4386
    %v4388 = vmul.f32 %v4108, %v3748
    %v4389 = vmul.f32 %v4117, %v3749
    %v4390 = vmul.f32 %v4126, %v3750
    %v4391 = vmul.f32 %v4135, %v3751
    %v4392 = vmul.f32 %v4144, %v3752
    %v4393 = vmul.f32 %v4153, %v3753
    %v4394 = vmul.f32 %v4162, %v3754
    %v4395 = vmul.f32 %v4171, %v3755
    %v4396 = vmul.f32 %v4180, %v3756
    %v4397 = vmul.f32 %v4189, %v3757
    %v4398 = vmul.f32 %v4198, %v3758
    %v4399 = vmul.f32 %v4207, %v3759
    %v4400 = vmul.f32 %v4216, %v3760
    %v4401 = vmul.f32 %v4225, %v3761
    %v4402 = vmul.f32 %v4234, %v3762
    %v4403 = vmul.f32 %v4243, %v3763
    %v4404 = vmul.f32 %v4252, %v3764
    %v4405 = vmul.f32 %v4261, %v3765
    %v4406 = vmul.f32 %v4270, %v3766
    %v4407 = vmul.f32 %v4279, %v3767
    %v4408 = vmul.f32 %v4288, %v3768
    %v4409 = vmul.f32 %v4297, %v3769
    %v4410 = vmul.f32 %v4306, %v3770
    %v4411 = vmul.f32 %v4315, %v3771
    %v4412 = vmul.f32 %v4324, %v3772
    %v4413 = vmul.f32 %v4333, %v3773
    %v4414 = vmul.f32 %v4342, %v3774
    %v4415 = vmul.f32 %v4351, %v3775
    %v4416 = vmul.f32 %v4360, %v3776
    %v4417 = vmul.f32 %v4369, %v3777
    %v4418 = vmul.f32 %v4378, %v3778
    %v4419 = vmul.f32 %v4387, %v3779
    %v4420 = vpack.c.bf16 %v4388, %v4388
    %v4421 = vpack.c.bf16 %v4389, %v4389
    %v4422 = vpack.c.bf16 %v4390, %v4390
    %v4423 = vpack.c.bf16 %v4391, %v4391
    %v4424 = vpack.c.bf16 %v4392, %v4392
    %v4425 = vpack.c.bf16 %v4393, %v4393
    %v4426 = vpack.c.bf16 %v4394, %v4394
    %v4427 = vpack.c.bf16 %v4395, %v4395
    %v4428 = vpack.c.bf16 %v4396, %v4396
    %v4429 = vpack.c.bf16 %v4397, %v4397
    %v4430 = vpack.c.bf16 %v4398, %v4398
    %v4431 = vpack.c.bf16 %v4399, %v4399
    %v4432 = vpack.c.bf16 %v4400, %v4400
    %v4433 = vpack.c.bf16 %v4401, %v4401
    %v4434 = vpack.c.bf16 %v4402, %v4402
    %v4435 = vpack.c.bf16 %v4403, %v4403
    %v4436 = vpack.c.bf16 %v4404, %v4404
    %v4437 = vpack.c.bf16 %v4405, %v4405
    %v4438 = vpack.c.bf16 %v4406, %v4406
    %v4439 = vpack.c.bf16 %v4407, %v4407
    %v4440 = vpack.c.bf16 %v4408, %v4408
    %v4441 = vpack.c.bf16 %v4409, %v4409
    %v4442 = vpack.c.bf16 %v4410, %v4410
    %v4443 = vpack.c.bf16 %v4411, %v4411
    %v4444 = vpack.c.bf16 %v4412, %v4412
    %v4445 = vpack.c.bf16 %v4413, %v4413
    %v4446 = vpack.c.bf16 %v4414, %v4414
    %v4447 = vpack.c.bf16 %v4415, %v4415
    %v4448 = vpack.c.bf16 %v4416, %v4416
    %v4449 = vpack.c.bf16 %v4417, %v4417
    %v4450 = vpack.c.bf16 %v4418, %v4418
    %v4451 = vpack.c.bf16 %v4419, %v4419
    %v4452 = vld [vmem:[%s11] sm:$0xf]
    %v4453 = vld [vmem:[%s11 + $0x4] sm:$0xf]
    %v4454 = vld [vmem:[%s11 + $0x8] sm:$0xf]
    %v4455 = vld [vmem:[%s11 + $0xc] sm:$0xf]
    %v4456 = vld [vmem:[%s11 + $0x10] sm:$0xf]
    %v4457 = vld [vmem:[%s11 + $0x14] sm:$0xf]
    %v4458 = vld [vmem:[%s11 + $0x18] sm:$0xf]
    %v4459 = vld [vmem:[%s11 + $0x1c] sm:$0xf]
    %v4460 = vld [vmem:[%s12] sm:$0x1]
    %v4462 = vlaneseq
    %v4463 = vshrl.u32 %v4462, 7
    %v4464 = vsub.s32 0, %v4463
    %v4465 = vrot.slane %v4460, %v4464
    %v4499 = vunpack.c.l.b16 %v4420
    %v4500 = vunpack.c.l.b16 %v4421
    %v4501 = vunpack.c.l.b16 %v4422
    %v4502 = vunpack.c.l.b16 %v4423
    %v4503 = vunpack.c.l.b16 %v4424
    %v4504 = vunpack.c.l.b16 %v4425
    %v4505 = vunpack.c.l.b16 %v4426
    %v4506 = vunpack.c.l.b16 %v4427
    %v4507 = vunpack.c.l.b16 %v4428
    %v4508 = vunpack.c.l.b16 %v4429
    %v4509 = vunpack.c.l.b16 %v4430
    %v4510 = vunpack.c.l.b16 %v4431
    %v4511 = vunpack.c.l.b16 %v4432
    %v4512 = vunpack.c.l.b16 %v4433
    %v4513 = vunpack.c.l.b16 %v4434
    %v4514 = vunpack.c.l.b16 %v4435
    %v4515 = vunpack.c.l.b16 %v4436
    %v4516 = vunpack.c.l.b16 %v4437
    %v4517 = vunpack.c.l.b16 %v4438
    %v4518 = vunpack.c.l.b16 %v4439
    %v4519 = vunpack.c.l.b16 %v4440
    %v4520 = vunpack.c.l.b16 %v4441
    %v4521 = vunpack.c.l.b16 %v4442
    %v4522 = vunpack.c.l.b16 %v4443
    %v4523 = vunpack.c.l.b16 %v4444
    %v4524 = vunpack.c.l.b16 %v4445
    %v4525 = vunpack.c.l.b16 %v4446
    %v4526 = vunpack.c.l.b16 %v4447
    %v4527 = vunpack.c.l.b16 %v4448
    %v4528 = vunpack.c.l.b16 %v4449
    %v4529 = vunpack.c.l.b16 %v4450
    %v4530 = vunpack.c.l.b16 %v4451
    %vm4531 = vcmask 1041409
    %v4532 = vsel %vm4531, %v4500, %v4499
    %vm4533 = vcmask 1042434
    %v4534 = vsel %vm4533, %v4501, %v4532
    %vm4535 = vcmask 1043459
    %v4536 = vsel %vm4535, %v4502, %v4534
    %vm4537 = vcmask 1044484
    %v4538 = vsel %vm4537, %v4503, %v4536
    %vm4539 = vcmask 1045509
    %v4540 = vsel %vm4539, %v4504, %v4538
    %vm4541 = vcmask 1046534
    %v4542 = vsel %vm4541, %v4505, %v4540
    %vm4543 = vcmask 1047559
    %v4544 = vsel %vm4543, %v4506, %v4542
    %v4545 = vsel %vm4531, %v4508, %v4507
    %v4546 = vsel %vm4533, %v4509, %v4545
    %v4547 = vsel %vm4535, %v4510, %v4546
    %v4548 = vsel %vm4537, %v4511, %v4547
    %v4549 = vsel %vm4539, %v4512, %v4548
    %v4550 = vsel %vm4541, %v4513, %v4549
    %v4551 = vsel %vm4543, %v4514, %v4550
    %v4552 = vsel %vm4531, %v4516, %v4515
    %v4553 = vsel %vm4533, %v4517, %v4552
    %v4554 = vsel %vm4535, %v4518, %v4553
    %v4555 = vsel %vm4537, %v4519, %v4554
    %v4556 = vsel %vm4539, %v4520, %v4555
    %v4557 = vsel %vm4541, %v4521, %v4556
    %v4558 = vsel %vm4543, %v4522, %v4557
    %v4559 = vsel %vm4531, %v4524, %v4523
    %v4560 = vsel %vm4533, %v4525, %v4559
    %v4561 = vsel %vm4535, %v4526, %v4560
    %v4562 = vsel %vm4537, %v4527, %v4561
    %v4563 = vsel %vm4539, %v4528, %v4562
    %v4564 = vsel %vm4541, %v4529, %v4563
    %v4565 = vsel %vm4543, %v4530, %v4564
    %v4566 = vpack.c.b16 %v4551, %v4544
    %v4567 = vpack.c.b16 %v4565, %v4558
    %v4576 = vunpack.c.l.b16 %v4452
    %v4577 = vunpack.c.l.b16 %v4453
    %v4578 = vunpack.c.l.b16 %v4454
    %v4579 = vunpack.c.l.b16 %v4455
    %v4580 = vunpack.c.l.b16 %v4456
    %v4581 = vunpack.c.l.b16 %v4457
    %v4582 = vunpack.c.l.b16 %v4458
    %v4583 = vunpack.c.l.b16 %v4459
    %v4584 = vpack.c.b16 %v4577, %v4576
    %v4585 = vpack.c.b16 %v4579, %v4578
    %v4586 = vpack.c.b16 %v4581, %v4580
    %v4587 = vpack.c.b16 %v4583, %v4582
    %v4593 = vsel %vm957, %v4566, 0
    %v4596 = vsel %vm957, %v4567, 0
    %4598 = vmatprep.subr.bf16.mxu0 0
    %4599 = vmatpush1.bf16.msra.mxu0 %v4584
    %4600 = vmatprep.subr.bf16.mxu0 0
    %4601 = vmatpush1.bf16.msra.mxu0 %v4585
    %4602 = vmatprep.subr.bf16.mxu0 0
    %4603 = vmatpush1.bf16.msra.mxu0 %v4586
    %4604 = vmatprep.subr.bf16.mxu0 0
    %4605 = vmatpush1.bf16.msra.mxu0 %v4587
    %4606 = vmatprep.subr.bf16.mxu0 0
    %4607 = vmatpush1.bf16.msra.mxu0 0
    %4608 = vmatprep.subr.bf16.mxu0 0
    %4609 = vmatpush1.bf16.msra.mxu0 0
    %4610 = vmatprep.subr.bf16.mxu0 0
    %4611 = vmatpush1.bf16.msra.mxu0 0
    %4612 = vmatprep.subr.bf16.mxu0 0
    %4613 = vmatpush1.bf16.msra.mxu0 0
    %4614 = vmatprep.subr.bf16.mxu0 0
    %4615 = vmatpush1.bf16.msra.mxu0 0
    %4616 = vmatprep.subr.bf16.mxu0 0
    %4617 = vmatpush1.bf16.msra.mxu0 0
    %4618 = vmatprep.subr.bf16.mxu0 0
    %4619 = vmatpush1.bf16.msra.mxu0 0
    %4620 = vmatprep.subr.bf16.mxu0 0
    %4621 = vmatpush1.bf16.msra.mxu0 0
    %4622 = vmatprep.subr.bf16.mxu0 0
    %4623 = vmatpush1.bf16.msra.mxu0 0
    %4624 = vmatprep.subr.bf16.mxu0 0
    %4625 = vmatpush1.bf16.msra.mxu0 0
    %4626 = vmatprep.subr.bf16.mxu0 0
    %4627 = vmatpush1.bf16.msra.mxu0 0
    %4628 = vmatprep.subr.bf16.mxu0 0
    %4629 = vmatpush1.bf16.msra.mxu0 0
    %4630 = vmatprep.mubr.bf16.mxu0 0
    %4631 = vmatmul.mubr.bf16.gmra.mrb[0].mxu0 %v4593
    %v4632 = vpop.f32.mrb[0].mxu0
    %v4633 = vadd.f32 %v4465, %v4632
    %v4634 = vpop.f32.mrb[0].mxu0
    %v4635 = vpop.f32.mrb[0].mxu0
    %v4636 = vadd.f32 %v4465, %v4635
    %v4637 = vpop.f32.mrb[0].mxu0
    %4638 = vmatprep.mubr.bf16.mxu0 0
    %4639 = vmatmul.mubr.bf16.gmra.mrb[0].mxu0 %v4596
    %v4640 = vpop.f32.mrb[0].mxu0
    %v4641 = vadd.f32 %v4465, %v4640
    %v4642 = vpop.f32.mrb[0].mxu0
    %v4643 = vpop.f32.mrb[0].mxu0
    %v4644 = vadd.f32 %v4465, %v4643
    %v4645 = vpop.f32.mrb[0].mxu0
    %4646 = vdwg.mxu0
    %4647 = vst [vmem:[#allocation2] sm:$0xff] %v4633
    %4648 = vst [vmem:[#allocation2 + $0x8] sm:$0xff] %v4636
    %4649 = vst [vmem:[#allocation2 + $0x10] sm:$0xff] %v4641
    %4650 = vst [vmem:[#allocation2 + $0x18] sm:$0xff] %v4644
    // Predicated region
    $region54: #{tpu_custom_call.1} parent=1 // pred_check
      _
    $region55: #{tpu_custom_call.1} parent=1 // pred_check_branch
      %4652 = sbr.rel (0) target = $region57
    $region56: #{tpu_custom_call.1} parent=1 // pred_region
      %s4654 = ssub.s32 512, 512
      %4655 = vsyncadd [#allocation3], %s4654
      %s4656 = sshll.u32 [#allocation2], 4
      %s4657 = int_to_ptr.vmem [resolvable:$true] %s4656
      %4662 = dma.vmem_to_hbm [thread:$0]  %s4657, 512, %s13, [#allocation3], 128, 128, 8
    $region57: #{tpu_custom_call.1} parent=1 // pred_fallthru
      _
    // Predicated region
    $region58: #{tpu_custom_call.1} parent=1 // pred_check
      _
    $region59: #{tpu_custom_call.1} parent=1 // pred_check_branch
      %4664 = sbr.rel (0) target = $region61
    $region60: #{tpu_custom_call.1} parent=1 // pred_region
      %4665 = dma.done [#allocation3], 512
    $region61: #{tpu_custom_call.1} parent=1 // pred_fallthru
      _
    %4666 = vsyncpa [#allocation3], 1

</llo_original>
